<compile_context>
chip_gen: v7x
topology: tpu7x:2x2x1
jax: 0.10.0
libtpu: 0.0.40
codegen_flags: <defaults>
</compile_context>

<pallas_src>
import functools

import jax
import jax.numpy as jnp
from jax import lax
from jax.experimental import pallas as pl
from jax.experimental.pallas import tpu as pltpu

BN_EPS = 1e-5
LANE = 128
VMEM_LIMIT_BYTES = 32 * 1024 * 1024   # explicit scoped-VMEM budget (safe on v5e/v6e/v7x)


# ----------------------------------------------------------------------------
# Small helpers
# ----------------------------------------------------------------------------
def _round_up(x, m):
    return (x + m - 1) // m * m


def _pad_lanes(c):
    """Channel counts >= 64 are rounded up to a lane multiple (128) so intermediate
    stores are unmasked vst; tiny demo channel counts are left untouched."""
    if c < 64 or c % LANE == 0:
        return c
    return _round_up(c, LANE)


def _pad_axis(x, axis, size):
    pad = size - x.shape[axis]
    assert pad >= 0
    if pad == 0:
        return x
    widths = [(0, 0)] * x.ndim
    widths[axis] = (0, pad)
    return jnp.pad(x, widths)


def fold_bn(w, gamma, beta, mean, var, eps=BN_EPS):
    """Fold eval-mode BatchNorm into a conv weight (out-channels last) and a bias."""
    scale = gamma / jnp.sqrt(var + eps)
    return w * scale, beta - mean * scale


# ----------------------------------------------------------------------------
# Kernel 1: out = relu(x @ w + bias [+ residual])        (1x1 convs as GEMMs)
# ----------------------------------------------------------------------------
def _mm_bias_relu_kernel(x_ref, w_ref, b_ref, o_ref):
    acc = jnp.dot(x_ref[...], w_ref[...], preferred_element_type=jnp.float32)
    o_ref[...] = jnp.maximum(acc + b_ref[...], 0.0).astype(o_ref.dtype)


def _mm_bias_res_relu_kernel(x_ref, w_ref, b_ref, r_ref, o_ref):
    acc = jnp.dot(x_ref[...], w_ref[...], preferred_element_type=jnp.float32)
    acc = acc + b_ref[...] + r_ref[...].astype(jnp.float32)
    o_ref[...] = jnp.maximum(acc, 0.0).astype(o_ref.dtype)


def matmul_bias_relu(x, w, bias, residual=None, *, out_dtype=jnp.bfloat16,
                     target_block_rows=512):
    """x: [M, K] bf16, w: [K, N] bf16 (BN scale pre-folded), bias: [N] f32,
    residual: [M, N] (added in f32) or None."""
    M, K = x.shape
    Kw, N = w.shape
    assert K == Kw
    bias2 = bias.reshape(1, N).astype(jnp.float32)

    # Row tile: multiple of 8, as large as the target, and >= 2 grid steps when
    # possible so the "parallel" axis can be split across v7x's two TensorCores.
    bm = min(target_block_rows, _round_up(M, 8))
    if M > 8 and (M + bm - 1) // bm < 2:
        bm = _round_up((M + 1) // 2, 8)
    Mp = _round_up(M, bm)
    grid = (Mp // bm,)

    xp = _pad_axis(x, 0, Mp)
    in_specs = [
        pl.BlockSpec((bm, K), lambda i: (i, 0)),   # activation row tile
        pl.BlockSpec((K, N), lambda i: (0, 0)),    # weights, VMEM-resident
        pl.BlockSpec((1, N), lambda i: (0, 0)),    # folded BN bias
    ]
    args = [xp, w, bias2]
    kernel = _mm_bias_relu_kernel
    if residual is not None:
        in_specs.append(pl.BlockSpec((bm, N), lambda i: (i, 0)))
        args.append(_pad_axis(residual, 0, Mp))
        kernel = _mm_bias_res_relu_kernel

    out = pl.pallas_call(
        kernel,
        out_shape=jax.ShapeDtypeStruct((Mp, N), out_dtype),
        grid_spec=pltpu.PrefetchScalarGridSpec(
            num_scalar_prefetch=0,
            grid=grid,
            in_specs=in_specs,
            out_specs=pl.BlockSpec((bm, N), lambda i: (i, 0)),
        ),
        compiler_params=pltpu.CompilerParams(
            dimension_semantics=("parallel",),
            vmem_limit_bytes=VMEM_LIMIT_BYTES,
        ),
    )(*args)
    return out if Mp == M else out[:M]


# ----------------------------------------------------------------------------
# Kernel 2: fused 3x3 conv (stride=1, pad=1) + bias + ReLU.
# The spatially padded NHWC image is read from HBM exactly once per grid step
# and the 9 taps are accumulated in-kernel (no HBM im2col).
# ----------------------------------------------------------------------------
def _conv3x3_bias_relu_kernel(x_ref, w_ref, b_ref, o_ref, *, H, W):
    # x_ref: (1, H+2, W+2, C)  w_ref: (3, 3, C, F)  b_ref: (1, F)  o_ref: (1, H, W, F)
    C = x_ref.shape[-1]
    F = o_ref.shape[-1]
    acc = jnp.zeros((H * W, F), jnp.float32)
    for dh in range(3):                                   # 9 taps, Python-unrolled
        for dw in range(3):
            win = x_ref[0, dh:dh + H, dw:dw + W, :]       # (H, W, C) window load
            # Flatten the spatial dims in f32 (trivial relayout when W % 8 == 0),
            # then feed the MXU with bf16 operands (f32 accumulation).
            patch = win.astype(jnp.float32).reshape(H * W, C).astype(jnp.bfloat16)
            acc = acc + jnp.dot(patch, w_ref[dh, dw],
                                preferred_element_type=jnp.float32)
    acc = jnp.maximum(acc + b_ref[...], 0.0)
    o_ref[...] = acc.reshape(1, H, W, F).astype(o_ref.dtype)


def conv3x3_bias_relu(x_nhwc, w_hwio, bias, *, out_dtype=jnp.bfloat16):
    """x_nhwc: [N, H, W, C] bf16, w_hwio: [3, 3, C, F] bf16 (BN folded), bias: [F] f32."""
    n, h, w, c = x_nhwc.shape
    assert w_hwio.shape[:3] == (3, 3, c)
    f = w_hwio.shape[-1]
    xp = jnp.pad(x_nhwc, ((0, 0), (1, 1), (1, 1), (0, 0)))   # spatial zero padding
    bias2 = bias.reshape(1, f).astype(jnp.float32)

    # TODO(synk): for very large feature maps, tile spatially (overlapping H windows
    # via manual DMA) instead of one whole image per grid step.
    return pl.pallas_call(
        functools.partial(_conv3x3_bias_relu_kernel, H=h, W=w),
        out_shape=jax.ShapeDtypeStruct((n, h, w, f), out_dtype),
        grid_spec=pltpu.PrefetchScalarGridSpec(
            num_scalar_prefetch=0,
            grid=(n,),
            in_specs=[
                pl.BlockSpec((1, h + 2, w + 2, c), lambda i: (i, 0, 0, 0)),
                pl.BlockSpec((3, 3, c, f), lambda i: (0, 0, 0, 0)),   # weights resident
                pl.BlockSpec((1, f), lambda i: (0, 0)),
            ],
            out_specs=pl.BlockSpec((1, h, w, f), lambda i: (i, 0, 0, 0)),
        ),
        compiler_params=pltpu.CompilerParams(
            dimension_semantics=("parallel",),
            vmem_limit_bytes=VMEM_LIMIT_BYTES,
        ),
    )(xp, w_hwio, bias2)


# ----------------------------------------------------------------------------
# Bottleneck forward (eval mode, downsample=None).  NCHW in / NCHW out.
# ----------------------------------------------------------------------------
def bottleneck_forward(x_nchw, params, stride=1):
    assert stride == 1, "stride>1 needs a downsample branch; module default is None"
    # TODO(synk): downsample branch (strided 1x1 conv + BN) is not instantiated by the
    # reference module defaults and is not implemented here.
    n, cin, h, w = x_nchw.shape
    planes = params["w1"].shape[0]
    cout = planes * 4
    assert cin == cout, "residual add requires inplanes == planes * expansion"

    x_nhwc = jnp.transpose(x_nchw, (0, 2, 3, 1))        # NCHW -> NHWC (boundary only)
    M = n * h * w
    c1p = _pad_lanes(planes)                            # lane-padded intermediate widths
    c2p = _pad_lanes(planes)

    # ---- conv1 (1x1) + bn1 + relu ----
    w1 = params["w1"].reshape(planes, cin).T            # [Cin, planes]
    w1, b1 = fold_bn(w1, params["gamma1"], params["beta1"], params["mean1"], params["var1"])
    w1 = _pad_axis(w1, 1, c1p)
    b1 = _pad_axis(b1, 0, c1p)
    y1 = matmul_bias_relu(x_nhwc.reshape(M, cin).astype(jnp.bfloat16),
                          w1.astype(jnp.bfloat16), b1, out_dtype=jnp.bfloat16)
    y1 = y1.reshape(n, h, w, c1p)

    # ---- conv2 (3x3, pad=1) + bn2 + relu ----
    w2 = jnp.transpose(params["w2"], (2, 3, 1, 0))      # (O,I,kh,kw) -> [3, 3, Cin, Cout]
    w2, b2 = fold_bn(w2, params["gamma2"], params["beta2"], params["mean2"], params["var2"])
    w2 = _pad_axis(w2, 2, c1p)                          # zero rows for padded input channels
    w2 = _pad_axis(w2, 3, c2p)                          # zero cols for padded output channels
    b2 = _pad_axis(b2, 0, c2p)
    y2 = conv3x3_bias_relu(y1, w2.astype(jnp.bfloat16), b2, out_dtype=jnp.bfloat16)

    # ---- conv3 (1x1) + bn3 + residual add + relu ----
    w3 = params["w3"].reshape(cout, planes).T           # [planes, Cout]
    w3, b3 = fold_bn(w3, params["gamma3"], params["beta3"], params["mean3"], params["var3"])
    w3 = _pad_axis(w3, 0, c2p)                          # zero rows for padded input channels
    residual = x_nhwc.reshape(M, cin)                   # f32 residual (dominant term)
    y3 = matmul_bias_relu(y2.reshape(M, c2p).astype(jnp.bfloat16),
                          w3.astype(jnp.bfloat16), b3,
                          residual=residual, out_dtype=jnp.float32)
    y3 = y3.reshape(n, h, w, cout)
    return jnp.transpose(y3, (0, 3, 1, 2))              # NHWC -> NCHW


# ----------------------------------------------------------------------------
# Pure-JAX f32 reference (mirrors the PyTorch module in eval mode)
# ----------------------------------------------------------------------------
def bottleneck_reference(x_nchw, params, stride=1):
    def conv(x, w, stride, pad):
        return lax.conv_general_dilated(
            x, w, window_strides=(stride, stride), padding=[(pad, pad), (pad, pad)],
            dimension_numbers=("NCHW", "OIHW", "NCHW"))

    def bn(x, i):
        g = params[f"gamma{i}"][None, :, None, None]
        b = params[f"beta{i}"][None, :, None, None]
        m = params[f"mean{i}"][None, :, None, None]
        v = params[f"var{i}"][None, :, None, None]
        return g * (x - m) / jnp.sqrt(v + BN_EPS) + b

    out = jnp.maximum(bn(conv(x_nchw, params["w1"], 1, 0), 1), 0.0)
    out = jnp.maximum(bn(conv(out, params["w2"], stride, 1), 2), 0.0)
    out = bn(conv(out, params["w3"], 1, 0), 3)
    out = out + x_nchw
    return jnp.maximum(out, 0.0)


# ----------------------------------------------------------------------------
# Parameter init (PyTorch layouts, eval-mode BN running stats)
# ----------------------------------------------------------------------------
def init_bottleneck_params(key, inplanes, planes):
    expansion = 4
    ks = jax.random.split(key, 15)
    p = {}
    p["w1"] = jax.random.normal(ks[0], (planes, inplanes, 1, 1), jnp.float32) * 0.1
    p["w2"] = jax.random.normal(ks[1], (planes, planes, 3, 3), jnp.float32) * 0.1
    p["w3"] = jax.random.normal(ks[2], (planes * expansion, planes, 1, 1), jnp.float32) * 0.1
    for idx, (i, c) in enumerate(zip((1, 2, 3), (planes, planes, planes * expansion))):
        base = 3 + 4 * idx
        p[f"gamma{i}"] = 1.0 + 0.1 * jax.random.normal(ks[base + 0], (c,), jnp.float32)
        p[f"beta{i}"] = 0.1 * jax.random.normal(ks[base + 1], (c,), jnp.float32)
        p[f"mean{i}"] = 0.1 * jax.random.normal(ks[base + 2], (c,), jnp.float32)
        p[f"var{i}"] = 1.0 + 0.5 * jax.random.uniform(ks[base + 3], (c,), jnp.float32)
    return p


if __name__ == "__main__":
    key = jax.random.PRNGKey(0)

    # (n, planes, h, w) with inplanes = planes * 4 (required when downsample is None).
    configs = [
        (2, 4, 16, 16),    # small demo shape
        (1, 64, 8, 8),     # exercises lane padding (64 -> 128) and 128-wide matmuls
    ]
    fwd = jax.jit(functools.partial(bottleneck_forward, stride=1))

    for cfg_idx, (n, planes, h, w) in enumerate(configs):
        k_x, k_p, key = jax.random.split(key, 3)
        inplanes = planes * 4
        x = jax.random.normal(k_x, (n, inplanes, h, w), jnp.float32)
        params = init_bottleneck_params(k_p, inplanes, planes)

        out = jax.block_until_ready(fwd(x, params))
        ref = jax.block_until_ready(bottleneck_reference(x, params, stride=1))
        assert out.shape == ref.shape == (n, inplanes, h, w), (cfg_idx, out.shape)

        err = float(jnp.max(jnp.abs(out - ref)))
        scale = float(jnp.max(jnp.abs(ref)))
        # bf16 operands / intermediates -> tolerance appropriate for 3 chained bf16 GEMMs.
        assert err <= 5e-2 * scale + 1e-3, (cfg_idx, err, scale)

    print("KERNEL_OK")
</pallas_src>

<mosaic_0001>
module attributes {stable_mosaic.version = 11 : i64} {
  func.func @_mm_bias_relu_kernel(%arg0: i32, %arg1: memref<256x16xbf16, #tpu.memory_space<vmem>>, %arg2: memref<16x4xbf16, #tpu.memory_space<vmem>>, %arg3: memref<1x4xf32, #tpu.memory_space<vmem>>, %arg4: memref<256x4xbf16, #tpu.memory_space<vmem>>) attributes {dimension_semantics = [#tpu.dimension_semantics<parallel>], iteration_bounds = array<i64: 2>, scalar_prefetch = 0 : i64, scratch_operands = 0 : i64, tpu.core_type = #tpu.core_type<tc>, window_params = [{transform_indices = @transform_0, window_bounds = array<i64: 256, 16>}, {pipeline_mode = #tpu.pipeline_mode<synchronous>, transform_indices = @transform_1, window_bounds = array<i64: 16, 4>}, {pipeline_mode = #tpu.pipeline_mode<synchronous>, transform_indices = @transform_2, window_bounds = array<i64: 1, 4>}, {transform_indices = @transform_3, window_bounds = array<i64: 256, 4>}]} {
    %c0 = arith.constant 0 : index
    %c0_0 = arith.constant 0 : index
    %0 = vector.load %arg1[%c0, %c0_0] : memref<256x16xbf16, #tpu.memory_space<vmem>>, vector<256x16xbf16>
    %c0_1 = arith.constant 0 : index
    %c0_2 = arith.constant 0 : index
    %1 = vector.load %arg2[%c0_1, %c0_2] : memref<16x4xbf16, #tpu.memory_space<vmem>>, vector<16x4xbf16>
    %cst = arith.constant dense<0.000000e+00> : vector<256x4xf32>
    %2 = tpu.matmul %0, %1, %cst {dimension_numbers = #tpu.dot_dimension_numbers<[1], [0], [0], [1], [0, 0, 1, 1], [], []>} : vector<256x16xbf16>, vector<16x4xbf16>, vector<256x4xf32> -> vector<256x4xf32>
    %c0_3 = arith.constant 0 : index
    %c0_4 = arith.constant 0 : index
    %3 = vector.load %arg3[%c0_3, %c0_4] : memref<1x4xf32, #tpu.memory_space<vmem>>, vector<1x4xf32>
    %4 = vector.broadcast %3 : vector<1x4xf32> to vector<256x4xf32>
    %5 = arith.addf %2, %4 : vector<256x4xf32>
    %cst_5 = arith.constant 0.000000e+00 : f32
    %6 = vector.broadcast %cst_5 : f32 to vector<256x4xf32>
    %7 = arith.maximumf %5, %6 : vector<256x4xf32>
    %8 = arith.truncf %7 : vector<256x4xf32> to vector<256x4xbf16>
    %c0_6 = arith.constant 0 : index
    %c0_7 = arith.constant 0 : index
    %9 = vector.load %arg4[%c0_6, %c0_7] : memref<256x4xbf16, #tpu.memory_space<vmem>>, vector<256x4xbf16>
    tpu.vector_store %arg4[%c0_6, %c0_7], %8 {strides = array<i32>} : memref<256x4xbf16, #tpu.memory_space<vmem>>, vector<256x4xbf16>,
    return
  }
  func.func @transform_0(%arg0: i32) -> (i32, i32) {
    %c0_i32 = arith.constant 0 : i32
    %c0_i32_0 = arith.constant 0 : i32
    return %arg0, %c0_i32 : i32, i32
  }
  func.func @transform_1(%arg0: i32) -> (i32, i32) {
    %c0_i32 = arith.constant 0 : i32
    %c0_i32_0 = arith.constant 0 : i32
    %c0_i32_1 = arith.constant 0 : i32
    return %c0_i32, %c0_i32_0 : i32, i32
  }
  func.func @transform_2(%arg0: i32) -> (i32, i32) {
    %c0_i32 = arith.constant 0 : i32
    %c0_i32_0 = arith.constant 0 : i32
    %c0_i32_1 = arith.constant 0 : i32
    return %c0_i32, %c0_i32_0 : i32, i32
  }
  func.func @transform_3(%arg0: i32) -> (i32, i32) {
    %c0_i32 = arith.constant 0 : i32
    %c0_i32_0 = arith.constant 0 : i32
    return %arg0, %c0_i32 : i32, i32
  }
}

module attributes {stable_mosaic.version = 11 : i64} {
  func.func @_conv3x3_bias_relu_kernel(%arg0: i32, %arg1: memref<1x18x18x4xbf16, #tpu.memory_space<vmem>>, %arg2: memref<3x3x4x4xbf16, #tpu.memory_space<vmem>>, %arg3: memref<1x4xf32, #tpu.memory_space<vmem>>, %arg4: memref<1x16x16x4xbf16, #tpu.memory_space<vmem>>) attributes {dimension_semantics = [#tpu.dimension_semantics<parallel>], iteration_bounds = array<i64: 2>, scalar_prefetch = 0 : i64, scratch_operands = 0 : i64, tpu.core_type = #tpu.core_type<tc>, window_params = [{transform_indices = @transform_0, window_bounds = array<i64: 1, 18, 18, 4>}, {pipeline_mode = #tpu.pipeline_mode<synchronous>, transform_indices = @transform_1, window_bounds = array<i64: 3, 3, 4, 4>}, {pipeline_mode = #tpu.pipeline_mode<synchronous>, transform_indices = @transform_2, window_bounds = array<i64: 1, 4>}, {transform_indices = @transform_3, window_bounds = array<i64: 1, 16, 16, 4>}]} {
    %cst = arith.constant 0.000000e+00 : f32
    %0 = vector.broadcast %cst : f32 to vector<256x4xf32>
    %c0 = arith.constant 0 : index
    %c0_0 = arith.constant 0 : index
    %c0_1 = arith.constant 0 : index
    %c0_2 = arith.constant 0 : index
    %1 = vector.load %arg1[%c0, %c0_0, %c0_1, %c0_2] : memref<1x18x18x4xbf16, #tpu.memory_space<vmem>>, vector<1x16x16x4xbf16>
    %2 = vector.shape_cast %1 : vector<1x16x16x4xbf16> to vector<16x16x4xbf16>
    %3 = arith.extf %2 : vector<16x16x4xbf16> to vector<16x16x4xf32>
    %4 = vector.shape_cast %3 : vector<16x16x4xf32> to vector<256x4xf32>
    %5 = arith.truncf %4 : vector<256x4xf32> to vector<256x4xbf16>
    %c0_3 = arith.constant 0 : index
    %c0_4 = arith.constant 0 : index
    %c0_5 = arith.constant 0 : index
    %c0_6 = arith.constant 0 : index
    %6 = vector.load %arg2[%c0_3, %c0_4, %c0_5, %c0_6] : memref<3x3x4x4xbf16, #tpu.memory_space<vmem>>, vector<1x1x4x4xbf16>
    %7 = vector.shape_cast %6 : vector<1x1x4x4xbf16> to vector<4x4xbf16>
    %cst_7 = arith.constant dense<0.000000e+00> : vector<256x4xf32>
    %8 = tpu.matmul %5, %7, %cst_7 {dimension_numbers = #tpu.dot_dimension_numbers<[1], [0], [0], [1], [0, 0, 1, 1], [], []>} : vector<256x4xbf16>, vector<4x4xbf16>, vector<256x4xf32> -> vector<256x4xf32>
    %9 = arith.addf %0, %8 : vector<256x4xf32>
    %c0_8 = arith.constant 0 : index
    %c0_9 = arith.constant 0 : index
    %c1 = arith.constant 1 : index
    %c0_10 = arith.constant 0 : index
    %10 = vector.load %arg1[%c0_8, %c0_9, %c1, %c0_10] : memref<1x18x18x4xbf16, #tpu.memory_space<vmem>>, vector<1x16x16x4xbf16>
    %11 = vector.shape_cast %10 : vector<1x16x16x4xbf16> to vector<16x16x4xbf16>
    %12 = arith.extf %11 : vector<16x16x4xbf16> to vector<16x16x4xf32>
    %13 = vector.shape_cast %12 : vector<16x16x4xf32> to vector<256x4xf32>
    %14 = arith.truncf %13 : vector<256x4xf32> to vector<256x4xbf16>
    %c0_11 = arith.constant 0 : index
    %c1_12 = arith.constant 1 : index
    %c0_13 = arith.constant 0 : index
    %c0_14 = arith.constant 0 : index
    %15 = vector.load %arg2[%c0_11, %c1_12, %c0_13, %c0_14] : memref<3x3x4x4xbf16, #tpu.memory_space<vmem>>, vector<1x1x4x4xbf16>
    %16 = vector.shape_cast %15 : vector<1x1x4x4xbf16> to vector<4x4xbf16>
    %cst_15 = arith.constant dense<0.000000e+00> : vector<256x4xf32>
    %17 = tpu.matmul %14, %16, %cst_15 {dimension_numbers = #tpu.dot_dimension_numbers<[1], [0], [0], [1], [0, 0, 1, 1], [], []>} : vector<256x4xbf16>, vector<4x4xbf16>, vector<256x4xf32> -> vector<256x4xf32>
    %18 = arith.addf %9, %17 : vector<256x4xf32>
    %c0_16 = arith.constant 0 : index
    %c0_17 = arith.constant 0 : index
    %c2 = arith.constant 2 : index
    %c0_18 = arith.constant 0 : index
    %19 = vector.load %arg1[%c0_16, %c0_17, %c2, %c0_18] : memref<1x18x18x4xbf16, #tpu.memory_space<vmem>>, vector<1x16x16x4xbf16>
    %20 = vector.shape_cast %19 : vector<1x16x16x4xbf16> to vector<16x16x4xbf16>
    %21 = arith.extf %20 : vector<16x16x4xbf16> to vector<16x16x4xf32>
    %22 = vector.shape_cast %21 : vector<16x16x4xf32> to vector<256x4xf32>
    %23 = arith.truncf %22 : vector<256x4xf32> to vector<256x4xbf16>
    %c0_19 = arith.constant 0 : index
    %c2_20 = arith.constant 2 : index
    %c0_21 = arith.constant 0 : index
    %c0_22 = arith.constant 0 : index
    %24 = vector.load %arg2[%c0_19, %c2_20, %c0_21, %c0_22] : memref<3x3x4x4xbf16, #tpu.memory_space<vmem>>, vector<1x1x4x4xbf16>
    %25 = vector.shape_cast %24 : vector<1x1x4x4xbf16> to vector<4x4xbf16>
    %cst_23 = arith.constant dense<0.000000e+00> : vector<256x4xf32>
    %26 = tpu.matmul %23, %25, %cst_23 {dimension_numbers = #tpu.dot_dimension_numbers<[1], [0], [0], [1], [0, 0, 1, 1], [], []>} : vector<256x4xbf16>, vector<4x4xbf16>, vector<256x4xf32> -> vector<256x4xf32>
    %27 = arith.addf %18, %26 : vector<256x4xf32>
    %c0_24 = arith.constant 0 : index
    %c1_25 = arith.constant 1 : index
    %c0_26 = arith.constant 0 : index
    %c0_27 = arith.constant 0 : index
    %28 = vector.load %arg1[%c0_24, %c1_25, %c0_26, %c0_27] : memref<1x18x18x4xbf16, #tpu.memory_space<vmem>>, vector<1x16x16x4xbf16>
    %29 = vector.shape_cast %28 : vector<1x16x16x4xbf16> to vector<16x16x4xbf16>
    %30 = arith.extf %29 : vector<16x16x4xbf16> to vector<16x16x4xf32>
    %31 = vector.shape_cast %30 : vector<16x16x4xf32> to vector<256x4xf32>
    %32 = arith.truncf %31 : vector<256x4xf32> to vector<256x4xbf16>
    %c1_28 = arith.constant 1 : index
    %c0_29 = arith.constant 0 : index
    %c0_30 = arith.constant 0 : index
    %c0_31 = arith.constant 0 : index
    %33 = vector.load %arg2[%c1_28, %c0_29, %c0_30, %c0_31] : memref<3x3x4x4xbf16, #tpu.memory_space<vmem>>, vector<1x1x4x4xbf16>
    %34 = vector.shape_cast %33 : vector<1x1x4x4xbf16> to vector<4x4xbf16>
    %cst_32 = arith.constant dense<0.000000e+00> : vector<256x4xf32>
    %35 = tpu.matmul %32, %34, %cst_32 {dimension_numbers = #tpu.dot_dimension_numbers<[1], [0], [0], [1], [0, 0, 1, 1], [], []>} : vector<256x4xbf16>, vector<4x4xbf16>, vector<256x4xf32> -> vector<256x4xf32>
    %36 = arith.addf %27, %35 : vector<256x4xf32>
    %c0_33 = arith.constant 0 : index
    %c1_34 = arith.constant 1 : index
    %c1_35 = arith.constant 1 : index
    %c0_36 = arith.constant 0 : index
    %37 = vector.load %arg1[%c0_33, %c1_34, %c1_35, %c0_36] : memref<1x18x18x4xbf16, #tpu.memory_space<vmem>>, vector<1x16x16x4xbf16>
    %38 = vector.shape_cast %37 : vector<1x16x16x4xbf16> to vector<16x16x4xbf16>
    %39 = arith.extf %38 : vector<16x16x4xbf16> to vector<16x16x4xf32>
    %40 = vector.shape_cast %39 : vector<16x16x4xf32> to vector<256x4xf32>
    %41 = arith.truncf %40 : vector<256x4xf32> to vector<256x4xbf16>
    %c1_37 = arith.constant 1 : index
    %c1_38 = arith.constant 1 : index
    %c0_39 = arith.constant 0 : index
    %c0_40 = arith.constant 0 : index
    %42 = vector.load %arg2[%c1_37, %c1_38, %c0_39, %c0_40] : memref<3x3x4x4xbf16, #tpu.memory_space<vmem>>, vector<1x1x4x4xbf16>
    %43 = vector.shape_cast %42 : vector<1x1x4x4xbf16> to vector<4x4xbf16>
    %cst_41 = arith.constant dense<0.000000e+00> : vector<256x4xf32>
    %44 = tpu.matmul %41, %43, %cst_41 {dimension_numbers = #tpu.dot_dimension_numbers<[1], [0], [0], [1], [0, 0, 1, 1], [], []>} : vector<256x4xbf16>, vector<4x4xbf16>, vector<256x4xf32> -> vector<256x4xf32>
    %45 = arith.addf %36, %44 : vector<256x4xf32>
    %c0_42 = arith.constant 0 : index
    %c1_43 = arith.constant 1 : index
    %c2_44 = arith.constant 2 : index
    %c0_45 = arith.constant 0 : index
    %46 = vector.load %arg1[%c0_42, %c1_43, %c2_44, %c0_45] : memref<1x18x18x4xbf16, #tpu.memory_space<vmem>>, vector<1x16x16x4xbf16>
    %47 = vector.shape_cast %46 : vector<1x16x16x4xbf16> to vector<16x16x4xbf16>
    %48 = arith.extf %47 : vector<16x16x4xbf16> to vector<16x16x4xf32>
    %49 = vector.shape_cast %48 : vector<16x16x4xf32> to vector<256x4xf32>
    %50 = arith.truncf %49 : vector<256x4xf32> to vector<256x4xbf16>
    %c1_46 = arith.constant 1 : index
    %c2_47 = arith.constant 2 : index
    %c0_48 = arith.constant 0 : index
    %c0_49 = arith.constant 0 : index
    %51 = vector.load %arg2[%c1_46, %c2_47, %c0_48, %c0_49] : memref<3x3x4x4xbf16, #tpu.memory_space<vmem>>, vector<1x1x4x4xbf16>
    %52 = vector.shape_cast %51 : vector<1x1x4x4xbf16> to vector<4x4xbf16>
    %cst_50 = arith.constant dense<0.000000e+00> : vector<256x4xf32>
    %53 = tpu.matmul %50, %52, %cst_50 {dimension_numbers = #tpu.dot_dimension_numbers<[1], [0], [0], [1], [0, 0, 1, 1], [], []>} : vector<256x4xbf16>, vector<4x4xbf16>, vector<256x4xf32> -> vector<256x4xf32>
    %54 = arith.addf %45, %53 : vector<256x4xf32>
    %c0_51 = arith.constant 0 : index
    %c2_52 = arith.constant 2 : index
    %c0_53 = arith.constant 0 : index
    %c0_54 = arith.constant 0 : index
    %55 = vector.load %arg1[%c0_51, %c2_52, %c0_53, %c0_54] : memref<1x18x18x4xbf16, #tpu.memory_space<vmem>>, vector<1x16x16x4xbf16>
    %56 = vector.shape_cast %55 : vector<1x16x16x4xbf16> to vector<16x16x4xbf16>
    %57 = arith.extf %56 : vector<16x16x4xbf16> to vector<16x16x4xf32>
    %58 = vector.shape_cast %57 : vector<16x16x4xf32> to vector<256x4xf32>
    %59 = arith.truncf %58 : vector<256x4xf32> to vector<256x4xbf16>
    %c2_55 = arith.constant 2 : index
    %c0_56 = arith.constant 0 : index
    %c0_57 = arith.constant 0 : index
    %c0_58 = arith.constant 0 : index
    %60 = vector.load %arg2[%c2_55, %c0_56, %c0_57, %c0_58] : memref<3x3x4x4xbf16, #tpu.memory_space<vmem>>, vector<1x1x4x4xbf16>
    %61 = vector.shape_cast %60 : vector<1x1x4x4xbf16> to vector<4x4xbf16>
    %cst_59 = arith.constant dense<0.000000e+00> : vector<256x4xf32>
    %62 = tpu.matmul %59, %61, %cst_59 {dimension_numbers = #tpu.dot_dimension_numbers<[1], [0], [0], [1], [0, 0, 1, 1], [], []>} : vector<256x4xbf16>, vector<4x4xbf16>, vector<256x4xf32> -> vector<256x4xf32>
    %63 = arith.addf %54, %62 : vector<256x4xf32>
    %c0_60 = arith.constant 0 : index
    %c2_61 = arith.constant 2 : index
    %c1_62 = arith.constant 1 : index
    %c0_63 = arith.constant 0 : index
    %64 = vector.load %arg1[%c0_60, %c2_61, %c1_62, %c0_63] : memref<1x18x18x4xbf16, #tpu.memory_space<vmem>>, vector<1x16x16x4xbf16>
    %65 = vector.shape_cast %64 : vector<1x16x16x4xbf16> to vector<16x16x4xbf16>
    %66 = arith.extf %65 : vector<16x16x4xbf16> to vector<16x16x4xf32>
    %67 = vector.shape_cast %66 : vector<16x16x4xf32> to vector<256x4xf32>
    %68 = arith.truncf %67 : vector<256x4xf32> to vector<256x4xbf16>
    %c2_64 = arith.constant 2 : index
    %c1_65 = arith.constant 1 : index
    %c0_66 = arith.constant 0 : index
    %c0_67 = arith.constant 0 : index
    %69 = vector.load %arg2[%c2_64, %c1_65, %c0_66, %c0_67] : memref<3x3x4x4xbf16, #tpu.memory_space<vmem>>, vector<1x1x4x4xbf16>
    %70 = vector.shape_cast %69 : vector<1x1x4x4xbf16> to vector<4x4xbf16>
    %cst_68 = arith.constant dense<0.000000e+00> : vector<256x4xf32>
    %71 = tpu.matmul %68, %70, %cst_68 {dimension_numbers = #tpu.dot_dimension_numbers<[1], [0], [0], [1], [0, 0, 1, 1], [], []>} : vector<256x4xbf16>, vector<4x4xbf16>, vector<256x4xf32> -> vector<256x4xf32>
    %72 = arith.addf %63, %71 : vector<256x4xf32>
    %c0_69 = arith.constant 0 : index
    %c2_70 = arith.constant 2 : index
    %c2_71 = arith.constant 2 : index
    %c0_72 = arith.constant 0 : index
    %73 = vector.load %arg1[%c0_69, %c2_70, %c2_71, %c0_72] : memref<1x18x18x4xbf16, #tpu.memory_space<vmem>>, vector<1x16x16x4xbf16>
    %74 = vector.shape_cast %73 : vector<1x16x16x4xbf16> to vector<16x16x4xbf16>
    %75 = arith.extf %74 : vector<16x16x4xbf16> to vector<16x16x4xf32>
    %76 = vector.shape_cast %75 : vector<16x16x4xf32> to vector<256x4xf32>
    %77 = arith.truncf %76 : vector<256x4xf32> to vector<256x4xbf16>
    %c2_73 = arith.constant 2 : index
    %c2_74 = arith.constant 2 : index
    %c0_75 = arith.constant 0 : index
    %c0_76 = arith.constant 0 : index
    %78 = vector.load %arg2[%c2_73, %c2_74, %c0_75, %c0_76] : memref<3x3x4x4xbf16, #tpu.memory_space<vmem>>, vector<1x1x4x4xbf16>
    %79 = vector.shape_cast %78 : vector<1x1x4x4xbf16> to vector<4x4xbf16>
    %cst_77 = arith.constant dense<0.000000e+00> : vector<256x4xf32>
    %80 = tpu.matmul %77, %79, %cst_77 {dimension_numbers = #tpu.dot_dimension_numbers<[1], [0], [0], [1], [0, 0, 1, 1], [], []>} : vector<256x4xbf16>, vector<4x4xbf16>, vector<256x4xf32> -> vector<256x4xf32>
    %81 = arith.addf %72, %80 : vector<256x4xf32>
    %c0_78 = arith.constant 0 : index
    %c0_79 = arith.constant 0 : index
    %82 = vector.load %arg3[%c0_78, %c0_79] : memref<1x4xf32, #tpu.memory_space<vmem>>, vector<1x4xf32>
    %83 = vector.broadcast %82 : vector<1x4xf32> to vector<256x4xf32>
    %84 = arith.addf %81, %83 : vector<256x4xf32>
    %cst_80 = arith.constant 0.000000e+00 : f32
    %85 = vector.broadcast %cst_80 : f32 to vector<256x4xf32>
    %86 = arith.maximumf %84, %85 : vector<256x4xf32>
    %87 = vector.shape_cast %86 : vector<256x4xf32> to vector<1x16x16x4xf32>
    %88 = arith.truncf %87 : vector<1x16x16x4xf32> to vector<1x16x16x4xbf16>
    %c0_81 = arith.constant 0 : index
    %c0_82 = arith.constant 0 : index
    %c0_83 = arith.constant 0 : index
    %c0_84 = arith.constant 0 : index
    %89 = vector.load %arg4[%c0_81, %c0_82, %c0_83, %c0_84] : memref<1x16x16x4xbf16, #tpu.memory_space<vmem>>, vector<1x16x16x4xbf16>
    tpu.vector_store %arg4[%c0_81, %c0_82, %c0_83, %c0_84], %88 {strides = array<i32>} : memref<1x16x16x4xbf16, #tpu.memory_space<vmem>>, vector<1x16x16x4xbf16>,
    return
  }
  func.func @transform_0(%arg0: i32) -> (i32, i32, i32, i32) {
    %c0_i32 = arith.constant 0 : i32
    %c0_i32_0 = arith.constant 0 : i32
    %c0_i32_1 = arith.constant 0 : i32
    %c0_i32_2 = arith.constant 0 : i32
    return %arg0, %c0_i32, %c0_i32_0, %c0_i32_1 : i32, i32, i32, i32
  }
  func.func @transform_1(%arg0: i32) -> (i32, i32, i32, i32) {
    %c0_i32 = arith.constant 0 : i32
    %c0_i32_0 = arith.constant 0 : i32
    %c0_i32_1 = arith.constant 0 : i32
    %c0_i32_2 = arith.constant 0 : i32
    %c0_i32_3 = arith.constant 0 : i32
    return %c0_i32, %c0_i32_0, %c0_i32_1, %c0_i32_2 : i32, i32, i32, i32
  }
  func.func @transform_2(%arg0: i32) -> (i32, i32) {
    %c0_i32 = arith.constant 0 : i32
    %c0_i32_0 = arith.constant 0 : i32
    %c0_i32_1 = arith.constant 0 : i32
    return %c0_i32, %c0_i32_0 : i32, i32
  }
  func.func @transform_3(%arg0: i32) -> (i32, i32, i32, i32) {
    %c0_i32 = arith.constant 0 : i32
    %c0_i32_0 = arith.constant 0 : i32
    %c0_i32_1 = arith.constant 0 : i32
    %c0_i32_2 = arith.constant 0 : i32
    return %arg0, %c0_i32, %c0_i32_0, %c0_i32_1 : i32, i32, i32, i32
  }
}

module attributes {stable_mosaic.version = 11 : i64} {
  func.func @_mm_bias_res_relu_kernel(%arg0: i32, %arg1: memref<256x4xbf16, #tpu.memory_space<vmem>>, %arg2: memref<4x16xbf16, #tpu.memory_space<vmem>>, %arg3: memref<1x16xf32, #tpu.memory_space<vmem>>, %arg4: memref<256x16xf32, #tpu.memory_space<vmem>>, %arg5: memref<256x16xf32, #tpu.memory_space<vmem>>) attributes {dimension_semantics = [#tpu.dimension_semantics<parallel>], iteration_bounds = array<i64: 2>, scalar_prefetch = 0 : i64, scratch_operands = 0 : i64, tpu.core_type = #tpu.core_type<tc>, window_params = [{transform_indices = @transform_0, window_bounds = array<i64: 256, 4>}, {pipeline_mode = #tpu.pipeline_mode<synchronous>, transform_indices = @transform_1, window_bounds = array<i64: 4, 16>}, {pipeline_mode = #tpu.pipeline_mode<synchronous>, transform_indices = @transform_2, window_bounds = array<i64: 1, 16>}, {transform_indices = @transform_3, window_bounds = array<i64: 256, 16>}, {transform_indices = @transform_4, window_bounds = array<i64: 256, 16>}]} {
    %c0 = arith.constant 0 : index
    %c0_0 = arith.constant 0 : index
    %0 = vector.load %arg1[%c0, %c0_0] : memref<256x4xbf16, #tpu.memory_space<vmem>>, vector<256x4xbf16>
    %c0_1 = arith.constant 0 : index
    %c0_2 = arith.constant 0 : index
    %1 = vector.load %arg2[%c0_1, %c0_2] : memref<4x16xbf16, #tpu.memory_space<vmem>>, vector<4x16xbf16>
    %cst = arith.constant dense<0.000000e+00> : vector<256x16xf32>
    %2 = tpu.matmul %0, %1, %cst {dimension_numbers = #tpu.dot_dimension_numbers<[1], [0], [0], [1], [0, 0, 1, 1], [], []>} : vector<256x4xbf16>, vector<4x16xbf16>, vector<256x16xf32> -> vector<256x16xf32>
    %c0_3 = arith.constant 0 : index
    %c0_4 = arith.constant 0 : index
    %3 = vector.load %arg3[%c0_3, %c0_4] : memref<1x16xf32, #tpu.memory_space<vmem>>, vector<1x16xf32>
    %4 = vector.broadcast %3 : vector<1x16xf32> to vector<256x16xf32>
    %5 = arith.addf %2, %4 : vector<256x16xf32>
    %c0_5 = arith.constant 0 : index
    %c0_6 = arith.constant 0 : index
    %6 = vector.load %arg4[%c0_5, %c0_6] : memref<256x16xf32, #tpu.memory_space<vmem>>, vector<256x16xf32>
    %7 = arith.addf %5, %6 : vector<256x16xf32>
    %cst_7 = arith.constant 0.000000e+00 : f32
    %8 = vector.broadcast %cst_7 : f32 to vector<256x16xf32>
    %9 = arith.maximumf %7, %8 : vector<256x16xf32>
    %c0_8 = arith.constant 0 : index
    %c0_9 = arith.constant 0 : index
    %10 = vector.load %arg5[%c0_8, %c0_9] : memref<256x16xf32, #tpu.memory_space<vmem>>, vector<256x16xf32>
    tpu.vector_store %arg5[%c0_8, %c0_9], %9 {strides = array<i32>} : memref<256x16xf32, #tpu.memory_space<vmem>>, vector<256x16xf32>,
    return
  }
  func.func @transform_0(%arg0: i32) -> (i32, i32) {
    %c0_i32 = arith.constant 0 : i32
    %c0_i32_0 = arith.constant 0 : i32
    return %arg0, %c0_i32 : i32, i32
  }
  func.func @transform_1(%arg0: i32) -> (i32, i32) {
    %c0_i32 = arith.constant 0 : i32
    %c0_i32_0 = arith.constant 0 : i32
    %c0_i32_1 = arith.constant 0 : i32
    return %c0_i32, %c0_i32_0 : i32, i32
  }
  func.func @transform_2(%arg0: i32) -> (i32, i32) {
    %c0_i32 = arith.constant 0 : i32
    %c0_i32_0 = arith.constant 0 : i32
    %c0_i32_1 = arith.constant 0 : i32
    return %c0_i32, %c0_i32_0 : i32, i32
  }
  func.func @transform_3(%arg0: i32) -> (i32, i32) {
    %c0_i32 = arith.constant 0 : i32
    %c0_i32_0 = arith.constant 0 : i32
    return %arg0, %c0_i32 : i32, i32
  }
  func.func @transform_4(%arg0: i32) -> (i32, i32) {
    %c0_i32 = arith.constant 0 : i32
    %c0_i32_0 = arith.constant 0 : i32
    return %arg0, %c0_i32 : i32, i32
  }
}

</mosaic_0001>

<llo_original>
// kernel: bottleneck_forward.3
$region0: #{bottleneck_forward.3}
  #allocation0 [shape = 'u32[]', space=smem, size = 0x4, offset = 0x4, fixed_abs, tag = 'smem constant byte address 0x4 - core index']
  #allocation1 [shape = 'u32[144,128]{1,0:T(1,128)}', space=vmem, size = 0x12000, scoped, tag = 'internal scratch']
  %s0 = inlined_call_operand.vmem [shape: bf16[512,16], index: 0, kind: input, shape index: {}]
  %s1 = inlined_call_operand.vmem [shape: bf16[16,4], index: 1, kind: input, shape index: {}]
  %s2 = inlined_call_operand.vmem [shape: f32[1,4], index: 2, kind: input, shape index: {}]
  %s3 = inlined_call_operand.vmem [shape: bf16[512,4], index: 3, kind: output, shape index: {}]
  %s4 = sld [smem:[#allocation0]]
  $region45: #{bottleneck_forward.3} parent=0
    _
  %s6 = ssub.s32 1, %s4
  %s7 = scalar_select 0, %s6, %s4
  loop: start=0, step=1, limit=4
  $region2: #{bottleneck_forward.3} parent=0 // loop_pre_header
    _
  $region3: #{bottleneck_forward.3} parent=0 // loop_header
    %s9 = sphi 0, %s13
    %p10 = scmp.ge.s32.totalorder %s9, 4
    %s19 = sphi 0, %s21
    %s22 = sphi 0, %s19
    %s23 = sphi 0, %s22
    %s39 = sphi 0, %s23
    %s43 = sphi 0, %s43
    %s45 = sphi 0, %s43
    %s46 = sphi 0, %s45
    %s60 = sphi 0, %s46
    %s64 = sphi 0, %s64
    %s66 = sphi 0, %s64
    %s67 = sphi 0, %s66
    %s81 = sphi 0, %s67
    %s87 = sphi 0, %s89
    %s90 = sphi 0, %s87
    %s91 = sphi 0, %s90
    %s107 = sphi 0, %s91
  $region4: #{bottleneck_forward.3} parent=0 // loop_header_branch
    %12 = sbr.rel (%p10) target = $region8
  $region5: #{bottleneck_forward.3} parent=0 // loop_body
    %s14 = ssub.s32 %s9, 1
    %s15 = ssub.s32 %s9, 2
    %s16 = sadd.s32 %s9, 1
    %s17 = ssub.s32 %s9, %s16
    %p18 = scmp.eq.s32.totalorder %s17, 0
    %s20 = sadd.s32 %s19, 1
    %s21 = scalar_select %p18, %s19, %s20
    %p24 = pneg %p18
    %p25 = scmp.eq.s32.totalorder %s9, 1
    %p26 = por %p24, %p25
    %p27 = scmp.ne.s32.totalorder %s19, %s22
    %p28 = scmp.eq.s32.totalorder %s9, 0
    %p29 = por %p27, %p28
    %p30 = scmp.ne.s32.totalorder %s19, %s22
    %p31 = scmp.eq.s32.totalorder %s14, 1
    %p32 = por %p30, %p31
    %p33 = scmp.ne.s32.totalorder %s22, %s23
    %p34 = scmp.eq.s32.totalorder %s14, 0
    %p35 = por %p33, %p34
    %p36 = scmp.ne.s32.totalorder %s22, %s23
    %p37 = scmp.eq.s32.totalorder %s15, 1
    %p38 = por %p36, %p37
    %p40 = scmp.ne.s32.totalorder %s23, %s39
    %p41 = scmp.eq.s32.totalorder %s15, 0
    %p42 = por %p40, %p41
    %s44 = sadd.s32 %s43, 1
    %p47 = scmp.eq.s32.totalorder %s9, 1
    %p48 = scmp.ne.s32.totalorder %s43, %s45
    %p49 = scmp.eq.s32.totalorder %s9, 0
    %p50 = por %p48, %p49
    %p51 = scmp.ne.s32.totalorder %s43, %s45
    %p52 = scmp.eq.s32.totalorder %s14, 1
    %p53 = por %p51, %p52
    %p54 = scmp.ne.s32.totalorder %s45, %s46
    %p55 = scmp.eq.s32.totalorder %s14, 0
    %p56 = por %p54, %p55
    %p57 = scmp.ne.s32.totalorder %s45, %s46
    %p58 = scmp.eq.s32.totalorder %s15, 1
    %p59 = por %p57, %p58
    %p61 = scmp.ne.s32.totalorder %s46, %s60
    %p62 = scmp.eq.s32.totalorder %s15, 0
    %p63 = por %p61, %p62
    %s65 = sadd.s32 %s64, 1
    %p68 = scmp.eq.s32.totalorder %s9, 1
    %p69 = scmp.ne.s32.totalorder %s64, %s66
    %p70 = scmp.eq.s32.totalorder %s9, 0
    %p71 = por %p69, %p70
    %p72 = scmp.ne.s32.totalorder %s64, %s66
    %p73 = scmp.eq.s32.totalorder %s14, 1
    %p74 = por %p72, %p73
    %p75 = scmp.ne.s32.totalorder %s66, %s67
    %p76 = scmp.eq.s32.totalorder %s14, 0
    %p77 = por %p75, %p76
    %p78 = scmp.ne.s32.totalorder %s66, %s67
    %p79 = scmp.eq.s32.totalorder %s15, 1
    %p80 = por %p78, %p79
    %p82 = scmp.ne.s32.totalorder %s67, %s81
    %p83 = scmp.eq.s32.totalorder %s15, 0
    %p84 = por %p82, %p83
    %s85 = ssub.s32 %s9, %s16
    %p86 = scmp.eq.s32.totalorder %s85, 0
    %s88 = sadd.s32 %s87, 1
    %s89 = scalar_select %p86, %s87, %s88
    %p92 = pneg %p86
    %p93 = scmp.eq.s32.totalorder %s9, 1
    %p94 = por %p92, %p93
    %p95 = scmp.ne.s32.totalorder %s87, %s90
    %p96 = scmp.eq.s32.totalorder %s9, 0
    %p97 = por %p95, %p96
    %p98 = scmp.ne.s32.totalorder %s87, %s90
    %p99 = scmp.eq.s32.totalorder %s14, 1
    %p100 = por %p98, %p99
    %p101 = scmp.ne.s32.totalorder %s90, %s91
    %p102 = scmp.eq.s32.totalorder %s14, 0
    %p103 = por %p101, %p102
    %p104 = scmp.ne.s32.totalorder %s90, %s91
    %p105 = scmp.eq.s32.totalorder %s15, 1
    %p106 = por %p104, %p105
    %p108 = scmp.ne.s32.totalorder %s91, %s107
    %p109 = scmp.eq.s32.totalorder %s15, 0
    %p110 = por %p108, %p109
    %p111 = scmp.le.s32.totalorder 1, %s9
    %p112 = scmp.lt.s32.totalorder %s9, 3
    %p113 = pnand %p111, %p112
    %p114 = pneg %p113
    // Predicated region
    $region9: #{bottleneck_forward.3} parent=5 // pred_check
      _
    $region10: #{bottleneck_forward.3} parent=5 // pred_check_branch
      %116 = sbr.rel (%p113) target = $region12
    $region11: #{bottleneck_forward.3} parent=5 // pred_region
      %s117 = ssub.s32 %s9, 1
      // Predicated region
      $region13: #{bottleneck_forward.3} parent=11 // pred_check
        %p118 = pneg %p56
      $region14: #{bottleneck_forward.3} parent=11 // pred_check_branch
        %120 = sbr.rel (%p118) target = $region16
      $region15: #{bottleneck_forward.3} parent=11 // pred_region
        _
      $region16: #{bottleneck_forward.3} parent=11 // pred_fallthru
        _
      // Predicated region
      $region17: #{bottleneck_forward.3} parent=11 // pred_check
        %p121 = pneg %p77
      $region18: #{bottleneck_forward.3} parent=11 // pred_check_branch
        %123 = sbr.rel (%p121) target = $region20
      $region19: #{bottleneck_forward.3} parent=11 // pred_region
        _
      $region20: #{bottleneck_forward.3} parent=11 // pred_fallthru
        _
    $region12: #{bottleneck_forward.3} parent=5 // pred_fallthru
      _
    %p124 = scmp.lt.s32.totalorder %s9, 2
    // Predicated region
    $region21: #{bottleneck_forward.3} parent=5 // pred_check
      %p125 = pneg %p124
    $region22: #{bottleneck_forward.3} parent=5 // pred_check_branch
      %127 = sbr.rel (%p125) target = $region24
    $region23: #{bottleneck_forward.3} parent=5 // pred_region
      // Predicated region
      $region25: #{bottleneck_forward.3} parent=23 // pred_check
        %p128 = pneg %p29
      $region26: #{bottleneck_forward.3} parent=23 // pred_check_branch
        %130 = sbr.rel (%p128) target = $region28
      $region27: #{bottleneck_forward.3} parent=23 // pred_region
        %s131 = smul.u32 32, %s9
        %p132 = scmp.lt.s32.totalorder %s131, 63
        %s133 = scalar_select %p132, %s131, 63
        %s134 = smul.addr %s133, 4
        %s135 = scalar_lea.vmem %s0, %s134
        %s136 = smul.u32 32, %s9
      $region28: #{bottleneck_forward.3} parent=23 // pred_fallthru
        _
    $region24: #{bottleneck_forward.3} parent=5 // pred_fallthru
      _
    %p137 = scmp.le.s32.totalorder 1, %s9
    %p138 = scmp.lt.s32.totalorder %s9, 3
    %p139 = pnand %p137, %p138
    %p140 = pneg %p139
    // Predicated region
    $region29: #{bottleneck_forward.3} parent=5 // pred_check
      _
    $region30: #{bottleneck_forward.3} parent=5 // pred_check_branch
      %142 = sbr.rel (%p139) target = $region32
    $region31: #{bottleneck_forward.3} parent=5 // pred_region
      %s143 = ssub.s32 %s9, 1
      %s144 = smul.u32 32, %s14
      %p145 = scmp.lt.s32.totalorder %s144, 63
      %s146 = scalar_select %p145, %s144, 63
      %s147 = smul.addr %s146, 4
      %s148 = scalar_lea.vmem %s0, %s147
      %p149 = pneg %p35
      %p150 = pneg %p32
      %p151 = pneg %p56
      %p152 = pneg %p53
      %p153 = pneg %p77
      %p154 = pneg %p74
      %p155 = pneg %p103
      %p156 = pneg %p100
      %s157 = smul.u32 32, %s14
      %p158 = scmp.lt.s32.totalorder %s157, 63
      %s159 = scalar_select %p158, %s157, 63
      %s160 = smul.addr %s159, 4
      %s161 = scalar_lea.vmem %s3, %s160
      %s162 = smul.u32 32, %s14
      %p163 = scmp.lt.s32.totalorder %s162, 63
      %s164 = scalar_select %p163, %s162, 63
      %s165 = smul.addr %s164, 4
      %s166 = scalar_lea.vmem %s0, %s165
      %s167 = smul.u32 32, %s14
      %s168 = smul.u32 32, %s14
      %p169 = scmp.lt.s32.totalorder %s168, 63
      %s170 = scalar_select %p169, %s168, 63
      %s171 = smul.addr %s170, 4
      %s172 = scalar_lea.vmem %s3, %s171
      %s173 = smul.u32 32, %s14
      %v175 = vld [vmem:[%s166] sm:$0xf]
      %v176 = vld [vmem:[%s166 + $0x4] sm:$0xf]
      %v177 = vld [vmem:[%s166 + $0x8] sm:$0xf]
      %v178 = vld [vmem:[%s166 + $0xc] sm:$0xf]
      %v179 = vld [vmem:[%s166 + $0x10] sm:$0xf]
      %v180 = vld [vmem:[%s166 + $0x14] sm:$0xf]
      %v181 = vld [vmem:[%s166 + $0x18] sm:$0xf]
      %v182 = vld [vmem:[%s166 + $0x1c] sm:$0xf]
      %v183 = vld [vmem:[%s166 + $0x20] sm:$0xf]
      %v184 = vld [vmem:[%s166 + $0x24] sm:$0xf]
      %v185 = vld [vmem:[%s166 + $0x28] sm:$0xf]
      %v186 = vld [vmem:[%s166 + $0x2c] sm:$0xf]
      %v187 = vld [vmem:[%s166 + $0x30] sm:$0xf]
      %v188 = vld [vmem:[%s166 + $0x34] sm:$0xf]
      %v189 = vld [vmem:[%s166 + $0x38] sm:$0xf]
      %v190 = vld [vmem:[%s166 + $0x3c] sm:$0xf]
      %v191 = vld [vmem:[%s166 + $0x40] sm:$0xf]
      %v192 = vld [vmem:[%s166 + $0x44] sm:$0xf]
      %v193 = vld [vmem:[%s166 + $0x48] sm:$0xf]
      %v194 = vld [vmem:[%s166 + $0x4c] sm:$0xf]
      %v195 = vld [vmem:[%s166 + $0x50] sm:$0xf]
      %v196 = vld [vmem:[%s166 + $0x54] sm:$0xf]
      %v197 = vld [vmem:[%s166 + $0x58] sm:$0xf]
      %v198 = vld [vmem:[%s166 + $0x5c] sm:$0xf]
      %v199 = vld [vmem:[%s166 + $0x60] sm:$0xf]
      %v200 = vld [vmem:[%s166 + $0x64] sm:$0xf]
      %v201 = vld [vmem:[%s166 + $0x68] sm:$0xf]
      %v202 = vld [vmem:[%s166 + $0x6c] sm:$0xf]
      %v203 = vld [vmem:[%s166 + $0x70] sm:$0xf]
      %v204 = vld [vmem:[%s166 + $0x74] sm:$0xf]
      %v205 = vld [vmem:[%s166 + $0x78] sm:$0xf]
      %v206 = vld [vmem:[%s166 + $0x7c] sm:$0xf]
      %v207 = vld [vmem:[%s1] sm:$0xf]
      %v208 = vld [vmem:[%s1 + $0x4] sm:$0xf]
      %v209 = vld [vmem:[%s2] sm:$0x1]
      %v211 = vlaneseq
      %v212 = vshrl.u32 %v211, 7
      %v213 = vsub.s32 0, %v212
      %v214 = vrot.slane %v209, %v213
      %v248 = vunpack.c.l.b16 %v175
      %v249 = vunpack.c.l.b16 %v176
      %v250 = vunpack.c.l.b16 %v177
      %v251 = vunpack.c.l.b16 %v178
      %v252 = vunpack.c.l.b16 %v179
      %v253 = vunpack.c.l.b16 %v180
      %v254 = vunpack.c.l.b16 %v181
      %v255 = vunpack.c.l.b16 %v182
      %v256 = vunpack.c.l.b16 %v183
      %v257 = vunpack.c.l.b16 %v184
      %v258 = vunpack.c.l.b16 %v185
      %v259 = vunpack.c.l.b16 %v186
      %v260 = vunpack.c.l.b16 %v187
      %v261 = vunpack.c.l.b16 %v188
      %v262 = vunpack.c.l.b16 %v189
      %v263 = vunpack.c.l.b16 %v190
      %v264 = vunpack.c.l.b16 %v191
      %v265 = vunpack.c.l.b16 %v192
      %v266 = vunpack.c.l.b16 %v193
      %v267 = vunpack.c.l.b16 %v194
      %v268 = vunpack.c.l.b16 %v195
      %v269 = vunpack.c.l.b16 %v196
      %v270 = vunpack.c.l.b16 %v197
      %v271 = vunpack.c.l.b16 %v198
      %v272 = vunpack.c.l.b16 %v199
      %v273 = vunpack.c.l.b16 %v200
      %v274 = vunpack.c.l.b16 %v201
      %v275 = vunpack.c.l.b16 %v202
      %v276 = vunpack.c.l.b16 %v203
      %v277 = vunpack.c.l.b16 %v204
      %v278 = vunpack.c.l.b16 %v205
      %v279 = vunpack.c.l.b16 %v206
      %v280 = vpack.c.b16 %v249, %v248
      %v281 = vpack.c.b16 %v251, %v250
      %v282 = vpack.c.b16 %v253, %v252
      %v283 = vpack.c.b16 %v255, %v254
      %v284 = vpack.c.b16 %v257, %v256
      %v285 = vpack.c.b16 %v259, %v258
      %v286 = vpack.c.b16 %v261, %v260
      %v287 = vpack.c.b16 %v263, %v262
      %v288 = vpack.c.b16 %v265, %v264
      %v289 = vpack.c.b16 %v267, %v266
      %v290 = vpack.c.b16 %v269, %v268
      %v291 = vpack.c.b16 %v271, %v270
      %v292 = vpack.c.b16 %v273, %v272
      %v293 = vpack.c.b16 %v275, %v274
      %v294 = vpack.c.b16 %v277, %v276
      %v295 = vpack.c.b16 %v279, %v278
      %v298 = vunpack.c.l.b16 %v207
      %v299 = vunpack.c.l.b16 %v208
      %v300 = vpack.c.b16 %v299, %v298
      %vm302 = vcmask 130048
      %v304 = vsel %vm302, %v280, 0
      %v307 = vsel %vm302, %v281, 0
      %v310 = vsel %vm302, %v282, 0
      %v313 = vsel %vm302, %v283, 0
      %v316 = vsel %vm302, %v284, 0
      %v319 = vsel %vm302, %v285, 0
      %v322 = vsel %vm302, %v286, 0
      %v325 = vsel %vm302, %v287, 0
      %v328 = vsel %vm302, %v288, 0
      %v331 = vsel %vm302, %v289, 0
      %v334 = vsel %vm302, %v290, 0
      %v337 = vsel %vm302, %v291, 0
      %v340 = vsel %vm302, %v292, 0
      %v343 = vsel %vm302, %v293, 0
      %v346 = vsel %vm302, %v294, 0
      %v349 = vsel %vm302, %v295, 0
      %351 = vmatprep.subr.bf16.mxu0 0
      %352 = vmatpush1.bf16.msra.mxu0 %v300
      %353 = vmatprep.subr.bf16.mxu0 0
      %354 = vmatpush1.bf16.msra.mxu0 0
      %355 = vmatprep.subr.bf16.mxu0 0
      %356 = vmatpush1.bf16.msra.mxu0 0
      %357 = vmatprep.subr.bf16.mxu0 0
      %358 = vmatpush1.bf16.msra.mxu0 0
      %359 = vmatprep.subr.bf16.mxu0 0
      %360 = vmatpush1.bf16.msra.mxu0 0
      %361 = vmatprep.subr.bf16.mxu0 0
      %362 = vmatpush1.bf16.msra.mxu0 0
      %363 = vmatprep.subr.bf16.mxu0 0
      %364 = vmatpush1.bf16.msra.mxu0 0
      %365 = vmatprep.subr.bf16.mxu0 0
      %366 = vmatpush1.bf16.msra.mxu0 0
      %367 = vmatprep.subr.bf16.mxu0 0
      %368 = vmatpush1.bf16.msra.mxu0 0
      %369 = vmatprep.subr.bf16.mxu0 0
      %370 = vmatpush1.bf16.msra.mxu0 0
      %371 = vmatprep.subr.bf16.mxu0 0
      %372 = vmatpush1.bf16.msra.mxu0 0
      %373 = vmatprep.subr.bf16.mxu0 0
      %374 = vmatpush1.bf16.msra.mxu0 0
      %375 = vmatprep.subr.bf16.mxu0 0
      %376 = vmatpush1.bf16.msra.mxu0 0
      %377 = vmatprep.subr.bf16.mxu0 0
      %378 = vmatpush1.bf16.msra.mxu0 0
      %379 = vmatprep.subr.bf16.mxu0 0
      %380 = vmatpush1.bf16.msra.mxu0 0
      %381 = vmatprep.subr.bf16.mxu0 0
      %382 = vmatpush1.bf16.msra.mxu0 0
      %383 = vmatprep.mubr.bf16.mxu0 0
      %384 = vmatmul.mubr.bf16.gmra.mrb[0].mxu0 %v304
      %v385 = vpop.f32.mrb[0].mxu0
      %v386 = vadd.f32 %v214, %v385
      %v387 = vpop.f32.mrb[0].mxu0
      %v388 = vpop.f32.mrb[0].mxu0
      %v389 = vadd.f32 %v214, %v388
      %v390 = vpop.f32.mrb[0].mxu0
      %391 = vmatprep.mubr.bf16.mxu0 0
      %392 = vmatmul.mubr.bf16.gmra.mrb[0].mxu0 %v307
      %v393 = vpop.f32.mrb[0].mxu0
      %v394 = vadd.f32 %v214, %v393
      %v395 = vpop.f32.mrb[0].mxu0
      %v396 = vpop.f32.mrb[0].mxu0
      %v397 = vadd.f32 %v214, %v396
      %v398 = vpop.f32.mrb[0].mxu0
      %399 = vmatprep.mubr.bf16.mxu0 0
      %400 = vmatmul.mubr.bf16.gmra.mrb[0].mxu0 %v310
      %v401 = vpop.f32.mrb[0].mxu0
      %v402 = vadd.f32 %v214, %v401
      %v403 = vpop.f32.mrb[0].mxu0
      %v404 = vpop.f32.mrb[0].mxu0
      %v405 = vadd.f32 %v214, %v404
      %v406 = vpop.f32.mrb[0].mxu0
      %407 = vmatprep.mubr.bf16.mxu0 0
      %408 = vmatmul.mubr.bf16.gmra.mrb[0].mxu0 %v313
      %v409 = vpop.f32.mrb[0].mxu0
      %v410 = vadd.f32 %v214, %v409
      %v411 = vpop.f32.mrb[0].mxu0
      %v412 = vpop.f32.mrb[0].mxu0
      %v413 = vadd.f32 %v214, %v412
      %v414 = vpop.f32.mrb[0].mxu0
      %415 = vmatprep.mubr.bf16.mxu0 0
      %416 = vmatmul.mubr.bf16.gmra.mrb[0].mxu0 %v316
      %v417 = vpop.f32.mrb[0].mxu0
      %v418 = vadd.f32 %v214, %v417
      %v419 = vpop.f32.mrb[0].mxu0
      %v420 = vpop.f32.mrb[0].mxu0
      %v421 = vadd.f32 %v214, %v420
      %v422 = vpop.f32.mrb[0].mxu0
      %423 = vmatprep.mubr.bf16.mxu0 0
      %424 = vmatmul.mubr.bf16.gmra.mrb[0].mxu0 %v319
      %v425 = vpop.f32.mrb[0].mxu0
      %v426 = vadd.f32 %v214, %v425
      %v427 = vpop.f32.mrb[0].mxu0
      %v428 = vpop.f32.mrb[0].mxu0
      %v429 = vadd.f32 %v214, %v428
      %v430 = vpop.f32.mrb[0].mxu0
      %431 = vmatprep.mubr.bf16.mxu0 0
      %432 = vmatmul.mubr.bf16.gmra.mrb[0].mxu0 %v322
      %v433 = vpop.f32.mrb[0].mxu0
      %v434 = vadd.f32 %v214, %v433
      %v435 = vpop.f32.mrb[0].mxu0
      %v436 = vpop.f32.mrb[0].mxu0
      %v437 = vadd.f32 %v214, %v436
      %v438 = vpop.f32.mrb[0].mxu0
      %439 = vmatprep.mubr.bf16.mxu0 0
      %440 = vmatmul.mubr.bf16.gmra.mrb[0].mxu0 %v325
      %v441 = vpop.f32.mrb[0].mxu0
      %v442 = vadd.f32 %v214, %v441
      %v443 = vpop.f32.mrb[0].mxu0
      %v444 = vpop.f32.mrb[0].mxu0
      %v445 = vadd.f32 %v214, %v444
      %v446 = vpop.f32.mrb[0].mxu0
      %447 = vmatprep.mubr.bf16.mxu0 0
      %448 = vmatmul.mubr.bf16.gmra.mrb[0].mxu0 %v328
      %v449 = vpop.f32.mrb[0].mxu0
      %v450 = vadd.f32 %v214, %v449
      %v451 = vpop.f32.mrb[0].mxu0
      %v452 = vpop.f32.mrb[0].mxu0
      %v453 = vadd.f32 %v214, %v452
      %v454 = vpop.f32.mrb[0].mxu0
      %455 = vmatprep.mubr.bf16.mxu0 0
      %456 = vmatmul.mubr.bf16.gmra.mrb[0].mxu0 %v331
      %v457 = vpop.f32.mrb[0].mxu0
      %v458 = vadd.f32 %v214, %v457
      %v459 = vpop.f32.mrb[0].mxu0
      %v460 = vpop.f32.mrb[0].mxu0
      %v461 = vadd.f32 %v214, %v460
      %v462 = vpop.f32.mrb[0].mxu0
      %463 = vmatprep.mubr.bf16.mxu0 0
      %464 = vmatmul.mubr.bf16.gmra.mrb[0].mxu0 %v334
      %v465 = vpop.f32.mrb[0].mxu0
      %v466 = vadd.f32 %v214, %v465
      %v467 = vpop.f32.mrb[0].mxu0
      %v468 = vpop.f32.mrb[0].mxu0
      %v469 = vadd.f32 %v214, %v468
      %v470 = vpop.f32.mrb[0].mxu0
      %471 = vmatprep.mubr.bf16.mxu0 0
      %472 = vmatmul.mubr.bf16.gmra.mrb[0].mxu0 %v337
      %v473 = vpop.f32.mrb[0].mxu0
      %v474 = vadd.f32 %v214, %v473
      %v475 = vpop.f32.mrb[0].mxu0
      %v476 = vpop.f32.mrb[0].mxu0
      %v477 = vadd.f32 %v214, %v476
      %v478 = vpop.f32.mrb[0].mxu0
      %479 = vmatprep.mubr.bf16.mxu0 0
      %480 = vmatmul.mubr.bf16.gmra.mrb[0].mxu0 %v340
      %v481 = vpop.f32.mrb[0].mxu0
      %v482 = vadd.f32 %v214, %v481
      %v483 = vpop.f32.mrb[0].mxu0
      %v484 = vpop.f32.mrb[0].mxu0
      %v485 = vadd.f32 %v214, %v484
      %v486 = vpop.f32.mrb[0].mxu0
      %487 = vmatprep.mubr.bf16.mxu0 0
      %488 = vmatmul.mubr.bf16.gmra.mrb[0].mxu0 %v343
      %v489 = vpop.f32.mrb[0].mxu0
      %v490 = vadd.f32 %v214, %v489
      %v491 = vpop.f32.mrb[0].mxu0
      %v492 = vpop.f32.mrb[0].mxu0
      %v493 = vadd.f32 %v214, %v492
      %v494 = vpop.f32.mrb[0].mxu0
      %495 = vmatprep.mubr.bf16.mxu0 0
      %496 = vmatmul.mubr.bf16.gmra.mrb[0].mxu0 %v346
      %v497 = vpop.f32.mrb[0].mxu0
      %v498 = vadd.f32 %v214, %v497
      %v499 = vpop.f32.mrb[0].mxu0
      %v500 = vpop.f32.mrb[0].mxu0
      %v501 = vadd.f32 %v214, %v500
      %v502 = vpop.f32.mrb[0].mxu0
      %503 = vmatprep.mubr.bf16.mxu0 0
      %504 = vmatmul.mubr.bf16.gmra.mrb[0].mxu0 %v349
      %v505 = vpop.f32.mrb[0].mxu0
      %v506 = vadd.f32 %v214, %v505
      %v507 = vpop.f32.mrb[0].mxu0
      %v508 = vpop.f32.mrb[0].mxu0
      %v509 = vadd.f32 %v214, %v508
      %v510 = vpop.f32.mrb[0].mxu0
      %511 = vdwg.mxu0
      %v512 = vmax.f32 %v386, 0.0
      %v513 = vmax.f32 %v389, 0.0
      %v514 = vmax.f32 %v394, 0.0
      %v515 = vmax.f32 %v397, 0.0
      %v516 = vmax.f32 %v402, 0.0
      %v517 = vmax.f32 %v405, 0.0
      %v518 = vmax.f32 %v410, 0.0
      %v519 = vmax.f32 %v413, 0.0
      %v520 = vmax.f32 %v418, 0.0
      %v521 = vmax.f32 %v421, 0.0
      %v522 = vmax.f32 %v426, 0.0
      %v523 = vmax.f32 %v429, 0.0
      %v524 = vmax.f32 %v434, 0.0
      %v525 = vmax.f32 %v437, 0.0
      %v526 = vmax.f32 %v442, 0.0
      %v527 = vmax.f32 %v445, 0.0
      %v528 = vmax.f32 %v450, 0.0
      %v529 = vmax.f32 %v453, 0.0
      %v530 = vmax.f32 %v458, 0.0
      %v531 = vmax.f32 %v461, 0.0
      %v532 = vmax.f32 %v466, 0.0
      %v533 = vmax.f32 %v469, 0.0
      %v534 = vmax.f32 %v474, 0.0
      %v535 = vmax.f32 %v477, 0.0
      %v536 = vmax.f32 %v482, 0.0
      %v537 = vmax.f32 %v485, 0.0
      %v538 = vmax.f32 %v490, 0.0
      %v539 = vmax.f32 %v493, 0.0
      %v540 = vmax.f32 %v498, 0.0
      %v541 = vmax.f32 %v501, 0.0
      %v542 = vmax.f32 %v506, 0.0
      %v543 = vmax.f32 %v509, 0.0
      %v544 = vpack.c.bf16 %v513, %v512
      %v545 = vpack.c.bf16 %v515, %v514
      %v546 = vpack.c.bf16 %v517, %v516
      %v547 = vpack.c.bf16 %v519, %v518
      %v548 = vpack.c.bf16 %v521, %v520
      %v549 = vpack.c.bf16 %v523, %v522
      %v550 = vpack.c.bf16 %v525, %v524
      %v551 = vpack.c.bf16 %v527, %v526
      %v552 = vpack.c.bf16 %v529, %v528
      %v553 = vpack.c.bf16 %v531, %v530
      %v554 = vpack.c.bf16 %v533, %v532
      %v555 = vpack.c.bf16 %v535, %v534
      %v556 = vpack.c.bf16 %v537, %v536
      %v557 = vpack.c.bf16 %v539, %v538
      %v558 = vpack.c.bf16 %v541, %v540
      %v559 = vpack.c.bf16 %v543, %v542
      %v576 = vunpack.c.l.b16 %v544
      %v577 = vunpack.c.h.b16 %v544
      %v578 = vunpack.c.l.b16 %v545
      %v579 = vunpack.c.h.b16 %v545
      %v580 = vunpack.c.l.b16 %v546
      %v581 = vunpack.c.h.b16 %v546
      %v582 = vunpack.c.l.b16 %v547
      %v583 = vunpack.c.h.b16 %v547
      %v584 = vunpack.c.l.b16 %v548
      %v585 = vunpack.c.h.b16 %v548
      %v586 = vunpack.c.l.b16 %v549
      %v587 = vunpack.c.h.b16 %v549
      %v588 = vunpack.c.l.b16 %v550
      %v589 = vunpack.c.h.b16 %v550
      %v590 = vunpack.c.l.b16 %v551
      %v591 = vunpack.c.h.b16 %v551
      %v592 = vunpack.c.l.b16 %v552
      %v593 = vunpack.c.h.b16 %v552
      %v594 = vunpack.c.l.b16 %v553
      %v595 = vunpack.c.h.b16 %v553
      %v596 = vunpack.c.l.b16 %v554
      %v597 = vunpack.c.h.b16 %v554
      %v598 = vunpack.c.l.b16 %v555
      %v599 = vunpack.c.h.b16 %v555
      %v600 = vunpack.c.l.b16 %v556
      %v601 = vunpack.c.h.b16 %v556
      %v602 = vunpack.c.l.b16 %v557
      %v603 = vunpack.c.h.b16 %v557
      %v604 = vunpack.c.l.b16 %v558
      %v605 = vunpack.c.h.b16 %v558
      %v606 = vunpack.c.l.b16 %v559
      %v607 = vunpack.c.h.b16 %v559
      %v608 = vpack.c.b16 %v576, %v576
      %v609 = vpack.c.b16 %v577, %v577
      %v610 = vpack.c.b16 %v578, %v578
      %v611 = vpack.c.b16 %v579, %v579
      %v612 = vpack.c.b16 %v580, %v580
      %v613 = vpack.c.b16 %v581, %v581
      %v614 = vpack.c.b16 %v582, %v582
      %v615 = vpack.c.b16 %v583, %v583
      %v616 = vpack.c.b16 %v584, %v584
      %v617 = vpack.c.b16 %v585, %v585
      %v618 = vpack.c.b16 %v586, %v586
      %v619 = vpack.c.b16 %v587, %v587
      %v620 = vpack.c.b16 %v588, %v588
      %v621 = vpack.c.b16 %v589, %v589
      %v622 = vpack.c.b16 %v590, %v590
      %v623 = vpack.c.b16 %v591, %v591
      %v624 = vpack.c.b16 %v592, %v592
      %v625 = vpack.c.b16 %v593, %v593
      %v626 = vpack.c.b16 %v594, %v594
      %v627 = vpack.c.b16 %v595, %v595
      %v628 = vpack.c.b16 %v596, %v596
      %v629 = vpack.c.b16 %v597, %v597
      %v630 = vpack.c.b16 %v598, %v598
      %v631 = vpack.c.b16 %v599, %v599
      %v632 = vpack.c.b16 %v600, %v600
      %v633 = vpack.c.b16 %v601, %v601
      %v634 = vpack.c.b16 %v602, %v602
      %v635 = vpack.c.b16 %v603, %v603
      %v636 = vpack.c.b16 %v604, %v604
      %v637 = vpack.c.b16 %v605, %v605
      %v638 = vpack.c.b16 %v606, %v606
      %v639 = vpack.c.b16 %v607, %v607
      %vm672 = vcmask 27648
      %673 = vst.msk [vmem:[%s172] sm:$0xf] %vm672, %v608
      %674 = vst.msk [vmem:[%s172 + $0x4] sm:$0xf] %vm672, %v609
      %675 = vst.msk [vmem:[%s172 + $0x8] sm:$0xf] %vm672, %v610
      %676 = vst.msk [vmem:[%s172 + $0xc] sm:$0xf] %vm672, %v611
      %677 = vst.msk [vmem:[%s172 + $0x10] sm:$0xf] %vm672, %v612
      %678 = vst.msk [vmem:[%s172 + $0x14] sm:$0xf] %vm672, %v613
      %679 = vst.msk [vmem:[%s172 + $0x18] sm:$0xf] %vm672, %v614
      %680 = vst.msk [vmem:[%s172 + $0x1c] sm:$0xf] %vm672, %v615
      %681 = vst.msk [vmem:[%s172 + $0x20] sm:$0xf] %vm672, %v616
      %682 = vst.msk [vmem:[%s172 + $0x24] sm:$0xf] %vm672, %v617
      %683 = vst.msk [vmem:[%s172 + $0x28] sm:$0xf] %vm672, %v618
      %684 = vst.msk [vmem:[%s172 + $0x2c] sm:$0xf] %vm672, %v619
      %685 = vst.msk [vmem:[%s172 + $0x30] sm:$0xf] %vm672, %v620
      %686 = vst.msk [vmem:[%s172 + $0x34] sm:$0xf] %vm672, %v621
      %687 = vst.msk [vmem:[%s172 + $0x38] sm:$0xf] %vm672, %v622
      %688 = vst.msk [vmem:[%s172 + $0x3c] sm:$0xf] %vm672, %v623
      %689 = vst.msk [vmem:[%s172 + $0x40] sm:$0xf] %vm672, %v624
      %690 = vst.msk [vmem:[%s172 + $0x44] sm:$0xf] %vm672, %v625
      %691 = vst.msk [vmem:[%s172 + $0x48] sm:$0xf] %vm672, %v626
      %692 = vst.msk [vmem:[%s172 + $0x4c] sm:$0xf] %vm672, %v627
      %693 = vst.msk [vmem:[%s172 + $0x50] sm:$0xf] %vm672, %v628
      %694 = vst.msk [vmem:[%s172 + $0x54] sm:$0xf] %vm672, %v629
      %695 = vst.msk [vmem:[%s172 + $0x58] sm:$0xf] %vm672, %v630
      %696 = vst.msk [vmem:[%s172 + $0x5c] sm:$0xf] %vm672, %v631
      %697 = vst.msk [vmem:[%s172 + $0x60] sm:$0xf] %vm672, %v632
      %698 = vst.msk [vmem:[%s172 + $0x64] sm:$0xf] %vm672, %v633
      %699 = vst.msk [vmem:[%s172 + $0x68] sm:$0xf] %vm672, %v634
      %700 = vst.msk [vmem:[%s172 + $0x6c] sm:$0xf] %vm672, %v635
      %701 = vst.msk [vmem:[%s172 + $0x70] sm:$0xf] %vm672, %v636
      %702 = vst.msk [vmem:[%s172 + $0x74] sm:$0xf] %vm672, %v637
      %703 = vst.msk [vmem:[%s172 + $0x78] sm:$0xf] %vm672, %v638
      %704 = vst.msk [vmem:[%s172 + $0x7c] sm:$0xf] %vm672, %v639
      %s705 = smul.u32 32, %s14
      %p706 = scmp.lt.s32.totalorder %s705, 63
      %s707 = scalar_select %p706, %s705, 63
      %s708 = smul.addr %s707, 4
      %s709 = scalar_lea.vmem %s3, %s708
      // Predicated region
      $region33: #{bottleneck_forward.3} parent=31 // pred_check
        %p710 = pneg %p100
      $region34: #{bottleneck_forward.3} parent=31 // pred_check_branch
        %712 = sbr.rel (%p710) target = $region36
      $region35: #{bottleneck_forward.3} parent=31 // pred_region
        %s713 = smul.u32 32, %s14
      $region36: #{bottleneck_forward.3} parent=31 // pred_fallthru
        _
    $region32: #{bottleneck_forward.3} parent=5 // pred_fallthru
      _
    %p714 = scmp.le.s32.totalorder 2, %s9
    // Predicated region
    $region37: #{bottleneck_forward.3} parent=5 // pred_check
      %p715 = pneg %p714
    $region38: #{bottleneck_forward.3} parent=5 // pred_check_branch
      %717 = sbr.rel (%p715) target = $region40
    $region39: #{bottleneck_forward.3} parent=5 // pred_region
      %s718 = ssub.s32 %s9, 2
      // Predicated region
      $region41: #{bottleneck_forward.3} parent=39 // pred_check
        %p719 = pneg %p106
      $region42: #{bottleneck_forward.3} parent=39 // pred_check_branch
        %721 = sbr.rel (%p719) target = $region44
      $region43: #{bottleneck_forward.3} parent=39 // pred_region
        %s722 = smul.u32 32, %s15
        %p723 = scmp.lt.s32.totalorder %s722, 63
        %s724 = scalar_select %p723, %s722, 63
        %s725 = smul.addr %s724, 4
        %s726 = scalar_lea.vmem %s3, %s725
      $region44: #{bottleneck_forward.3} parent=39 // pred_fallthru
        _
    $region40: #{bottleneck_forward.3} parent=5 // pred_fallthru
      _
  $region6: #{bottleneck_forward.3} parent=0 // loop_footer
    %s13 = sadd.s32 1, %s9
  $region7: #{bottleneck_forward.3} parent=0 // loop_footer_branch
    %8 = sbr.rel target = $region3
  $region8: #{bottleneck_forward.3} parent=0 // loop_exit
    _

// kernel: bottleneck_forward.5
$region0: #{bottleneck_forward.5}
  #allocation0 [shape = 'u32[]', space=smem, size = 0x4, offset = 0x4, fixed_abs, tag = 'smem constant byte address 0x4 - core index']
  #allocation1 [shape = 'u32[144,128]{1,0:T(1,128)}', space=vmem, size = 0x12000, scoped, tag = 'internal scratch']
  %s0 = inlined_call_operand.vmem [shape: bf16[512,4], index: 0, kind: input, shape index: {}]
  %s1 = inlined_call_operand.vmem [shape: bf16[4,16], index: 1, kind: input, shape index: {}]
  %s2 = inlined_call_operand.vmem [shape: f32[1,16], index: 2, kind: input, shape index: {}]
  %s3 = inlined_call_operand.vmem [shape: f32[512,16], index: 3, kind: input, shape index: {}]
  %s4 = inlined_call_operand.vmem [shape: f32[512,16], index: 4, kind: output, shape index: {}]
  %s5 = sld [smem:[#allocation0]]
  $region49: #{bottleneck_forward.5} parent=0
    _
  %s7 = ssub.s32 1, %s5
  %s8 = scalar_select 0, %s7, %s5
  loop: start=0, step=1, limit=4
  $region2: #{bottleneck_forward.5} parent=0 // loop_pre_header
    _
  $region3: #{bottleneck_forward.5} parent=0 // loop_header
    %s10 = sphi 0, %s14
    %p11 = scmp.ge.s32.totalorder %s10, 4
    %s20 = sphi 0, %s22
    %s23 = sphi 0, %s20
    %s24 = sphi 0, %s23
    %s40 = sphi 0, %s24
    %s44 = sphi 0, %s44
    %s46 = sphi 0, %s44
    %s47 = sphi 0, %s46
    %s61 = sphi 0, %s47
    %s65 = sphi 0, %s65
    %s67 = sphi 0, %s65
    %s68 = sphi 0, %s67
    %s82 = sphi 0, %s68
    %s88 = sphi 0, %s90
    %s91 = sphi 0, %s88
    %s92 = sphi 0, %s91
    %s108 = sphi 0, %s92
    %s114 = sphi 0, %s116
    %s117 = sphi 0, %s114
    %s118 = sphi 0, %s117
    %s134 = sphi 0, %s118
  $region4: #{bottleneck_forward.5} parent=0 // loop_header_branch
    %13 = sbr.rel (%p11) target = $region8
  $region5: #{bottleneck_forward.5} parent=0 // loop_body
    %s15 = ssub.s32 %s10, 1
    %s16 = ssub.s32 %s10, 2
    %s17 = sadd.s32 %s10, 1
    %s18 = ssub.s32 %s10, %s17
    %p19 = scmp.eq.s32.totalorder %s18, 0
    %s21 = sadd.s32 %s20, 1
    %s22 = scalar_select %p19, %s20, %s21
    %p25 = pneg %p19
    %p26 = scmp.eq.s32.totalorder %s10, 1
    %p27 = por %p25, %p26
    %p28 = scmp.ne.s32.totalorder %s20, %s23
    %p29 = scmp.eq.s32.totalorder %s10, 0
    %p30 = por %p28, %p29
    %p31 = scmp.ne.s32.totalorder %s20, %s23
    %p32 = scmp.eq.s32.totalorder %s15, 1
    %p33 = por %p31, %p32
    %p34 = scmp.ne.s32.totalorder %s23, %s24
    %p35 = scmp.eq.s32.totalorder %s15, 0
    %p36 = por %p34, %p35
    %p37 = scmp.ne.s32.totalorder %s23, %s24
    %p38 = scmp.eq.s32.totalorder %s16, 1
    %p39 = por %p37, %p38
    %p41 = scmp.ne.s32.totalorder %s24, %s40
    %p42 = scmp.eq.s32.totalorder %s16, 0
    %p43 = por %p41, %p42
    %s45 = sadd.s32 %s44, 1
    %p48 = scmp.eq.s32.totalorder %s10, 1
    %p49 = scmp.ne.s32.totalorder %s44, %s46
    %p50 = scmp.eq.s32.totalorder %s10, 0
    %p51 = por %p49, %p50
    %p52 = scmp.ne.s32.totalorder %s44, %s46
    %p53 = scmp.eq.s32.totalorder %s15, 1
    %p54 = por %p52, %p53
    %p55 = scmp.ne.s32.totalorder %s46, %s47
    %p56 = scmp.eq.s32.totalorder %s15, 0
    %p57 = por %p55, %p56
    %p58 = scmp.ne.s32.totalorder %s46, %s47
    %p59 = scmp.eq.s32.totalorder %s16, 1
    %p60 = por %p58, %p59
    %p62 = scmp.ne.s32.totalorder %s47, %s61
    %p63 = scmp.eq.s32.totalorder %s16, 0
    %p64 = por %p62, %p63
    %s66 = sadd.s32 %s65, 1
    %p69 = scmp.eq.s32.totalorder %s10, 1
    %p70 = scmp.ne.s32.totalorder %s65, %s67
    %p71 = scmp.eq.s32.totalorder %s10, 0
    %p72 = por %p70, %p71
    %p73 = scmp.ne.s32.totalorder %s65, %s67
    %p74 = scmp.eq.s32.totalorder %s15, 1
    %p75 = por %p73, %p74
    %p76 = scmp.ne.s32.totalorder %s67, %s68
    %p77 = scmp.eq.s32.totalorder %s15, 0
    %p78 = por %p76, %p77
    %p79 = scmp.ne.s32.totalorder %s67, %s68
    %p80 = scmp.eq.s32.totalorder %s16, 1
    %p81 = por %p79, %p80
    %p83 = scmp.ne.s32.totalorder %s68, %s82
    %p84 = scmp.eq.s32.totalorder %s16, 0
    %p85 = por %p83, %p84
    %s86 = ssub.s32 %s10, %s17
    %p87 = scmp.eq.s32.totalorder %s86, 0
    %s89 = sadd.s32 %s88, 1
    %s90 = scalar_select %p87, %s88, %s89
    %p93 = pneg %p87
    %p94 = scmp.eq.s32.totalorder %s10, 1
    %p95 = por %p93, %p94
    %p96 = scmp.ne.s32.totalorder %s88, %s91
    %p97 = scmp.eq.s32.totalorder %s10, 0
    %p98 = por %p96, %p97
    %p99 = scmp.ne.s32.totalorder %s88, %s91
    %p100 = scmp.eq.s32.totalorder %s15, 1
    %p101 = por %p99, %p100
    %p102 = scmp.ne.s32.totalorder %s91, %s92
    %p103 = scmp.eq.s32.totalorder %s15, 0
    %p104 = por %p102, %p103
    %p105 = scmp.ne.s32.totalorder %s91, %s92
    %p106 = scmp.eq.s32.totalorder %s16, 1
    %p107 = por %p105, %p106
    %p109 = scmp.ne.s32.totalorder %s92, %s108
    %p110 = scmp.eq.s32.totalorder %s16, 0
    %p111 = por %p109, %p110
    %s112 = ssub.s32 %s10, %s17
    %p113 = scmp.eq.s32.totalorder %s112, 0
    %s115 = sadd.s32 %s114, 1
    %s116 = scalar_select %p113, %s114, %s115
    %p119 = pneg %p113
    %p120 = scmp.eq.s32.totalorder %s10, 1
    %p121 = por %p119, %p120
    %p122 = scmp.ne.s32.totalorder %s114, %s117
    %p123 = scmp.eq.s32.totalorder %s10, 0
    %p124 = por %p122, %p123
    %p125 = scmp.ne.s32.totalorder %s114, %s117
    %p126 = scmp.eq.s32.totalorder %s15, 1
    %p127 = por %p125, %p126
    %p128 = scmp.ne.s32.totalorder %s117, %s118
    %p129 = scmp.eq.s32.totalorder %s15, 0
    %p130 = por %p128, %p129
    %p131 = scmp.ne.s32.totalorder %s117, %s118
    %p132 = scmp.eq.s32.totalorder %s16, 1
    %p133 = por %p131, %p132
    %p135 = scmp.ne.s32.totalorder %s118, %s134
    %p136 = scmp.eq.s32.totalorder %s16, 0
    %p137 = por %p135, %p136
    %p138 = scmp.le.s32.totalorder 1, %s10
    %p139 = scmp.lt.s32.totalorder %s10, 3
    %p140 = pnand %p138, %p139
    %p141 = pneg %p140
    // Predicated region
    $region9: #{bottleneck_forward.5} parent=5 // pred_check
      _
    $region10: #{bottleneck_forward.5} parent=5 // pred_check_branch
      %143 = sbr.rel (%p140) target = $region12
    $region11: #{bottleneck_forward.5} parent=5 // pred_region
      %s144 = ssub.s32 %s10, 1
      // Predicated region
      $region13: #{bottleneck_forward.5} parent=11 // pred_check
        %p145 = pneg %p57
      $region14: #{bottleneck_forward.5} parent=11 // pred_check_branch
        %147 = sbr.rel (%p145) target = $region16
      $region15: #{bottleneck_forward.5} parent=11 // pred_region
        _
      $region16: #{bottleneck_forward.5} parent=11 // pred_fallthru
        _
      // Predicated region
      $region17: #{bottleneck_forward.5} parent=11 // pred_check
        %p148 = pneg %p78
      $region18: #{bottleneck_forward.5} parent=11 // pred_check_branch
        %150 = sbr.rel (%p148) target = $region20
      $region19: #{bottleneck_forward.5} parent=11 // pred_region
        _
      $region20: #{bottleneck_forward.5} parent=11 // pred_fallthru
        _
    $region12: #{bottleneck_forward.5} parent=5 // pred_fallthru
      _
    %p151 = scmp.lt.s32.totalorder %s10, 2
    // Predicated region
    $region21: #{bottleneck_forward.5} parent=5 // pred_check
      %p152 = pneg %p151
    $region22: #{bottleneck_forward.5} parent=5 // pred_check_branch
      %154 = sbr.rel (%p152) target = $region24
    $region23: #{bottleneck_forward.5} parent=5 // pred_region
      // Predicated region
      $region25: #{bottleneck_forward.5} parent=23 // pred_check
        %p155 = pneg %p30
      $region26: #{bottleneck_forward.5} parent=23 // pred_check_branch
        %157 = sbr.rel (%p155) target = $region28
      $region27: #{bottleneck_forward.5} parent=23 // pred_region
        %s158 = smul.u32 32, %s10
        %p159 = scmp.lt.s32.totalorder %s158, 63
        %s160 = scalar_select %p159, %s158, 63
        %s161 = smul.addr %s160, 4
        %s162 = scalar_lea.vmem %s0, %s161
        %s163 = smul.u32 32, %s10
      $region28: #{bottleneck_forward.5} parent=23 // pred_fallthru
        _
      // Predicated region
      $region29: #{bottleneck_forward.5} parent=23 // pred_check
        %p164 = pneg %p98
      $region30: #{bottleneck_forward.5} parent=23 // pred_check_branch
        %166 = sbr.rel (%p164) target = $region32
      $region31: #{bottleneck_forward.5} parent=23 // pred_region
        %s167 = smul.u32 32, %s10
        %p168 = scmp.lt.s32.totalorder %s167, 63
        %s169 = scalar_select %p168, %s167, 63
        %s170 = smul.addr %s169, 8
        %s171 = scalar_lea.vmem %s3, %s170
        %s172 = smul.u32 32, %s10
      $region32: #{bottleneck_forward.5} parent=23 // pred_fallthru
        _
    $region24: #{bottleneck_forward.5} parent=5 // pred_fallthru
      _
    %p173 = scmp.le.s32.totalorder 1, %s10
    %p174 = scmp.lt.s32.totalorder %s10, 3
    %p175 = pnand %p173, %p174
    %p176 = pneg %p175
    // Predicated region
    $region33: #{bottleneck_forward.5} parent=5 // pred_check
      _
    $region34: #{bottleneck_forward.5} parent=5 // pred_check_branch
      %178 = sbr.rel (%p175) target = $region36
    $region35: #{bottleneck_forward.5} parent=5 // pred_region
      %s179 = ssub.s32 %s10, 1
      %s180 = smul.u32 32, %s15
      %p181 = scmp.lt.s32.totalorder %s180, 63
      %s182 = scalar_select %p181, %s180, 63
      %s183 = smul.addr %s182, 4
      %s184 = scalar_lea.vmem %s0, %s183
      %p185 = pneg %p36
      %p186 = pneg %p33
      %p187 = pneg %p57
      %p188 = pneg %p54
      %p189 = pneg %p78
      %p190 = pneg %p75
      %s191 = smul.u32 32, %s15
      %p192 = scmp.lt.s32.totalorder %s191, 63
      %s193 = scalar_select %p192, %s191, 63
      %s194 = smul.addr %s193, 8
      %s195 = scalar_lea.vmem %s3, %s194
      %p196 = pneg %p104
      %p197 = pneg %p101
      %p198 = pneg %p130
      %p199 = pneg %p127
      %s200 = smul.u32 32, %s15
      %p201 = scmp.lt.s32.totalorder %s200, 63
      %s202 = scalar_select %p201, %s200, 63
      %s203 = smul.addr %s202, 8
      %s204 = scalar_lea.vmem %s4, %s203
      %s205 = smul.u32 32, %s15
      %p206 = scmp.lt.s32.totalorder %s205, 63
      %s207 = scalar_select %p206, %s205, 63
      %s208 = smul.addr %s207, 4
      %s209 = scalar_lea.vmem %s0, %s208
      %s210 = smul.u32 32, %s15
      %s211 = smul.u32 32, %s15
      %p212 = scmp.lt.s32.totalorder %s211, 63
      %s213 = scalar_select %p212, %s211, 63
      %s214 = smul.addr %s213, 8
      %s215 = scalar_lea.vmem %s3, %s214
      %s216 = smul.u32 32, %s15
      %s217 = smul.u32 32, %s15
      %p218 = scmp.lt.s32.totalorder %s217, 63
      %s219 = scalar_select %p218, %s217, 63
      %s220 = smul.addr %s219, 8
      %s221 = scalar_lea.vmem %s4, %s220
      %s222 = smul.u32 32, %s15
      %v224 = vld [vmem:[%s209] sm:$0xf]
      %v225 = vld [vmem:[%s209 + $0x4] sm:$0xf]
      %v226 = vld [vmem:[%s209 + $0x8] sm:$0xf]
      %v227 = vld [vmem:[%s209 + $0xc] sm:$0xf]
      %v228 = vld [vmem:[%s209 + $0x10] sm:$0xf]
      %v229 = vld [vmem:[%s209 + $0x14] sm:$0xf]
      %v230 = vld [vmem:[%s209 + $0x18] sm:$0xf]
      %v231 = vld [vmem:[%s209 + $0x1c] sm:$0xf]
      %v232 = vld [vmem:[%s209 + $0x20] sm:$0xf]
      %v233 = vld [vmem:[%s209 + $0x24] sm:$0xf]
      %v234 = vld [vmem:[%s209 + $0x28] sm:$0xf]
      %v235 = vld [vmem:[%s209 + $0x2c] sm:$0xf]
      %v236 = vld [vmem:[%s209 + $0x30] sm:$0xf]
      %v237 = vld [vmem:[%s209 + $0x34] sm:$0xf]
      %v238 = vld [vmem:[%s209 + $0x38] sm:$0xf]
      %v239 = vld [vmem:[%s209 + $0x3c] sm:$0xf]
      %v240 = vld [vmem:[%s209 + $0x40] sm:$0xf]
      %v241 = vld [vmem:[%s209 + $0x44] sm:$0xf]
      %v242 = vld [vmem:[%s209 + $0x48] sm:$0xf]
      %v243 = vld [vmem:[%s209 + $0x4c] sm:$0xf]
      %v244 = vld [vmem:[%s209 + $0x50] sm:$0xf]
      %v245 = vld [vmem:[%s209 + $0x54] sm:$0xf]
      %v246 = vld [vmem:[%s209 + $0x58] sm:$0xf]
      %v247 = vld [vmem:[%s209 + $0x5c] sm:$0xf]
      %v248 = vld [vmem:[%s209 + $0x60] sm:$0xf]
      %v249 = vld [vmem:[%s209 + $0x64] sm:$0xf]
      %v250 = vld [vmem:[%s209 + $0x68] sm:$0xf]
      %v251 = vld [vmem:[%s209 + $0x6c] sm:$0xf]
      %v252 = vld [vmem:[%s209 + $0x70] sm:$0xf]
      %v253 = vld [vmem:[%s209 + $0x74] sm:$0xf]
      %v254 = vld [vmem:[%s209 + $0x78] sm:$0xf]
      %v255 = vld [vmem:[%s209 + $0x7c] sm:$0xf]
      %v256 = vld [vmem:[%s1] sm:$0x3]
      %v257 = vld [vmem:[%s2] sm:$0x1]
      %v259 = vlaneseq
      %v260 = vshrl.u32 %v259, 7
      %v261 = vsub.s32 0, %v260
      %v262 = vrot.slane %v257, %v261
      %v296 = vunpack.c.l.b16 %v224
      %v297 = vunpack.c.l.b16 %v225
      %v298 = vunpack.c.l.b16 %v226
      %v299 = vunpack.c.l.b16 %v227
      %v300 = vunpack.c.l.b16 %v228
      %v301 = vunpack.c.l.b16 %v229
      %v302 = vunpack.c.l.b16 %v230
      %v303 = vunpack.c.l.b16 %v231
      %v304 = vunpack.c.l.b16 %v232
      %v305 = vunpack.c.l.b16 %v233
      %v306 = vunpack.c.l.b16 %v234
      %v307 = vunpack.c.l.b16 %v235
      %v308 = vunpack.c.l.b16 %v236
      %v309 = vunpack.c.l.b16 %v237
      %v310 = vunpack.c.l.b16 %v238
      %v311 = vunpack.c.l.b16 %v239
      %v312 = vunpack.c.l.b16 %v240
      %v313 = vunpack.c.l.b16 %v241
      %v314 = vunpack.c.l.b16 %v242
      %v315 = vunpack.c.l.b16 %v243
      %v316 = vunpack.c.l.b16 %v244
      %v317 = vunpack.c.l.b16 %v245
      %v318 = vunpack.c.l.b16 %v246
      %v319 = vunpack.c.l.b16 %v247
      %v320 = vunpack.c.l.b16 %v248
      %v321 = vunpack.c.l.b16 %v249
      %v322 = vunpack.c.l.b16 %v250
      %v323 = vunpack.c.l.b16 %v251
      %v324 = vunpack.c.l.b16 %v252
      %v325 = vunpack.c.l.b16 %v253
      %v326 = vunpack.c.l.b16 %v254
      %v327 = vunpack.c.l.b16 %v255
      %v328 = vpack.c.b16 %v297, %v296
      %v329 = vpack.c.b16 %v299, %v298
      %v330 = vpack.c.b16 %v301, %v300
      %v331 = vpack.c.b16 %v303, %v302
      %v332 = vpack.c.b16 %v305, %v304
      %v333 = vpack.c.b16 %v307, %v306
      %v334 = vpack.c.b16 %v309, %v308
      %v335 = vpack.c.b16 %v311, %v310
      %v336 = vpack.c.b16 %v313, %v312
      %v337 = vpack.c.b16 %v315, %v314
      %v338 = vpack.c.b16 %v317, %v316
      %v339 = vpack.c.b16 %v319, %v318
      %v340 = vpack.c.b16 %v321, %v320
      %v341 = vpack.c.b16 %v323, %v322
      %v342 = vpack.c.b16 %v325, %v324
      %v343 = vpack.c.b16 %v327, %v326
      %vm344 = vcmask 31744
      %v346 = vsel %vm344, %v328, 0
      %v349 = vsel %vm344, %v329, 0
      %v352 = vsel %vm344, %v330, 0
      %v355 = vsel %vm344, %v331, 0
      %v358 = vsel %vm344, %v332, 0
      %v361 = vsel %vm344, %v333, 0
      %v364 = vsel %vm344, %v334, 0
      %v367 = vsel %vm344, %v335, 0
      %v370 = vsel %vm344, %v336, 0
      %v373 = vsel %vm344, %v337, 0
      %v376 = vsel %vm344, %v338, 0
      %v379 = vsel %vm344, %v339, 0
      %v382 = vsel %vm344, %v340, 0
      %v385 = vsel %vm344, %v341, 0
      %v388 = vsel %vm344, %v342, 0
      %v391 = vsel %vm344, %v343, 0
      %vm393 = vcmask 1041408
      %v395 = vsel %vm393, %v256, 0
      %397 = vmatprep.subr.bf16.mxu0 0
      %398 = vmatpush1.bf16.msra.mxu0 %v395
      %399 = vmatprep.subr.bf16.mxu0 0
      %400 = vmatpush1.bf16.msra.mxu0 0
      %401 = vmatprep.subr.bf16.mxu0 0
      %402 = vmatpush1.bf16.msra.mxu0 0
      %403 = vmatprep.subr.bf16.mxu0 0
      %404 = vmatpush1.bf16.msra.mxu0 0
      %405 = vmatprep.subr.bf16.mxu0 0
      %406 = vmatpush1.bf16.msra.mxu0 0
      %407 = vmatprep.subr.bf16.mxu0 0
      %408 = vmatpush1.bf16.msra.mxu0 0
      %409 = vmatprep.subr.bf16.mxu0 0
      %410 = vmatpush1.bf16.msra.mxu0 0
      %411 = vmatprep.subr.bf16.mxu0 0
      %412 = vmatpush1.bf16.msra.mxu0 0
      %413 = vmatprep.subr.bf16.mxu0 0
      %414 = vmatpush1.bf16.msra.mxu0 0
      %415 = vmatprep.subr.bf16.mxu0 0
      %416 = vmatpush1.bf16.msra.mxu0 0
      %417 = vmatprep.subr.bf16.mxu0 0
      %418 = vmatpush1.bf16.msra.mxu0 0
      %419 = vmatprep.subr.bf16.mxu0 0
      %420 = vmatpush1.bf16.msra.mxu0 0
      %421 = vmatprep.subr.bf16.mxu0 0
      %422 = vmatpush1.bf16.msra.mxu0 0
      %423 = vmatprep.subr.bf16.mxu0 0
      %424 = vmatpush1.bf16.msra.mxu0 0
      %425 = vmatprep.subr.bf16.mxu0 0
      %426 = vmatpush1.bf16.msra.mxu0 0
      %427 = vmatprep.subr.bf16.mxu0 0
      %428 = vmatpush1.bf16.msra.mxu0 0
      %429 = vmatprep.mubr.bf16.mxu0 0
      %430 = vmatmul.mubr.bf16.gmra.mrb[0].mxu0 %v346
      %v431 = vpop.f32.mrb[0].mxu0
      %v432 = vadd.f32 %v262, %v431
      %v433 = vpop.f32.mrb[0].mxu0
      %v434 = vpop.f32.mrb[0].mxu0
      %v435 = vadd.f32 %v262, %v434
      %v436 = vpop.f32.mrb[0].mxu0
      %437 = vmatprep.mubr.bf16.mxu0 0
      %438 = vmatmul.mubr.bf16.gmra.mrb[0].mxu0 %v349
      %v439 = vpop.f32.mrb[0].mxu0
      %v440 = vadd.f32 %v262, %v439
      %v441 = vpop.f32.mrb[0].mxu0
      %v442 = vpop.f32.mrb[0].mxu0
      %v443 = vadd.f32 %v262, %v442
      %v444 = vpop.f32.mrb[0].mxu0
      %445 = vmatprep.mubr.bf16.mxu0 0
      %446 = vmatmul.mubr.bf16.gmra.mrb[0].mxu0 %v352
      %v447 = vpop.f32.mrb[0].mxu0
      %v448 = vadd.f32 %v262, %v447
      %v449 = vpop.f32.mrb[0].mxu0
      %v450 = vpop.f32.mrb[0].mxu0
      %v451 = vadd.f32 %v262, %v450
      %v452 = vpop.f32.mrb[0].mxu0
      %453 = vmatprep.mubr.bf16.mxu0 0
      %454 = vmatmul.mubr.bf16.gmra.mrb[0].mxu0 %v355
      %v455 = vpop.f32.mrb[0].mxu0
      %v456 = vadd.f32 %v262, %v455
      %v457 = vpop.f32.mrb[0].mxu0
      %v458 = vpop.f32.mrb[0].mxu0
      %v459 = vadd.f32 %v262, %v458
      %v460 = vpop.f32.mrb[0].mxu0
      %461 = vmatprep.mubr.bf16.mxu0 0
      %462 = vmatmul.mubr.bf16.gmra.mrb[0].mxu0 %v358
      %v463 = vpop.f32.mrb[0].mxu0
      %v464 = vadd.f32 %v262, %v463
      %v465 = vpop.f32.mrb[0].mxu0
      %v466 = vpop.f32.mrb[0].mxu0
      %v467 = vadd.f32 %v262, %v466
      %v468 = vpop.f32.mrb[0].mxu0
      %469 = vmatprep.mubr.bf16.mxu0 0
      %470 = vmatmul.mubr.bf16.gmra.mrb[0].mxu0 %v361
      %v471 = vpop.f32.mrb[0].mxu0
      %v472 = vadd.f32 %v262, %v471
      %v473 = vpop.f32.mrb[0].mxu0
      %v474 = vpop.f32.mrb[0].mxu0
      %v475 = vadd.f32 %v262, %v474
      %v476 = vpop.f32.mrb[0].mxu0
      %477 = vmatprep.mubr.bf16.mxu0 0
      %478 = vmatmul.mubr.bf16.gmra.mrb[0].mxu0 %v364
      %v479 = vpop.f32.mrb[0].mxu0
      %v480 = vadd.f32 %v262, %v479
      %v481 = vpop.f32.mrb[0].mxu0
      %v482 = vpop.f32.mrb[0].mxu0
      %v483 = vadd.f32 %v262, %v482
      %v484 = vpop.f32.mrb[0].mxu0
      %485 = vmatprep.mubr.bf16.mxu0 0
      %486 = vmatmul.mubr.bf16.gmra.mrb[0].mxu0 %v367
      %v487 = vpop.f32.mrb[0].mxu0
      %v488 = vadd.f32 %v262, %v487
      %v489 = vpop.f32.mrb[0].mxu0
      %v490 = vpop.f32.mrb[0].mxu0
      %v491 = vadd.f32 %v262, %v490
      %v492 = vpop.f32.mrb[0].mxu0
      %493 = vmatprep.mubr.bf16.mxu0 0
      %494 = vmatmul.mubr.bf16.gmra.mrb[0].mxu0 %v370
      %v495 = vpop.f32.mrb[0].mxu0
      %v496 = vadd.f32 %v262, %v495
      %v497 = vpop.f32.mrb[0].mxu0
      %v498 = vpop.f32.mrb[0].mxu0
      %v499 = vadd.f32 %v262, %v498
      %v500 = vpop.f32.mrb[0].mxu0
      %501 = vmatprep.mubr.bf16.mxu0 0
      %502 = vmatmul.mubr.bf16.gmra.mrb[0].mxu0 %v373
      %v503 = vpop.f32.mrb[0].mxu0
      %v504 = vadd.f32 %v262, %v503
      %v505 = vpop.f32.mrb[0].mxu0
      %v506 = vpop.f32.mrb[0].mxu0
      %v507 = vadd.f32 %v262, %v506
      %v508 = vpop.f32.mrb[0].mxu0
      %509 = vmatprep.mubr.bf16.mxu0 0
      %510 = vmatmul.mubr.bf16.gmra.mrb[0].mxu0 %v376
      %v511 = vpop.f32.mrb[0].mxu0
      %v512 = vadd.f32 %v262, %v511
      %v513 = vpop.f32.mrb[0].mxu0
      %v514 = vpop.f32.mrb[0].mxu0
      %v515 = vadd.f32 %v262, %v514
      %v516 = vpop.f32.mrb[0].mxu0
      %517 = vmatprep.mubr.bf16.mxu0 0
      %518 = vmatmul.mubr.bf16.gmra.mrb[0].mxu0 %v379
      %v519 = vpop.f32.mrb[0].mxu0
      %v520 = vadd.f32 %v262, %v519
      %v521 = vpop.f32.mrb[0].mxu0
      %v522 = vpop.f32.mrb[0].mxu0
      %v523 = vadd.f32 %v262, %v522
      %v524 = vpop.f32.mrb[0].mxu0
      %525 = vmatprep.mubr.bf16.mxu0 0
      %526 = vmatmul.mubr.bf16.gmra.mrb[0].mxu0 %v382
      %v527 = vpop.f32.mrb[0].mxu0
      %v528 = vadd.f32 %v262, %v527
      %v529 = vpop.f32.mrb[0].mxu0
      %v530 = vpop.f32.mrb[0].mxu0
      %v531 = vadd.f32 %v262, %v530
      %v532 = vpop.f32.mrb[0].mxu0
      %533 = vmatprep.mubr.bf16.mxu0 0
      %534 = vmatmul.mubr.bf16.gmra.mrb[0].mxu0 %v385
      %v535 = vpop.f32.mrb[0].mxu0
      %v536 = vadd.f32 %v262, %v535
      %v537 = vpop.f32.mrb[0].mxu0
      %v538 = vpop.f32.mrb[0].mxu0
      %v539 = vadd.f32 %v262, %v538
      %v540 = vpop.f32.mrb[0].mxu0
      %541 = vmatprep.mubr.bf16.mxu0 0
      %542 = vmatmul.mubr.bf16.gmra.mrb[0].mxu0 %v388
      %v543 = vpop.f32.mrb[0].mxu0
      %v544 = vadd.f32 %v262, %v543
      %v545 = vpop.f32.mrb[0].mxu0
      %v546 = vpop.f32.mrb[0].mxu0
      %v547 = vadd.f32 %v262, %v546
      %v548 = vpop.f32.mrb[0].mxu0
      %549 = vmatprep.mubr.bf16.mxu0 0
      %550 = vmatmul.mubr.bf16.gmra.mrb[0].mxu0 %v391
      %v551 = vpop.f32.mrb[0].mxu0
      %v552 = vadd.f32 %v262, %v551
      %v553 = vpop.f32.mrb[0].mxu0
      %v554 = vpop.f32.mrb[0].mxu0
      %v555 = vadd.f32 %v262, %v554
      %v556 = vpop.f32.mrb[0].mxu0
      %557 = vdwg.mxu0
      %v558 = vld [vmem:[%s215] sm:$0xff]
      %v559 = vld [vmem:[%s215 + $0x8] sm:$0xff]
      %v560 = vld [vmem:[%s215 + $0x10] sm:$0xff]
      %v561 = vld [vmem:[%s215 + $0x18] sm:$0xff]
      %v562 = vld [vmem:[%s215 + $0x20] sm:$0xff]
      %v563 = vld [vmem:[%s215 + $0x28] sm:$0xff]
      %v564 = vld [vmem:[%s215 + $0x30] sm:$0xff]
      %v565 = vld [vmem:[%s215 + $0x38] sm:$0xff]
      %v566 = vld [vmem:[%s215 + $0x40] sm:$0xff]
      %v567 = vld [vmem:[%s215 + $0x48] sm:$0xff]
      %v568 = vld [vmem:[%s215 + $0x50] sm:$0xff]
      %v569 = vld [vmem:[%s215 + $0x58] sm:$0xff]
      %v570 = vld [vmem:[%s215 + $0x60] sm:$0xff]
      %v571 = vld [vmem:[%s215 + $0x68] sm:$0xff]
      %v572 = vld [vmem:[%s215 + $0x70] sm:$0xff]
      %v573 = vld [vmem:[%s215 + $0x78] sm:$0xff]
      %v574 = vld [vmem:[%s215 + $0x80] sm:$0xff]
      %v575 = vld [vmem:[%s215 + $0x88] sm:$0xff]
      %v576 = vld [vmem:[%s215 + $0x90] sm:$0xff]
      %v577 = vld [vmem:[%s215 + $0x98] sm:$0xff]
      %v578 = vld [vmem:[%s215 + $0xa0] sm:$0xff]
      %v579 = vld [vmem:[%s215 + $0xa8] sm:$0xff]
      %v580 = vld [vmem:[%s215 + $0xb0] sm:$0xff]
      %v581 = vld [vmem:[%s215 + $0xb8] sm:$0xff]
      %v582 = vld [vmem:[%s215 + $0xc0] sm:$0xff]
      %v583 = vld [vmem:[%s215 + $0xc8] sm:$0xff]
      %v584 = vld [vmem:[%s215 + $0xd0] sm:$0xff]
      %v585 = vld [vmem:[%s215 + $0xd8] sm:$0xff]
      %v586 = vld [vmem:[%s215 + $0xe0] sm:$0xff]
      %v587 = vld [vmem:[%s215 + $0xe8] sm:$0xff]
      %v588 = vld [vmem:[%s215 + $0xf0] sm:$0xff]
      %v589 = vld [vmem:[%s215 + $0xf8] sm:$0xff]
      %v590 = vadd.f32 %v432, %v558
      %v591 = vadd.f32 %v435, %v559
      %v592 = vadd.f32 %v440, %v560
      %v593 = vadd.f32 %v443, %v561
      %v594 = vadd.f32 %v448, %v562
      %v595 = vadd.f32 %v451, %v563
      %v596 = vadd.f32 %v456, %v564
      %v597 = vadd.f32 %v459, %v565
      %v598 = vadd.f32 %v464, %v566
      %v599 = vadd.f32 %v467, %v567
      %v600 = vadd.f32 %v472, %v568
      %v601 = vadd.f32 %v475, %v569
      %v602 = vadd.f32 %v480, %v570
      %v603 = vadd.f32 %v483, %v571
      %v604 = vadd.f32 %v488, %v572
      %v605 = vadd.f32 %v491, %v573
      %v606 = vadd.f32 %v496, %v574
      %v607 = vadd.f32 %v499, %v575
      %v608 = vadd.f32 %v504, %v576
      %v609 = vadd.f32 %v507, %v577
      %v610 = vadd.f32 %v512, %v578
      %v611 = vadd.f32 %v515, %v579
      %v612 = vadd.f32 %v520, %v580
      %v613 = vadd.f32 %v523, %v581
      %v614 = vadd.f32 %v528, %v582
      %v615 = vadd.f32 %v531, %v583
      %v616 = vadd.f32 %v536, %v584
      %v617 = vadd.f32 %v539, %v585
      %v618 = vadd.f32 %v544, %v586
      %v619 = vadd.f32 %v547, %v587
      %v620 = vadd.f32 %v552, %v588
      %v621 = vadd.f32 %v555, %v589
      %v622 = vmax.f32 %v590, 0.0
      %v623 = vmax.f32 %v591, 0.0
      %v624 = vmax.f32 %v592, 0.0
      %v625 = vmax.f32 %v593, 0.0
      %v626 = vmax.f32 %v594, 0.0
      %v627 = vmax.f32 %v595, 0.0
      %v628 = vmax.f32 %v596, 0.0
      %v629 = vmax.f32 %v597, 0.0
      %v630 = vmax.f32 %v598, 0.0
      %v631 = vmax.f32 %v599, 0.0
      %v632 = vmax.f32 %v600, 0.0
      %v633 = vmax.f32 %v601, 0.0
      %v634 = vmax.f32 %v602, 0.0
      %v635 = vmax.f32 %v603, 0.0
      %v636 = vmax.f32 %v604, 0.0
      %v637 = vmax.f32 %v605, 0.0
      %v638 = vmax.f32 %v606, 0.0
      %v639 = vmax.f32 %v607, 0.0
      %v640 = vmax.f32 %v608, 0.0
      %v641 = vmax.f32 %v609, 0.0
      %v642 = vmax.f32 %v610, 0.0
      %v643 = vmax.f32 %v611, 0.0
      %v644 = vmax.f32 %v612, 0.0
      %v645 = vmax.f32 %v613, 0.0
      %v646 = vmax.f32 %v614, 0.0
      %v647 = vmax.f32 %v615, 0.0
      %v648 = vmax.f32 %v616, 0.0
      %v649 = vmax.f32 %v617, 0.0
      %v650 = vmax.f32 %v618, 0.0
      %v651 = vmax.f32 %v619, 0.0
      %v652 = vmax.f32 %v620, 0.0
      %v653 = vmax.f32 %v621, 0.0
      %vm654 = vcmask 130048
      %655 = vst.msk [vmem:[%s221] sm:$0xff] %vm654, %v622
      %656 = vst.msk [vmem:[%s221 + $0x8] sm:$0xff] %vm654, %v623
      %657 = vst.msk [vmem:[%s221 + $0x10] sm:$0xff] %vm654, %v624
      %658 = vst.msk [vmem:[%s221 + $0x18] sm:$0xff] %vm654, %v625
      %659 = vst.msk [vmem:[%s221 + $0x20] sm:$0xff] %vm654, %v626
      %660 = vst.msk [vmem:[%s221 + $0x28] sm:$0xff] %vm654, %v627
      %661 = vst.msk [vmem:[%s221 + $0x30] sm:$0xff] %vm654, %v628
      %662 = vst.msk [vmem:[%s221 + $0x38] sm:$0xff] %vm654, %v629
      %663 = vst.msk [vmem:[%s221 + $0x40] sm:$0xff] %vm654, %v630
      %664 = vst.msk [vmem:[%s221 + $0x48] sm:$0xff] %vm654, %v631
      %665 = vst.msk [vmem:[%s221 + $0x50] sm:$0xff] %vm654, %v632
      %666 = vst.msk [vmem:[%s221 + $0x58] sm:$0xff] %vm654, %v633
      %667 = vst.msk [vmem:[%s221 + $0x60] sm:$0xff] %vm654, %v634
      %668 = vst.msk [vmem:[%s221 + $0x68] sm:$0xff] %vm654, %v635
      %669 = vst.msk [vmem:[%s221 + $0x70] sm:$0xff] %vm654, %v636
      %670 = vst.msk [vmem:[%s221 + $0x78] sm:$0xff] %vm654, %v637
      %671 = vst.msk [vmem:[%s221 + $0x80] sm:$0xff] %vm654, %v638
      %672 = vst.msk [vmem:[%s221 + $0x88] sm:$0xff] %vm654, %v639
      %673 = vst.msk [vmem:[%s221 + $0x90] sm:$0xff] %vm654, %v640
      %674 = vst.msk [vmem:[%s221 + $0x98] sm:$0xff] %vm654, %v641
      %675 = vst.msk [vmem:[%s221 + $0xa0] sm:$0xff] %vm654, %v642
      %676 = vst.msk [vmem:[%s221 + $0xa8] sm:$0xff] %vm654, %v643
      %677 = vst.msk [vmem:[%s221 + $0xb0] sm:$0xff] %vm654, %v644
      %678 = vst.msk [vmem:[%s221 + $0xb8] sm:$0xff] %vm654, %v645
      %679 = vst.msk [vmem:[%s221 + $0xc0] sm:$0xff] %vm654, %v646
      %680 = vst.msk [vmem:[%s221 + $0xc8] sm:$0xff] %vm654, %v647
      %681 = vst.msk [vmem:[%s221 + $0xd0] sm:$0xff] %vm654, %v648
      %682 = vst.msk [vmem:[%s221 + $0xd8] sm:$0xff] %vm654, %v649
      %683 = vst.msk [vmem:[%s221 + $0xe0] sm:$0xff] %vm654, %v650
      %684 = vst.msk [vmem:[%s221 + $0xe8] sm:$0xff] %vm654, %v651
      %685 = vst.msk [vmem:[%s221 + $0xf0] sm:$0xff] %vm654, %v652
      %686 = vst.msk [vmem:[%s221 + $0xf8] sm:$0xff] %vm654, %v653
      %s687 = smul.u32 32, %s15
      %p688 = scmp.lt.s32.totalorder %s687, 63
      %s689 = scalar_select %p688, %s687, 63
      %s690 = smul.addr %s689, 8
      %s691 = scalar_lea.vmem %s4, %s690
      // Predicated region
      $region37: #{bottleneck_forward.5} parent=35 // pred_check
        %p692 = pneg %p127
      $region38: #{bottleneck_forward.5} parent=35 // pred_check_branch
        %694 = sbr.rel (%p692) target = $region40
      $region39: #{bottleneck_forward.5} parent=35 // pred_region
        %s695 = smul.u32 32, %s15
      $region40: #{bottleneck_forward.5} parent=35 // pred_fallthru
        _
    $region36: #{bottleneck_forward.5} parent=5 // pred_fallthru
      _
    %p696 = scmp.le.s32.totalorder 2, %s10
    // Predicated region
    $region41: #{bottleneck_forward.5} parent=5 // pred_check
      %p697 = pneg %p696
    $region42: #{bottleneck_forward.5} parent=5 // pred_check_branch
      %699 = sbr.rel (%p697) target = $region44
    $region43: #{bottleneck_forward.5} parent=5 // pred_region
      %s700 = ssub.s32 %s10, 2
      // Predicated region
      $region45: #{bottleneck_forward.5} parent=43 // pred_check
        %p701 = pneg %p133
      $region46: #{bottleneck_forward.5} parent=43 // pred_check_branch
        %703 = sbr.rel (%p701) target = $region48
      $region47: #{bottleneck_forward.5} parent=43 // pred_region
        %s704 = smul.u32 32, %s16
        %p705 = scmp.lt.s32.totalorder %s704, 63
        %s706 = scalar_select %p705, %s704, 63
        %s707 = smul.addr %s706, 8
        %s708 = scalar_lea.vmem %s4, %s707
      $region48: #{bottleneck_forward.5} parent=43 // pred_fallthru
        _
    $region44: #{bottleneck_forward.5} parent=5 // pred_fallthru
      _
  $region6: #{bottleneck_forward.5} parent=0 // loop_footer
    %s14 = sadd.s32 1, %s10
  $region7: #{bottleneck_forward.5} parent=0 // loop_footer_branch
    %9 = sbr.rel target = $region3
  $region8: #{bottleneck_forward.5} parent=0 // loop_exit
    _

// kernel: bottleneck_forward.4
$region0: #{bottleneck_forward.4}
  #allocation0 [shape = 'u32[]', space=smem, size = 0x4, offset = 0x4, fixed_abs, tag = 'smem constant byte address 0x4 - core index']
  #allocation1 [shape = 'u32[144,128]{1,0:T(1,128)}', space=vmem, size = 0x12000, scoped, tag = 'internal scratch']
  %s0 = inlined_call_operand.vmem [shape: bf16[2,18,18,4], index: 0, kind: input, shape index: {}]
  %s1 = inlined_call_operand.vmem [shape: bf16[3,3,4,4], index: 1, kind: input, shape index: {}]
  %s2 = inlined_call_operand.vmem [shape: f32[1,4], index: 2, kind: input, shape index: {}]
  %s3 = inlined_call_operand.vmem [shape: bf16[2,16,16,4], index: 3, kind: output, shape index: {}]
  %s4 = sld [smem:[#allocation0]]
  $region45: #{bottleneck_forward.4} parent=0
    _
  %s6 = ssub.s32 1, %s4
  %s7 = scalar_select 0, %s6, %s4
  loop: start=0, step=1, limit=4
  $region2: #{bottleneck_forward.4} parent=0 // loop_pre_header
    _
  $region3: #{bottleneck_forward.4} parent=0 // loop_header
    %s9 = sphi 0, %s13
    %p10 = scmp.ge.s32.totalorder %s9, 4
    %s19 = sphi 0, %s21
    %s22 = sphi 0, %s19
    %s23 = sphi 0, %s22
    %s39 = sphi 0, %s23
    %s43 = sphi 0, %s43
    %s45 = sphi 0, %s43
    %s46 = sphi 0, %s45
    %s60 = sphi 0, %s46
    %s64 = sphi 0, %s64
    %s66 = sphi 0, %s64
    %s67 = sphi 0, %s66
    %s81 = sphi 0, %s67
    %s87 = sphi 0, %s89
    %s90 = sphi 0, %s87
    %s91 = sphi 0, %s90
    %s107 = sphi 0, %s91
  $region4: #{bottleneck_forward.4} parent=0 // loop_header_branch
    %12 = sbr.rel (%p10) target = $region8
  $region5: #{bottleneck_forward.4} parent=0 // loop_body
    %s14 = ssub.s32 %s9, 1
    %s15 = ssub.s32 %s9, 2
    %s16 = sadd.s32 %s9, 1
    %s17 = ssub.s32 %s9, %s16
    %p18 = scmp.eq.s32.totalorder %s17, 0
    %s20 = sadd.s32 %s19, 1
    %s21 = scalar_select %p18, %s19, %s20
    %p24 = pneg %p18
    %p25 = scmp.eq.s32.totalorder %s9, 1
    %p26 = por %p24, %p25
    %p27 = scmp.ne.s32.totalorder %s19, %s22
    %p28 = scmp.eq.s32.totalorder %s9, 0
    %p29 = por %p27, %p28
    %p30 = scmp.ne.s32.totalorder %s19, %s22
    %p31 = scmp.eq.s32.totalorder %s14, 1
    %p32 = por %p30, %p31
    %p33 = scmp.ne.s32.totalorder %s22, %s23
    %p34 = scmp.eq.s32.totalorder %s14, 0
    %p35 = por %p33, %p34
    %p36 = scmp.ne.s32.totalorder %s22, %s23
    %p37 = scmp.eq.s32.totalorder %s15, 1
    %p38 = por %p36, %p37
    %p40 = scmp.ne.s32.totalorder %s23, %s39
    %p41 = scmp.eq.s32.totalorder %s15, 0
    %p42 = por %p40, %p41
    %s44 = sadd.s32 %s43, 1
    %p47 = scmp.eq.s32.totalorder %s9, 1
    %p48 = scmp.ne.s32.totalorder %s43, %s45
    %p49 = scmp.eq.s32.totalorder %s9, 0
    %p50 = por %p48, %p49
    %p51 = scmp.ne.s32.totalorder %s43, %s45
    %p52 = scmp.eq.s32.totalorder %s14, 1
    %p53 = por %p51, %p52
    %p54 = scmp.ne.s32.totalorder %s45, %s46
    %p55 = scmp.eq.s32.totalorder %s14, 0
    %p56 = por %p54, %p55
    %p57 = scmp.ne.s32.totalorder %s45, %s46
    %p58 = scmp.eq.s32.totalorder %s15, 1
    %p59 = por %p57, %p58
    %p61 = scmp.ne.s32.totalorder %s46, %s60
    %p62 = scmp.eq.s32.totalorder %s15, 0
    %p63 = por %p61, %p62
    %s65 = sadd.s32 %s64, 1
    %p68 = scmp.eq.s32.totalorder %s9, 1
    %p69 = scmp.ne.s32.totalorder %s64, %s66
    %p70 = scmp.eq.s32.totalorder %s9, 0
    %p71 = por %p69, %p70
    %p72 = scmp.ne.s32.totalorder %s64, %s66
    %p73 = scmp.eq.s32.totalorder %s14, 1
    %p74 = por %p72, %p73
    %p75 = scmp.ne.s32.totalorder %s66, %s67
    %p76 = scmp.eq.s32.totalorder %s14, 0
    %p77 = por %p75, %p76
    %p78 = scmp.ne.s32.totalorder %s66, %s67
    %p79 = scmp.eq.s32.totalorder %s15, 1
    %p80 = por %p78, %p79
    %p82 = scmp.ne.s32.totalorder %s67, %s81
    %p83 = scmp.eq.s32.totalorder %s15, 0
    %p84 = por %p82, %p83
    %s85 = ssub.s32 %s9, %s16
    %p86 = scmp.eq.s32.totalorder %s85, 0
    %s88 = sadd.s32 %s87, 1
    %s89 = scalar_select %p86, %s87, %s88
    %p92 = pneg %p86
    %p93 = scmp.eq.s32.totalorder %s9, 1
    %p94 = por %p92, %p93
    %p95 = scmp.ne.s32.totalorder %s87, %s90
    %p96 = scmp.eq.s32.totalorder %s9, 0
    %p97 = por %p95, %p96
    %p98 = scmp.ne.s32.totalorder %s87, %s90
    %p99 = scmp.eq.s32.totalorder %s14, 1
    %p100 = por %p98, %p99
    %p101 = scmp.ne.s32.totalorder %s90, %s91
    %p102 = scmp.eq.s32.totalorder %s14, 0
    %p103 = por %p101, %p102
    %p104 = scmp.ne.s32.totalorder %s90, %s91
    %p105 = scmp.eq.s32.totalorder %s15, 1
    %p106 = por %p104, %p105
    %p108 = scmp.ne.s32.totalorder %s91, %s107
    %p109 = scmp.eq.s32.totalorder %s15, 0
    %p110 = por %p108, %p109
    %p111 = scmp.le.s32.totalorder 1, %s9
    %p112 = scmp.lt.s32.totalorder %s9, 3
    %p113 = pnand %p111, %p112
    %p114 = pneg %p113
    // Predicated region
    $region9: #{bottleneck_forward.4} parent=5 // pred_check
      _
    $region10: #{bottleneck_forward.4} parent=5 // pred_check_branch
      %116 = sbr.rel (%p113) target = $region12
    $region11: #{bottleneck_forward.4} parent=5 // pred_region
      %s117 = ssub.s32 %s9, 1
      // Predicated region
      $region13: #{bottleneck_forward.4} parent=11 // pred_check
        %p118 = pneg %p56
      $region14: #{bottleneck_forward.4} parent=11 // pred_check_branch
        %120 = sbr.rel (%p118) target = $region16
      $region15: #{bottleneck_forward.4} parent=11 // pred_region
        _
      $region16: #{bottleneck_forward.4} parent=11 // pred_fallthru
        _
      // Predicated region
      $region17: #{bottleneck_forward.4} parent=11 // pred_check
        %p121 = pneg %p77
      $region18: #{bottleneck_forward.4} parent=11 // pred_check_branch
        %123 = sbr.rel (%p121) target = $region20
      $region19: #{bottleneck_forward.4} parent=11 // pred_region
        _
      $region20: #{bottleneck_forward.4} parent=11 // pred_fallthru
        _
    $region12: #{bottleneck_forward.4} parent=5 // pred_fallthru
      _
    %p124 = scmp.lt.s32.totalorder %s9, 2
    // Predicated region
    $region21: #{bottleneck_forward.4} parent=5 // pred_check
      %p125 = pneg %p124
    $region22: #{bottleneck_forward.4} parent=5 // pred_check_branch
      %127 = sbr.rel (%p125) target = $region24
    $region23: #{bottleneck_forward.4} parent=5 // pred_region
      // Predicated region
      $region25: #{bottleneck_forward.4} parent=23 // pred_check
        %p128 = pneg %p29
      $region26: #{bottleneck_forward.4} parent=23 // pred_check_branch
        %130 = sbr.rel (%p128) target = $region28
      $region27: #{bottleneck_forward.4} parent=23 // pred_region
        %p131 = scmp.lt.s32.totalorder %s9, 1
        %s132 = scalar_select %p131, %s9, 1
        %s133 = smul.addr %s132, 54
        %s134 = smul.addr %s133, 4
        %s135 = scalar_lea.vmem %s0, %s134
      $region28: #{bottleneck_forward.4} parent=23 // pred_fallthru
        _
    $region24: #{bottleneck_forward.4} parent=5 // pred_fallthru
      _
    %p136 = scmp.le.s32.totalorder 1, %s9
    %p137 = scmp.lt.s32.totalorder %s9, 3
    %p138 = pnand %p136, %p137
    %p139 = pneg %p138
    // Predicated region
    $region29: #{bottleneck_forward.4} parent=5 // pred_check
      _
    $region30: #{bottleneck_forward.4} parent=5 // pred_check_branch
      %141 = sbr.rel (%p138) target = $region32
    $region31: #{bottleneck_forward.4} parent=5 // pred_region
      %s142 = ssub.s32 %s9, 1
      %p143 = scmp.lt.s32.totalorder %s14, 1
      %s144 = scalar_select %p143, %s14, 1
      %s145 = smul.addr %s144, 54
      %s146 = smul.addr %s145, 4
      %s147 = scalar_lea.vmem %s0, %s146
      %p148 = pneg %p35
      %p149 = pneg %p32
      %p150 = pneg %p56
      %p151 = pneg %p53
      %p152 = pneg %p77
      %p153 = pneg %p74
      %p154 = pneg %p103
      %p155 = pneg %p100
      %p156 = scmp.lt.s32.totalorder %s14, 1
      %s157 = scalar_select %p156, %s14, 1
      %s158 = smul.addr %s157, 32
      %s159 = smul.addr %s158, 4
      %s160 = scalar_lea.vmem %s3, %s159
      %p161 = scmp.lt.s32.totalorder %s14, 1
      %s162 = scalar_select %p161, %s14, 1
      %s163 = smul.addr %s162, 54
      %s164 = smul.addr %s163, 4
      %s165 = scalar_lea.vmem %s0, %s164
      %p166 = scmp.lt.s32.totalorder %s14, 1
      %s167 = scalar_select %p166, %s14, 1
      %s168 = smul.addr %s167, 32
      %s169 = smul.addr %s168, 4
      %s170 = scalar_lea.vmem %s3, %s169
      %v172 = vld [vmem:[%s165] sm:$0xf]
      %v173 = vld [vmem:[%s165 + $0x4] sm:$0xf]
      %v174 = vld [vmem:[%s165 + $0xc] sm:$0xf]
      %v175 = vld [vmem:[%s165 + $0x10] sm:$0xf]
      %v176 = vld [vmem:[%s165 + $0x18] sm:$0xf]
      %v177 = vld [vmem:[%s165 + $0x1c] sm:$0xf]
      %v178 = vld [vmem:[%s165 + $0x24] sm:$0xf]
      %v179 = vld [vmem:[%s165 + $0x28] sm:$0xf]
      %v180 = vld [vmem:[%s165 + $0x30] sm:$0xf]
      %v181 = vld [vmem:[%s165 + $0x34] sm:$0xf]
      %v182 = vld [vmem:[%s165 + $0x3c] sm:$0xf]
      %v183 = vld [vmem:[%s165 + $0x40] sm:$0xf]
      %v184 = vld [vmem:[%s165 + $0x48] sm:$0xf]
      %v185 = vld [vmem:[%s165 + $0x4c] sm:$0xf]
      %v186 = vld [vmem:[%s165 + $0x54] sm:$0xf]
      %v187 = vld [vmem:[%s165 + $0x58] sm:$0xf]
      %v188 = vld [vmem:[%s165 + $0x60] sm:$0xf]
      %v189 = vld [vmem:[%s165 + $0x64] sm:$0xf]
      %v190 = vld [vmem:[%s165 + $0x6c] sm:$0xf]
      %v191 = vld [vmem:[%s165 + $0x70] sm:$0xf]
      %v192 = vld [vmem:[%s165 + $0x78] sm:$0xf]
      %v193 = vld [vmem:[%s165 + $0x7c] sm:$0xf]
      %v194 = vld [vmem:[%s165 + $0x84] sm:$0xf]
      %v195 = vld [vmem:[%s165 + $0x88] sm:$0xf]
      %v196 = vld [vmem:[%s165 + $0x90] sm:$0xf]
      %v197 = vld [vmem:[%s165 + $0x94] sm:$0xf]
      %v198 = vld [vmem:[%s165 + $0x9c] sm:$0xf]
      %v199 = vld [vmem:[%s165 + $0xa0] sm:$0xf]
      %v200 = vld [vmem:[%s165 + $0xa8] sm:$0xf]
      %v201 = vld [vmem:[%s165 + $0xac] sm:$0xf]
      %v202 = vld [vmem:[%s165 + $0xb4] sm:$0xf]
      %v203 = vld [vmem:[%s165 + $0xb8] sm:$0xf]
      %v204 = vunpack.c.l.bf16 %v172
      %v205 = vunpack.c.l.bf16 %v173
      %v206 = vunpack.c.l.bf16 %v174
      %v207 = vunpack.c.l.bf16 %v175
      %v208 = vunpack.c.l.bf16 %v176
      %v209 = vunpack.c.l.bf16 %v177
      %v210 = vunpack.c.l.bf16 %v178
      %v211 = vunpack.c.l.bf16 %v179
      %v212 = vunpack.c.l.bf16 %v180
      %v213 = vunpack.c.l.bf16 %v181
      %v214 = vunpack.c.l.bf16 %v182
      %v215 = vunpack.c.l.bf16 %v183
      %v216 = vunpack.c.l.bf16 %v184
      %v217 = vunpack.c.l.bf16 %v185
      %v218 = vunpack.c.l.bf16 %v186
      %v219 = vunpack.c.l.bf16 %v187
      %v220 = vunpack.c.l.bf16 %v188
      %v221 = vunpack.c.l.bf16 %v189
      %v222 = vunpack.c.l.bf16 %v190
      %v223 = vunpack.c.l.bf16 %v191
      %v224 = vunpack.c.l.bf16 %v192
      %v225 = vunpack.c.l.bf16 %v193
      %v226 = vunpack.c.l.bf16 %v194
      %v227 = vunpack.c.l.bf16 %v195
      %v228 = vunpack.c.l.bf16 %v196
      %v229 = vunpack.c.l.bf16 %v197
      %v230 = vunpack.c.l.bf16 %v198
      %v231 = vunpack.c.l.bf16 %v199
      %v232 = vunpack.c.l.bf16 %v200
      %v233 = vunpack.c.l.bf16 %v201
      %v234 = vunpack.c.l.bf16 %v202
      %v235 = vunpack.c.l.bf16 %v203
      %v236 = vpack.c.bf16 %v205, %v204
      %v237 = vpack.c.bf16 %v207, %v206
      %v238 = vpack.c.bf16 %v209, %v208
      %v239 = vpack.c.bf16 %v211, %v210
      %v240 = vpack.c.bf16 %v213, %v212
      %v241 = vpack.c.bf16 %v215, %v214
      %v242 = vpack.c.bf16 %v217, %v216
      %v243 = vpack.c.bf16 %v219, %v218
      %v244 = vpack.c.bf16 %v221, %v220
      %v245 = vpack.c.bf16 %v223, %v222
      %v246 = vpack.c.bf16 %v225, %v224
      %v247 = vpack.c.bf16 %v227, %v226
      %v248 = vpack.c.bf16 %v229, %v228
      %v249 = vpack.c.bf16 %v231, %v230
      %v250 = vpack.c.bf16 %v233, %v232
      %v251 = vpack.c.bf16 %v235, %v234
      %v252 = vld [vmem:[%s1] sm:$0x3]
      %v253 = vld [vmem:[%s165 + $0x8] sm:$0x1]
      %v254 = vld [vmem:[%s165 + $0x14] sm:$0x1]
      %v255 = vld [vmem:[%s165 + $0x20] sm:$0x1]
      %v256 = vld [vmem:[%s165 + $0x2c] sm:$0x1]
      %v257 = vld [vmem:[%s165 + $0x38] sm:$0x1]
      %v258 = vld [vmem:[%s165 + $0x44] sm:$0x1]
      %v259 = vld [vmem:[%s165 + $0x50] sm:$0x1]
      %v260 = vld [vmem:[%s165 + $0x5c] sm:$0x1]
      %v261 = vld [vmem:[%s165 + $0x68] sm:$0x1]
      %v262 = vld [vmem:[%s165 + $0x74] sm:$0x1]
      %v263 = vld [vmem:[%s165 + $0x80] sm:$0x1]
      %v264 = vld [vmem:[%s165 + $0x8c] sm:$0x1]
      %v265 = vld [vmem:[%s165 + $0x98] sm:$0x1]
      %v266 = vld [vmem:[%s165 + $0xa4] sm:$0x1]
      %v267 = vld [vmem:[%s165 + $0xb0] sm:$0x1]
      %v268 = vld [vmem:[%s165 + $0xbc] sm:$0x1]
      %v269 = vunpack.c.l.bf16 %v253
      %v270 = vunpack.c.l.bf16 %v254
      %v271 = vunpack.c.l.bf16 %v255
      %v272 = vunpack.c.l.bf16 %v256
      %v273 = vunpack.c.l.bf16 %v257
      %v274 = vunpack.c.l.bf16 %v258
      %v275 = vunpack.c.l.bf16 %v259
      %v276 = vunpack.c.l.bf16 %v260
      %v277 = vunpack.c.l.bf16 %v261
      %v278 = vunpack.c.l.bf16 %v262
      %v279 = vunpack.c.l.bf16 %v263
      %v280 = vunpack.c.l.bf16 %v264
      %v281 = vunpack.c.l.bf16 %v265
      %v282 = vunpack.c.l.bf16 %v266
      %v283 = vunpack.c.l.bf16 %v267
      %v284 = vunpack.c.l.bf16 %v268
      %vm333 = vcmask 1046528
      %v334 = vrot.slane %v204, 1
      %v335 = vrot.slane %v205, 1
      %v336 = vsel %vm333, %v334, %v335
      %v337 = vrot.slane %v269, 1
      %v338 = vsel %vm333, %v335, %v337
      %v339 = vrot.slane %v206, 1
      %v340 = vrot.slane %v207, 1
      %v341 = vsel %vm333, %v339, %v340
      %v342 = vrot.slane %v270, 1
      %v343 = vsel %vm333, %v340, %v342
      %v344 = vrot.slane %v208, 1
      %v345 = vrot.slane %v209, 1
      %v346 = vsel %vm333, %v344, %v345
      %v347 = vrot.slane %v271, 1
      %v348 = vsel %vm333, %v345, %v347
      %v349 = vrot.slane %v210, 1
      %v350 = vrot.slane %v211, 1
      %v351 = vsel %vm333, %v349, %v350
      %v352 = vrot.slane %v272, 1
      %v353 = vsel %vm333, %v350, %v352
      %v354 = vrot.slane %v212, 1
      %v355 = vrot.slane %v213, 1
      %v356 = vsel %vm333, %v354, %v355
      %v357 = vrot.slane %v273, 1
      %v358 = vsel %vm333, %v355, %v357
      %v359 = vrot.slane %v214, 1
      %v360 = vrot.slane %v215, 1
      %v361 = vsel %vm333, %v359, %v360
      %v362 = vrot.slane %v274, 1
      %v363 = vsel %vm333, %v360, %v362
      %v364 = vrot.slane %v216, 1
      %v365 = vrot.slane %v217, 1
      %v366 = vsel %vm333, %v364, %v365
      %v367 = vrot.slane %v275, 1
      %v368 = vsel %vm333, %v365, %v367
      %v369 = vrot.slane %v218, 1
      %v370 = vrot.slane %v219, 1
      %v371 = vsel %vm333, %v369, %v370
      %v372 = vrot.slane %v276, 1
      %v373 = vsel %vm333, %v370, %v372
      %v374 = vrot.slane %v220, 1
      %v375 = vrot.slane %v221, 1
      %v376 = vsel %vm333, %v374, %v375
      %v377 = vrot.slane %v277, 1
      %v378 = vsel %vm333, %v375, %v377
      %v379 = vrot.slane %v222, 1
      %v380 = vrot.slane %v223, 1
      %v381 = vsel %vm333, %v379, %v380
      %v382 = vrot.slane %v278, 1
      %v383 = vsel %vm333, %v380, %v382
      %v384 = vrot.slane %v224, 1
      %v385 = vrot.slane %v225, 1
      %v386 = vsel %vm333, %v384, %v385
      %v387 = vrot.slane %v279, 1
      %v388 = vsel %vm333, %v385, %v387
      %v389 = vrot.slane %v226, 1
      %v390 = vrot.slane %v227, 1
      %v391 = vsel %vm333, %v389, %v390
      %v392 = vrot.slane %v280, 1
      %v393 = vsel %vm333, %v390, %v392
      %v394 = vrot.slane %v228, 1
      %v395 = vrot.slane %v229, 1
      %v396 = vsel %vm333, %v394, %v395
      %v397 = vrot.slane %v281, 1
      %v398 = vsel %vm333, %v395, %v397
      %v399 = vrot.slane %v230, 1
      %v400 = vrot.slane %v231, 1
      %v401 = vsel %vm333, %v399, %v400
      %v402 = vrot.slane %v282, 1
      %v403 = vsel %vm333, %v400, %v402
      %v404 = vrot.slane %v232, 1
      %v405 = vrot.slane %v233, 1
      %v406 = vsel %vm333, %v404, %v405
      %v407 = vrot.slane %v283, 1
      %v408 = vsel %vm333, %v405, %v407
      %v409 = vrot.slane %v234, 1
      %v410 = vrot.slane %v235, 1
      %v411 = vsel %vm333, %v409, %v410
      %v412 = vrot.slane %v284, 1
      %v413 = vsel %vm333, %v410, %v412
      %v446 = vpack.c.bf16 %v338, %v336
      %v447 = vpack.c.bf16 %v343, %v341
      %v448 = vpack.c.bf16 %v348, %v346
      %v449 = vpack.c.bf16 %v353, %v351
      %v450 = vpack.c.bf16 %v358, %v356
      %v451 = vpack.c.bf16 %v363, %v361
      %v452 = vpack.c.bf16 %v368, %v366
      %v453 = vpack.c.bf16 %v373, %v371
      %v454 = vpack.c.bf16 %v378, %v376
      %v455 = vpack.c.bf16 %v383, %v381
      %v456 = vpack.c.bf16 %v388, %v386
      %v457 = vpack.c.bf16 %v393, %v391
      %v458 = vpack.c.bf16 %v398, %v396
      %v459 = vpack.c.bf16 %v403, %v401
      %v460 = vpack.c.bf16 %v408, %v406
      %v461 = vpack.c.bf16 %v413, %v411
      %s462 = scalar_lea.vmem %s1, 2
      %v463 = vld [vmem:[%s462] sm:$0x3]
      %vm464 = vcmask 31744
      %v466 = vsel %vm464, %v446, 0
      %v469 = vsel %vm464, %v447, 0
      %v472 = vsel %vm464, %v448, 0
      %v475 = vsel %vm464, %v449, 0
      %v478 = vsel %vm464, %v450, 0
      %v481 = vsel %vm464, %v451, 0
      %v484 = vsel %vm464, %v452, 0
      %v487 = vsel %vm464, %v453, 0
      %v490 = vsel %vm464, %v454, 0
      %v493 = vsel %vm464, %v455, 0
      %v496 = vsel %vm464, %v456, 0
      %v499 = vsel %vm464, %v457, 0
      %v502 = vsel %vm464, %v458, 0
      %v505 = vsel %vm464, %v459, 0
      %v508 = vsel %vm464, %v460, 0
      %v511 = vsel %vm464, %v461, 0
      %vm513 = vcmask 1041408
      %v515 = vsel %vm513, %v463, 0
      %517 = vmatprep.subr.bf16.mxu0 0
      %518 = vmatpush1.bf16.msra.mxu0 %v515
      %519 = vmatprep.subr.bf16.mxu0 0
      %520 = vmatpush1.bf16.msra.mxu0 0
      %521 = vmatprep.subr.bf16.mxu0 0
      %522 = vmatpush1.bf16.msra.mxu0 0
      %523 = vmatprep.subr.bf16.mxu0 0
      %524 = vmatpush1.bf16.msra.mxu0 0
      %525 = vmatprep.subr.bf16.mxu0 0
      %526 = vmatpush1.bf16.msra.mxu0 0
      %527 = vmatprep.subr.bf16.mxu0 0
      %528 = vmatpush1.bf16.msra.mxu0 0
      %529 = vmatprep.subr.bf16.mxu0 0
      %530 = vmatpush1.bf16.msra.mxu0 0
      %531 = vmatprep.subr.bf16.mxu0 0
      %532 = vmatpush1.bf16.msra.mxu0 0
      %533 = vmatprep.subr.bf16.mxu0 0
      %534 = vmatpush1.bf16.msra.mxu0 0
      %535 = vmatprep.subr.bf16.mxu0 0
      %536 = vmatpush1.bf16.msra.mxu0 0
      %537 = vmatprep.subr.bf16.mxu0 0
      %538 = vmatpush1.bf16.msra.mxu0 0
      %539 = vmatprep.subr.bf16.mxu0 0
      %540 = vmatpush1.bf16.msra.mxu0 0
      %541 = vmatprep.subr.bf16.mxu0 0
      %542 = vmatpush1.bf16.msra.mxu0 0
      %543 = vmatprep.subr.bf16.mxu0 0
      %544 = vmatpush1.bf16.msra.mxu0 0
      %545 = vmatprep.subr.bf16.mxu0 0
      %546 = vmatpush1.bf16.msra.mxu0 0
      %547 = vmatprep.subr.bf16.mxu0 0
      %548 = vmatpush1.bf16.msra.mxu0 0
      %549 = vmatprep.mubr.bf16.mxu0 0
      %550 = vmatmul.mubr.bf16.gmra.mrb[0].mxu0 %v466
      %v551 = vpop.f32.mrb[0].mxu0
      %v552 = vadd.f32 0.0, %v551
      %v553 = vpop.f32.mrb[0].mxu0
      %v554 = vpop.f32.mrb[0].mxu0
      %v555 = vadd.f32 0.0, %v554
      %v556 = vpop.f32.mrb[0].mxu0
      %557 = vmatprep.mubr.bf16.mxu0 0
      %558 = vmatmul.mubr.bf16.gmra.mrb[0].mxu0 %v469
      %v559 = vpop.f32.mrb[0].mxu0
      %v560 = vadd.f32 0.0, %v559
      %v561 = vpop.f32.mrb[0].mxu0
      %v562 = vpop.f32.mrb[0].mxu0
      %v563 = vadd.f32 0.0, %v562
      %v564 = vpop.f32.mrb[0].mxu0
      %565 = vmatprep.mubr.bf16.mxu0 0
      %566 = vmatmul.mubr.bf16.gmra.mrb[0].mxu0 %v472
      %v567 = vpop.f32.mrb[0].mxu0
      %v568 = vadd.f32 0.0, %v567
      %v569 = vpop.f32.mrb[0].mxu0
      %v570 = vpop.f32.mrb[0].mxu0
      %v571 = vadd.f32 0.0, %v570
      %v572 = vpop.f32.mrb[0].mxu0
      %573 = vmatprep.mubr.bf16.mxu0 0
      %574 = vmatmul.mubr.bf16.gmra.mrb[0].mxu0 %v475
      %v575 = vpop.f32.mrb[0].mxu0
      %v576 = vadd.f32 0.0, %v575
      %v577 = vpop.f32.mrb[0].mxu0
      %v578 = vpop.f32.mrb[0].mxu0
      %v579 = vadd.f32 0.0, %v578
      %v580 = vpop.f32.mrb[0].mxu0
      %581 = vmatprep.mubr.bf16.mxu0 0
      %582 = vmatmul.mubr.bf16.gmra.mrb[0].mxu0 %v478
      %v583 = vpop.f32.mrb[0].mxu0
      %v584 = vadd.f32 0.0, %v583
      %v585 = vpop.f32.mrb[0].mxu0
      %v586 = vpop.f32.mrb[0].mxu0
      %v587 = vadd.f32 0.0, %v586
      %v588 = vpop.f32.mrb[0].mxu0
      %589 = vmatprep.mubr.bf16.mxu0 0
      %590 = vmatmul.mubr.bf16.gmra.mrb[0].mxu0 %v481
      %v591 = vpop.f32.mrb[0].mxu0
      %v592 = vadd.f32 0.0, %v591
      %v593 = vpop.f32.mrb[0].mxu0
      %v594 = vpop.f32.mrb[0].mxu0
      %v595 = vadd.f32 0.0, %v594
      %v596 = vpop.f32.mrb[0].mxu0
      %597 = vmatprep.mubr.bf16.mxu0 0
      %598 = vmatmul.mubr.bf16.gmra.mrb[0].mxu0 %v484
      %v599 = vpop.f32.mrb[0].mxu0
      %v600 = vadd.f32 0.0, %v599
      %v601 = vpop.f32.mrb[0].mxu0
      %v602 = vpop.f32.mrb[0].mxu0
      %v603 = vadd.f32 0.0, %v602
      %v604 = vpop.f32.mrb[0].mxu0
      %605 = vmatprep.mubr.bf16.mxu0 0
      %606 = vmatmul.mubr.bf16.gmra.mrb[0].mxu0 %v487
      %v607 = vpop.f32.mrb[0].mxu0
      %v608 = vadd.f32 0.0, %v607
      %v609 = vpop.f32.mrb[0].mxu0
      %v610 = vpop.f32.mrb[0].mxu0
      %v611 = vadd.f32 0.0, %v610
      %v612 = vpop.f32.mrb[0].mxu0
      %613 = vmatprep.mubr.bf16.mxu0 0
      %614 = vmatmul.mubr.bf16.gmra.mrb[0].mxu0 %v490
      %v615 = vpop.f32.mrb[0].mxu0
      %v616 = vadd.f32 0.0, %v615
      %v617 = vpop.f32.mrb[0].mxu0
      %v618 = vpop.f32.mrb[0].mxu0
      %v619 = vadd.f32 0.0, %v618
      %v620 = vpop.f32.mrb[0].mxu0
      %621 = vmatprep.mubr.bf16.mxu0 0
      %622 = vmatmul.mubr.bf16.gmra.mrb[0].mxu0 %v493
      %v623 = vpop.f32.mrb[0].mxu0
      %v624 = vadd.f32 0.0, %v623
      %v625 = vpop.f32.mrb[0].mxu0
      %v626 = vpop.f32.mrb[0].mxu0
      %v627 = vadd.f32 0.0, %v626
      %v628 = vpop.f32.mrb[0].mxu0
      %629 = vmatprep.mubr.bf16.mxu0 0
      %630 = vmatmul.mubr.bf16.gmra.mrb[0].mxu0 %v496
      %v631 = vpop.f32.mrb[0].mxu0
      %v632 = vadd.f32 0.0, %v631
      %v633 = vpop.f32.mrb[0].mxu0
      %v634 = vpop.f32.mrb[0].mxu0
      %v635 = vadd.f32 0.0, %v634
      %v636 = vpop.f32.mrb[0].mxu0
      %637 = vmatprep.mubr.bf16.mxu0 0
      %638 = vmatmul.mubr.bf16.gmra.mrb[0].mxu0 %v499
      %v639 = vpop.f32.mrb[0].mxu0
      %v640 = vadd.f32 0.0, %v639
      %v641 = vpop.f32.mrb[0].mxu0
      %v642 = vpop.f32.mrb[0].mxu0
      %v643 = vadd.f32 0.0, %v642
      %v644 = vpop.f32.mrb[0].mxu0
      %645 = vmatprep.mubr.bf16.mxu0 0
      %646 = vmatmul.mubr.bf16.gmra.mrb[0].mxu0 %v502
      %v647 = vpop.f32.mrb[0].mxu0
      %v648 = vadd.f32 0.0, %v647
      %v649 = vpop.f32.mrb[0].mxu0
      %v650 = vpop.f32.mrb[0].mxu0
      %v651 = vadd.f32 0.0, %v650
      %v652 = vpop.f32.mrb[0].mxu0
      %653 = vmatprep.mubr.bf16.mxu0 0
      %654 = vmatmul.mubr.bf16.gmra.mrb[0].mxu0 %v505
      %v655 = vpop.f32.mrb[0].mxu0
      %v656 = vadd.f32 0.0, %v655
      %v657 = vpop.f32.mrb[0].mxu0
      %v658 = vpop.f32.mrb[0].mxu0
      %v659 = vadd.f32 0.0, %v658
      %v660 = vpop.f32.mrb[0].mxu0
      %661 = vmatprep.mubr.bf16.mxu0 0
      %662 = vmatmul.mubr.bf16.gmra.mrb[0].mxu0 %v508
      %v663 = vpop.f32.mrb[0].mxu0
      %v664 = vadd.f32 0.0, %v663
      %v665 = vpop.f32.mrb[0].mxu0
      %v666 = vpop.f32.mrb[0].mxu0
      %v667 = vadd.f32 0.0, %v666
      %v668 = vpop.f32.mrb[0].mxu0
      %669 = vmatprep.mubr.bf16.mxu0 0
      %670 = vmatmul.mubr.bf16.gmra.mrb[0].mxu0 %v511
      %v671 = vpop.f32.mrb[0].mxu0
      %v672 = vadd.f32 0.0, %v671
      %v673 = vpop.f32.mrb[0].mxu0
      %v674 = vpop.f32.mrb[0].mxu0
      %v675 = vadd.f32 0.0, %v674
      %v676 = vpop.f32.mrb[0].mxu0
      %677 = vdwg.mxu0
      %v679 = vsel %vm464, %v236, 0
      %v682 = vsel %vm464, %v237, 0
      %v685 = vsel %vm464, %v238, 0
      %v688 = vsel %vm464, %v239, 0
      %v691 = vsel %vm464, %v240, 0
      %v694 = vsel %vm464, %v241, 0
      %v697 = vsel %vm464, %v242, 0
      %v700 = vsel %vm464, %v243, 0
      %v703 = vsel %vm464, %v244, 0
      %v706 = vsel %vm464, %v245, 0
      %v709 = vsel %vm464, %v246, 0
      %v712 = vsel %vm464, %v247, 0
      %v715 = vsel %vm464, %v248, 0
      %v718 = vsel %vm464, %v249, 0
      %v721 = vsel %vm464, %v250, 0
      %v724 = vsel %vm464, %v251, 0
      %v727 = vsel %vm513, %v252, 0
      %729 = vmatprep.subr.bf16.mxu0 0
      %730 = vmatpush1.bf16.msra.mxu0 %v727
      %731 = vmatprep.subr.bf16.mxu0 0
      %732 = vmatpush1.bf16.msra.mxu0 0
      %733 = vmatprep.subr.bf16.mxu0 0
      %734 = vmatpush1.bf16.msra.mxu0 0
      %735 = vmatprep.subr.bf16.mxu0 0
      %736 = vmatpush1.bf16.msra.mxu0 0
      %737 = vmatprep.subr.bf16.mxu0 0
      %738 = vmatpush1.bf16.msra.mxu0 0
      %739 = vmatprep.subr.bf16.mxu0 0
      %740 = vmatpush1.bf16.msra.mxu0 0
      %741 = vmatprep.subr.bf16.mxu0 0
      %742 = vmatpush1.bf16.msra.mxu0 0
      %743 = vmatprep.subr.bf16.mxu0 0
      %744 = vmatpush1.bf16.msra.mxu0 0
      %745 = vmatprep.subr.bf16.mxu0 0
      %746 = vmatpush1.bf16.msra.mxu0 0
      %747 = vmatprep.subr.bf16.mxu0 0
      %748 = vmatpush1.bf16.msra.mxu0 0
      %749 = vmatprep.subr.bf16.mxu0 0
      %750 = vmatpush1.bf16.msra.mxu0 0
      %751 = vmatprep.subr.bf16.mxu0 0
      %752 = vmatpush1.bf16.msra.mxu0 0
      %753 = vmatprep.subr.bf16.mxu0 0
      %754 = vmatpush1.bf16.msra.mxu0 0
      %755 = vmatprep.subr.bf16.mxu0 0
      %756 = vmatpush1.bf16.msra.mxu0 0
      %757 = vmatprep.subr.bf16.mxu0 0
      %758 = vmatpush1.bf16.msra.mxu0 0
      %759 = vmatprep.subr.bf16.mxu0 0
      %760 = vmatpush1.bf16.msra.mxu0 0
      %761 = vmatprep.mubr.bf16.mxu0 0
      %762 = vmatmul.mubr.bf16.gmra.mrb[0].mxu0 %v679
      %v763 = vpop.f32.mrb[0].mxu0
      %v764 = vadd.f32 %v552, %v763
      %v765 = vpop.f32.mrb[0].mxu0
      %v766 = vpop.f32.mrb[0].mxu0
      %v767 = vadd.f32 %v555, %v766
      %v768 = vpop.f32.mrb[0].mxu0
      %769 = vmatprep.mubr.bf16.mxu0 0
      %770 = vmatmul.mubr.bf16.gmra.mrb[0].mxu0 %v682
      %v771 = vpop.f32.mrb[0].mxu0
      %v772 = vadd.f32 %v560, %v771
      %v773 = vpop.f32.mrb[0].mxu0
      %v774 = vpop.f32.mrb[0].mxu0
      %v775 = vadd.f32 %v563, %v774
      %v776 = vpop.f32.mrb[0].mxu0
      %777 = vmatprep.mubr.bf16.mxu0 0
      %778 = vmatmul.mubr.bf16.gmra.mrb[0].mxu0 %v685
      %v779 = vpop.f32.mrb[0].mxu0
      %v780 = vadd.f32 %v568, %v779
      %v781 = vpop.f32.mrb[0].mxu0
      %v782 = vpop.f32.mrb[0].mxu0
      %v783 = vadd.f32 %v571, %v782
      %v784 = vpop.f32.mrb[0].mxu0
      %785 = vmatprep.mubr.bf16.mxu0 0
      %786 = vmatmul.mubr.bf16.gmra.mrb[0].mxu0 %v688
      %v787 = vpop.f32.mrb[0].mxu0
      %v788 = vadd.f32 %v576, %v787
      %v789 = vpop.f32.mrb[0].mxu0
      %v790 = vpop.f32.mrb[0].mxu0
      %v791 = vadd.f32 %v579, %v790
      %v792 = vpop.f32.mrb[0].mxu0
      %793 = vmatprep.mubr.bf16.mxu0 0
      %794 = vmatmul.mubr.bf16.gmra.mrb[0].mxu0 %v691
      %v795 = vpop.f32.mrb[0].mxu0
      %v796 = vadd.f32 %v584, %v795
      %v797 = vpop.f32.mrb[0].mxu0
      %v798 = vpop.f32.mrb[0].mxu0
      %v799 = vadd.f32 %v587, %v798
      %v800 = vpop.f32.mrb[0].mxu0
      %801 = vmatprep.mubr.bf16.mxu0 0
      %802 = vmatmul.mubr.bf16.gmra.mrb[0].mxu0 %v694
      %v803 = vpop.f32.mrb[0].mxu0
      %v804 = vadd.f32 %v592, %v803
      %v805 = vpop.f32.mrb[0].mxu0
      %v806 = vpop.f32.mrb[0].mxu0
      %v807 = vadd.f32 %v595, %v806
      %v808 = vpop.f32.mrb[0].mxu0
      %809 = vmatprep.mubr.bf16.mxu0 0
      %810 = vmatmul.mubr.bf16.gmra.mrb[0].mxu0 %v697
      %v811 = vpop.f32.mrb[0].mxu0
      %v812 = vadd.f32 %v600, %v811
      %v813 = vpop.f32.mrb[0].mxu0
      %v814 = vpop.f32.mrb[0].mxu0
      %v815 = vadd.f32 %v603, %v814
      %v816 = vpop.f32.mrb[0].mxu0
      %817 = vmatprep.mubr.bf16.mxu0 0
      %818 = vmatmul.mubr.bf16.gmra.mrb[0].mxu0 %v700
      %v819 = vpop.f32.mrb[0].mxu0
      %v820 = vadd.f32 %v608, %v819
      %v821 = vpop.f32.mrb[0].mxu0
      %v822 = vpop.f32.mrb[0].mxu0
      %v823 = vadd.f32 %v611, %v822
      %v824 = vpop.f32.mrb[0].mxu0
      %825 = vmatprep.mubr.bf16.mxu0 0
      %826 = vmatmul.mubr.bf16.gmra.mrb[0].mxu0 %v703
      %v827 = vpop.f32.mrb[0].mxu0
      %v828 = vadd.f32 %v616, %v827
      %v829 = vpop.f32.mrb[0].mxu0
      %v830 = vpop.f32.mrb[0].mxu0
      %v831 = vadd.f32 %v619, %v830
      %v832 = vpop.f32.mrb[0].mxu0
      %833 = vmatprep.mubr.bf16.mxu0 0
      %834 = vmatmul.mubr.bf16.gmra.mrb[0].mxu0 %v706
      %v835 = vpop.f32.mrb[0].mxu0
      %v836 = vadd.f32 %v624, %v835
      %v837 = vpop.f32.mrb[0].mxu0
      %v838 = vpop.f32.mrb[0].mxu0
      %v839 = vadd.f32 %v627, %v838
      %v840 = vpop.f32.mrb[0].mxu0
      %841 = vmatprep.mubr.bf16.mxu0 0
      %842 = vmatmul.mubr.bf16.gmra.mrb[0].mxu0 %v709
      %v843 = vpop.f32.mrb[0].mxu0
      %v844 = vadd.f32 %v632, %v843
      %v845 = vpop.f32.mrb[0].mxu0
      %v846 = vpop.f32.mrb[0].mxu0
      %v847 = vadd.f32 %v635, %v846
      %v848 = vpop.f32.mrb[0].mxu0
      %849 = vmatprep.mubr.bf16.mxu0 0
      %850 = vmatmul.mubr.bf16.gmra.mrb[0].mxu0 %v712
      %v851 = vpop.f32.mrb[0].mxu0
      %v852 = vadd.f32 %v640, %v851
      %v853 = vpop.f32.mrb[0].mxu0
      %v854 = vpop.f32.mrb[0].mxu0
      %v855 = vadd.f32 %v643, %v854
      %v856 = vpop.f32.mrb[0].mxu0
      %857 = vmatprep.mubr.bf16.mxu0 0
      %858 = vmatmul.mubr.bf16.gmra.mrb[0].mxu0 %v715
      %v859 = vpop.f32.mrb[0].mxu0
      %v860 = vadd.f32 %v648, %v859
      %v861 = vpop.f32.mrb[0].mxu0
      %v862 = vpop.f32.mrb[0].mxu0
      %v863 = vadd.f32 %v651, %v862
      %v864 = vpop.f32.mrb[0].mxu0
      %865 = vmatprep.mubr.bf16.mxu0 0
      %866 = vmatmul.mubr.bf16.gmra.mrb[0].mxu0 %v718
      %v867 = vpop.f32.mrb[0].mxu0
      %v868 = vadd.f32 %v656, %v867
      %v869 = vpop.f32.mrb[0].mxu0
      %v870 = vpop.f32.mrb[0].mxu0
      %v871 = vadd.f32 %v659, %v870
      %v872 = vpop.f32.mrb[0].mxu0
      %873 = vmatprep.mubr.bf16.mxu0 0
      %874 = vmatmul.mubr.bf16.gmra.mrb[0].mxu0 %v721
      %v875 = vpop.f32.mrb[0].mxu0
      %v876 = vadd.f32 %v664, %v875
      %v877 = vpop.f32.mrb[0].mxu0
      %v878 = vpop.f32.mrb[0].mxu0
      %v879 = vadd.f32 %v667, %v878
      %v880 = vpop.f32.mrb[0].mxu0
      %881 = vmatprep.mubr.bf16.mxu0 0
      %882 = vmatmul.mubr.bf16.gmra.mrb[0].mxu0 %v724
      %v883 = vpop.f32.mrb[0].mxu0
      %v884 = vadd.f32 %v672, %v883
      %v885 = vpop.f32.mrb[0].mxu0
      %v886 = vpop.f32.mrb[0].mxu0
      %v887 = vadd.f32 %v675, %v886
      %v888 = vpop.f32.mrb[0].mxu0
      %889 = vdwg.mxu0
      %v890 = vld [vmem:[%s165] sm:$0xe]
      %v891 = vld [vmem:[%s165 + $0xc] sm:$0xe]
      %v892 = vld [vmem:[%s165 + $0x18] sm:$0xe]
      %v893 = vld [vmem:[%s165 + $0x24] sm:$0xe]
      %v894 = vld [vmem:[%s165 + $0x30] sm:$0xe]
      %v895 = vld [vmem:[%s165 + $0x3c] sm:$0xe]
      %v896 = vld [vmem:[%s165 + $0x48] sm:$0xe]
      %v897 = vld [vmem:[%s165 + $0x54] sm:$0xe]
      %v898 = vld [vmem:[%s165 + $0x60] sm:$0xe]
      %v899 = vld [vmem:[%s165 + $0x6c] sm:$0xe]
      %v900 = vld [vmem:[%s165 + $0x78] sm:$0xe]
      %v901 = vld [vmem:[%s165 + $0x84] sm:$0xe]
      %v902 = vld [vmem:[%s165 + $0x90] sm:$0xe]
      %v903 = vld [vmem:[%s165 + $0x9c] sm:$0xe]
      %v904 = vld [vmem:[%s165 + $0xa8] sm:$0xe]
      %v905 = vld [vmem:[%s165 + $0xb4] sm:$0xe]
      %v906 = vunpack.c.l.bf16 %v890
      %v907 = vunpack.c.l.bf16 %v891
      %v908 = vunpack.c.l.bf16 %v892
      %v909 = vunpack.c.l.bf16 %v893
      %v910 = vunpack.c.l.bf16 %v894
      %v911 = vunpack.c.l.bf16 %v895
      %v912 = vunpack.c.l.bf16 %v896
      %v913 = vunpack.c.l.bf16 %v897
      %v914 = vunpack.c.l.bf16 %v898
      %v915 = vunpack.c.l.bf16 %v899
      %v916 = vunpack.c.l.bf16 %v900
      %v917 = vunpack.c.l.bf16 %v901
      %v918 = vunpack.c.l.bf16 %v902
      %v919 = vunpack.c.l.bf16 %v903
      %v920 = vunpack.c.l.bf16 %v904
      %v921 = vunpack.c.l.bf16 %v905
      %vm938 = vcmask 1045504
      %v939 = vrot.slane %v906, 2
      %v940 = vrot.slane %v205, 2
      %v941 = vsel %vm938, %v939, %v940
      %v942 = vrot.slane %v269, 2
      %v943 = vsel %vm938, %v940, %v942
      %v944 = vrot.slane %v907, 2
      %v945 = vrot.slane %v207, 2
      %v946 = vsel %vm938, %v944, %v945
      %v947 = vrot.slane %v270, 2
      %v948 = vsel %vm938, %v945, %v947
      %v949 = vrot.slane %v908, 2
      %v950 = vrot.slane %v209, 2
      %v951 = vsel %vm938, %v949, %v950
      %v952 = vrot.slane %v271, 2
      %v953 = vsel %vm938, %v950, %v952
      %v954 = vrot.slane %v909, 2
      %v955 = vrot.slane %v211, 2
      %v956 = vsel %vm938, %v954, %v955
      %v957 = vrot.slane %v272, 2
      %v958 = vsel %vm938, %v955, %v957
      %v959 = vrot.slane %v910, 2
      %v960 = vrot.slane %v213, 2
      %v961 = vsel %vm938, %v959, %v960
      %v962 = vrot.slane %v273, 2
      %v963 = vsel %vm938, %v960, %v962
      %v964 = vrot.slane %v911, 2
      %v965 = vrot.slane %v215, 2
      %v966 = vsel %vm938, %v964, %v965
      %v967 = vrot.slane %v274, 2
      %v968 = vsel %vm938, %v965, %v967
      %v969 = vrot.slane %v912, 2
      %v970 = vrot.slane %v217, 2
      %v971 = vsel %vm938, %v969, %v970
      %v972 = vrot.slane %v275, 2
      %v973 = vsel %vm938, %v970, %v972
      %v974 = vrot.slane %v913, 2
      %v975 = vrot.slane %v219, 2
      %v976 = vsel %vm938, %v974, %v975
      %v977 = vrot.slane %v276, 2
      %v978 = vsel %vm938, %v975, %v977
      %v979 = vrot.slane %v914, 2
      %v980 = vrot.slane %v221, 2
      %v981 = vsel %vm938, %v979, %v980
      %v982 = vrot.slane %v277, 2
      %v983 = vsel %vm938, %v980, %v982
      %v984 = vrot.slane %v915, 2
      %v985 = vrot.slane %v223, 2
      %v986 = vsel %vm938, %v984, %v985
      %v987 = vrot.slane %v278, 2
      %v988 = vsel %vm938, %v985, %v987
      %v989 = vrot.slane %v916, 2
      %v990 = vrot.slane %v225, 2
      %v991 = vsel %vm938, %v989, %v990
      %v992 = vrot.slane %v279, 2
      %v993 = vsel %vm938, %v990, %v992
      %v994 = vrot.slane %v917, 2
      %v995 = vrot.slane %v227, 2
      %v996 = vsel %vm938, %v994, %v995
      %v997 = vrot.slane %v280, 2
      %v998 = vsel %vm938, %v995, %v997
      %v999 = vrot.slane %v918, 2
      %v1000 = vrot.slane %v229, 2
      %v1001 = vsel %vm938, %v999, %v1000
      %v1002 = vrot.slane %v281, 2
      %v1003 = vsel %vm938, %v1000, %v1002
      %v1004 = vrot.slane %v919, 2
      %v1005 = vrot.slane %v231, 2
      %v1006 = vsel %vm938, %v1004, %v1005
      %v1007 = vrot.slane %v282, 2
      %v1008 = vsel %vm938, %v1005, %v1007
      %v1009 = vrot.slane %v920, 2
      %v1010 = vrot.slane %v233, 2
      %v1011 = vsel %vm938, %v1009, %v1010
      %v1012 = vrot.slane %v283, 2
      %v1013 = vsel %vm938, %v1010, %v1012
      %v1014 = vrot.slane %v921, 2
      %v1015 = vrot.slane %v235, 2
      %v1016 = vsel %vm938, %v1014, %v1015
      %v1017 = vrot.slane %v284, 2
      %v1018 = vsel %vm938, %v1015, %v1017
      %v1051 = vpack.c.bf16 %v943, %v941
      %v1052 = vpack.c.bf16 %v948, %v946
      %v1053 = vpack.c.bf16 %v953, %v951
      %v1054 = vpack.c.bf16 %v958, %v956
      %v1055 = vpack.c.bf16 %v963, %v961
      %v1056 = vpack.c.bf16 %v968, %v966
      %v1057 = vpack.c.bf16 %v973, %v971
      %v1058 = vpack.c.bf16 %v978, %v976
      %v1059 = vpack.c.bf16 %v983, %v981
      %v1060 = vpack.c.bf16 %v988, %v986
      %v1061 = vpack.c.bf16 %v993, %v991
      %v1062 = vpack.c.bf16 %v998, %v996
      %v1063 = vpack.c.bf16 %v1003, %v1001
      %v1064 = vpack.c.bf16 %v1008, %v1006
      %v1065 = vpack.c.bf16 %v1013, %v1011
      %v1066 = vpack.c.bf16 %v1018, %v1016
      %s1067 = scalar_lea.vmem %s1, 4
      %v1068 = vld [vmem:[%s1067] sm:$0x3]
      %v1070 = vsel %vm464, %v1051, 0
      %v1073 = vsel %vm464, %v1052, 0
      %v1076 = vsel %vm464, %v1053, 0
      %v1079 = vsel %vm464, %v1054, 0
      %v1082 = vsel %vm464, %v1055, 0
      %v1085 = vsel %vm464, %v1056, 0
      %v1088 = vsel %vm464, %v1057, 0
      %v1091 = vsel %vm464, %v1058, 0
      %v1094 = vsel %vm464, %v1059, 0
      %v1097 = vsel %vm464, %v1060, 0
      %v1100 = vsel %vm464, %v1061, 0
      %v1103 = vsel %vm464, %v1062, 0
      %v1106 = vsel %vm464, %v1063, 0
      %v1109 = vsel %vm464, %v1064, 0
      %v1112 = vsel %vm464, %v1065, 0
      %v1115 = vsel %vm464, %v1066, 0
      %v1118 = vsel %vm513, %v1068, 0
      %1120 = vmatprep.subr.bf16.mxu0 0
      %1121 = vmatpush1.bf16.msra.mxu0 %v1118
      %1122 = vmatprep.subr.bf16.mxu0 0
      %1123 = vmatpush1.bf16.msra.mxu0 0
      %1124 = vmatprep.subr.bf16.mxu0 0
      %1125 = vmatpush1.bf16.msra.mxu0 0
      %1126 = vmatprep.subr.bf16.mxu0 0
      %1127 = vmatpush1.bf16.msra.mxu0 0
      %1128 = vmatprep.subr.bf16.mxu0 0
      %1129 = vmatpush1.bf16.msra.mxu0 0
      %1130 = vmatprep.subr.bf16.mxu0 0
      %1131 = vmatpush1.bf16.msra.mxu0 0
      %1132 = vmatprep.subr.bf16.mxu0 0
      %1133 = vmatpush1.bf16.msra.mxu0 0
      %1134 = vmatprep.subr.bf16.mxu0 0
      %1135 = vmatpush1.bf16.msra.mxu0 0
      %1136 = vmatprep.subr.bf16.mxu0 0
      %1137 = vmatpush1.bf16.msra.mxu0 0
      %1138 = vmatprep.subr.bf16.mxu0 0
      %1139 = vmatpush1.bf16.msra.mxu0 0
      %1140 = vmatprep.subr.bf16.mxu0 0
      %1141 = vmatpush1.bf16.msra.mxu0 0
      %1142 = vmatprep.subr.bf16.mxu0 0
      %1143 = vmatpush1.bf16.msra.mxu0 0
      %1144 = vmatprep.subr.bf16.mxu0 0
      %1145 = vmatpush1.bf16.msra.mxu0 0
      %1146 = vmatprep.subr.bf16.mxu0 0
      %1147 = vmatpush1.bf16.msra.mxu0 0
      %1148 = vmatprep.subr.bf16.mxu0 0
      %1149 = vmatpush1.bf16.msra.mxu0 0
      %1150 = vmatprep.subr.bf16.mxu0 0
      %1151 = vmatpush1.bf16.msra.mxu0 0
      %1152 = vmatprep.mubr.bf16.mxu0 0
      %1153 = vmatmul.mubr.bf16.gmra.mrb[0].mxu0 %v1070
      %v1154 = vpop.f32.mrb[0].mxu0
      %v1155 = vadd.f32 0.0, %v1154
      %v1156 = vpop.f32.mrb[0].mxu0
      %v1157 = vpop.f32.mrb[0].mxu0
      %v1158 = vadd.f32 0.0, %v1157
      %v1159 = vpop.f32.mrb[0].mxu0
      %1160 = vmatprep.mubr.bf16.mxu0 0
      %1161 = vmatmul.mubr.bf16.gmra.mrb[0].mxu0 %v1073
      %v1162 = vpop.f32.mrb[0].mxu0
      %v1163 = vadd.f32 0.0, %v1162
      %v1164 = vpop.f32.mrb[0].mxu0
      %v1165 = vpop.f32.mrb[0].mxu0
      %v1166 = vadd.f32 0.0, %v1165
      %v1167 = vpop.f32.mrb[0].mxu0
      %1168 = vmatprep.mubr.bf16.mxu0 0
      %1169 = vmatmul.mubr.bf16.gmra.mrb[0].mxu0 %v1076
      %v1170 = vpop.f32.mrb[0].mxu0
      %v1171 = vadd.f32 0.0, %v1170
      %v1172 = vpop.f32.mrb[0].mxu0
      %v1173 = vpop.f32.mrb[0].mxu0
      %v1174 = vadd.f32 0.0, %v1173
      %v1175 = vpop.f32.mrb[0].mxu0
      %1176 = vmatprep.mubr.bf16.mxu0 0
      %1177 = vmatmul.mubr.bf16.gmra.mrb[0].mxu0 %v1079
      %v1178 = vpop.f32.mrb[0].mxu0
      %v1179 = vadd.f32 0.0, %v1178
      %v1180 = vpop.f32.mrb[0].mxu0
      %v1181 = vpop.f32.mrb[0].mxu0
      %v1182 = vadd.f32 0.0, %v1181
      %v1183 = vpop.f32.mrb[0].mxu0
      %1184 = vmatprep.mubr.bf16.mxu0 0
      %1185 = vmatmul.mubr.bf16.gmra.mrb[0].mxu0 %v1082
      %v1186 = vpop.f32.mrb[0].mxu0
      %v1187 = vadd.f32 0.0, %v1186
      %v1188 = vpop.f32.mrb[0].mxu0
      %v1189 = vpop.f32.mrb[0].mxu0
      %v1190 = vadd.f32 0.0, %v1189
      %v1191 = vpop.f32.mrb[0].mxu0
      %1192 = vmatprep.mubr.bf16.mxu0 0
      %1193 = vmatmul.mubr.bf16.gmra.mrb[0].mxu0 %v1085
      %v1194 = vpop.f32.mrb[0].mxu0
      %v1195 = vadd.f32 0.0, %v1194
      %v1196 = vpop.f32.mrb[0].mxu0
      %v1197 = vpop.f32.mrb[0].mxu0
      %v1198 = vadd.f32 0.0, %v1197
      %v1199 = vpop.f32.mrb[0].mxu0
      %1200 = vmatprep.mubr.bf16.mxu0 0
      %1201 = vmatmul.mubr.bf16.gmra.mrb[0].mxu0 %v1088
      %v1202 = vpop.f32.mrb[0].mxu0
      %v1203 = vadd.f32 0.0, %v1202
      %v1204 = vpop.f32.mrb[0].mxu0
      %v1205 = vpop.f32.mrb[0].mxu0
      %v1206 = vadd.f32 0.0, %v1205
      %v1207 = vpop.f32.mrb[0].mxu0
      %1208 = vmatprep.mubr.bf16.mxu0 0
      %1209 = vmatmul.mubr.bf16.gmra.mrb[0].mxu0 %v1091
      %v1210 = vpop.f32.mrb[0].mxu0
      %v1211 = vadd.f32 0.0, %v1210
      %v1212 = vpop.f32.mrb[0].mxu0
      %v1213 = vpop.f32.mrb[0].mxu0
      %v1214 = vadd.f32 0.0, %v1213
      %v1215 = vpop.f32.mrb[0].mxu0
      %1216 = vmatprep.mubr.bf16.mxu0 0
      %1217 = vmatmul.mubr.bf16.gmra.mrb[0].mxu0 %v1094
      %v1218 = vpop.f32.mrb[0].mxu0
      %v1219 = vadd.f32 0.0, %v1218
      %v1220 = vpop.f32.mrb[0].mxu0
      %v1221 = vpop.f32.mrb[0].mxu0
      %v1222 = vadd.f32 0.0, %v1221
      %v1223 = vpop.f32.mrb[0].mxu0
      %1224 = vmatprep.mubr.bf16.mxu0 0
      %1225 = vmatmul.mubr.bf16.gmra.mrb[0].mxu0 %v1097
      %v1226 = vpop.f32.mrb[0].mxu0
      %v1227 = vadd.f32 0.0, %v1226
      %v1228 = vpop.f32.mrb[0].mxu0
      %v1229 = vpop.f32.mrb[0].mxu0
      %v1230 = vadd.f32 0.0, %v1229
      %v1231 = vpop.f32.mrb[0].mxu0
      %1232 = vmatprep.mubr.bf16.mxu0 0
      %1233 = vmatmul.mubr.bf16.gmra.mrb[0].mxu0 %v1100
      %v1234 = vpop.f32.mrb[0].mxu0
      %v1235 = vadd.f32 0.0, %v1234
      %v1236 = vpop.f32.mrb[0].mxu0
      %v1237 = vpop.f32.mrb[0].mxu0
      %v1238 = vadd.f32 0.0, %v1237
      %v1239 = vpop.f32.mrb[0].mxu0
      %1240 = vmatprep.mubr.bf16.mxu0 0
      %1241 = vmatmul.mubr.bf16.gmra.mrb[0].mxu0 %v1103
      %v1242 = vpop.f32.mrb[0].mxu0
      %v1243 = vadd.f32 0.0, %v1242
      %v1244 = vpop.f32.mrb[0].mxu0
      %v1245 = vpop.f32.mrb[0].mxu0
      %v1246 = vadd.f32 0.0, %v1245
      %v1247 = vpop.f32.mrb[0].mxu0
      %1248 = vmatprep.mubr.bf16.mxu0 0
      %1249 = vmatmul.mubr.bf16.gmra.mrb[0].mxu0 %v1106
      %v1250 = vpop.f32.mrb[0].mxu0
      %v1251 = vadd.f32 0.0, %v1250
      %v1252 = vpop.f32.mrb[0].mxu0
      %v1253 = vpop.f32.mrb[0].mxu0
      %v1254 = vadd.f32 0.0, %v1253
      %v1255 = vpop.f32.mrb[0].mxu0
      %1256 = vmatprep.mubr.bf16.mxu0 0
      %1257 = vmatmul.mubr.bf16.gmra.mrb[0].mxu0 %v1109
      %v1258 = vpop.f32.mrb[0].mxu0
      %v1259 = vadd.f32 0.0, %v1258
      %v1260 = vpop.f32.mrb[0].mxu0
      %v1261 = vpop.f32.mrb[0].mxu0
      %v1262 = vadd.f32 0.0, %v1261
      %v1263 = vpop.f32.mrb[0].mxu0
      %1264 = vmatprep.mubr.bf16.mxu0 0
      %1265 = vmatmul.mubr.bf16.gmra.mrb[0].mxu0 %v1112
      %v1266 = vpop.f32.mrb[0].mxu0
      %v1267 = vadd.f32 0.0, %v1266
      %v1268 = vpop.f32.mrb[0].mxu0
      %v1269 = vpop.f32.mrb[0].mxu0
      %v1270 = vadd.f32 0.0, %v1269
      %v1271 = vpop.f32.mrb[0].mxu0
      %1272 = vmatprep.mubr.bf16.mxu0 0
      %1273 = vmatmul.mubr.bf16.gmra.mrb[0].mxu0 %v1115
      %v1274 = vpop.f32.mrb[0].mxu0
      %v1275 = vadd.f32 0.0, %v1274
      %v1276 = vpop.f32.mrb[0].mxu0
      %v1277 = vpop.f32.mrb[0].mxu0
      %v1278 = vadd.f32 0.0, %v1277
      %v1279 = vpop.f32.mrb[0].mxu0
      %1280 = vdwg.mxu0
      %v1281 = vadd.f32 %v764, %v1155
      %v1282 = vadd.f32 %v767, %v1158
      %v1283 = vadd.f32 %v772, %v1163
      %v1284 = vadd.f32 %v775, %v1166
      %v1285 = vadd.f32 %v780, %v1171
      %v1286 = vadd.f32 %v783, %v1174
      %v1287 = vadd.f32 %v788, %v1179
      %v1288 = vadd.f32 %v791, %v1182
      %v1289 = vadd.f32 %v796, %v1187
      %v1290 = vadd.f32 %v799, %v1190
      %v1291 = vadd.f32 %v804, %v1195
      %v1292 = vadd.f32 %v807, %v1198
      %v1293 = vadd.f32 %v812, %v1203
      %v1294 = vadd.f32 %v815, %v1206
      %v1295 = vadd.f32 %v820, %v1211
      %v1296 = vadd.f32 %v823, %v1214
      %v1297 = vadd.f32 %v828, %v1219
      %v1298 = vadd.f32 %v831, %v1222
      %v1299 = vadd.f32 %v836, %v1227
      %v1300 = vadd.f32 %v839, %v1230
      %v1301 = vadd.f32 %v844, %v1235
      %v1302 = vadd.f32 %v847, %v1238
      %v1303 = vadd.f32 %v852, %v1243
      %v1304 = vadd.f32 %v855, %v1246
      %v1305 = vadd.f32 %v860, %v1251
      %v1306 = vadd.f32 %v863, %v1254
      %v1307 = vadd.f32 %v868, %v1259
      %v1308 = vadd.f32 %v871, %v1262
      %v1309 = vadd.f32 %v876, %v1267
      %v1310 = vadd.f32 %v879, %v1270
      %v1311 = vadd.f32 %v884, %v1275
      %v1312 = vadd.f32 %v887, %v1278
      %s1313 = scalar_lea.vmem %s165, 12
      %v1314 = vld [vmem:[%s1313] sm:$0xf]
      %v1315 = vld [vmem:[%s1313 + $0x4] sm:$0xf]
      %v1316 = vld [vmem:[%s1313 + $0xc] sm:$0xf]
      %v1317 = vld [vmem:[%s1313 + $0x10] sm:$0xf]
      %v1318 = vld [vmem:[%s1313 + $0x18] sm:$0xf]
      %v1319 = vld [vmem:[%s1313 + $0x1c] sm:$0xf]
      %v1320 = vld [vmem:[%s1313 + $0x24] sm:$0xf]
      %v1321 = vld [vmem:[%s1313 + $0x28] sm:$0xf]
      %v1322 = vld [vmem:[%s1313 + $0x30] sm:$0xf]
      %v1323 = vld [vmem:[%s1313 + $0x34] sm:$0xf]
      %v1324 = vld [vmem:[%s1313 + $0x3c] sm:$0xf]
      %v1325 = vld [vmem:[%s1313 + $0x40] sm:$0xf]
      %v1326 = vld [vmem:[%s1313 + $0x48] sm:$0xf]
      %v1327 = vld [vmem:[%s1313 + $0x4c] sm:$0xf]
      %v1328 = vld [vmem:[%s1313 + $0x54] sm:$0xf]
      %v1329 = vld [vmem:[%s1313 + $0x58] sm:$0xf]
      %v1330 = vld [vmem:[%s1313 + $0x60] sm:$0xf]
      %v1331 = vld [vmem:[%s1313 + $0x64] sm:$0xf]
      %v1332 = vld [vmem:[%s1313 + $0x6c] sm:$0xf]
      %v1333 = vld [vmem:[%s1313 + $0x70] sm:$0xf]
      %v1334 = vld [vmem:[%s1313 + $0x78] sm:$0xf]
      %v1335 = vld [vmem:[%s1313 + $0x7c] sm:$0xf]
      %v1336 = vld [vmem:[%s1313 + $0x84] sm:$0xf]
      %v1337 = vld [vmem:[%s1313 + $0x88] sm:$0xf]
      %v1338 = vld [vmem:[%s1313 + $0x90] sm:$0xf]
      %v1339 = vld [vmem:[%s1313 + $0x94] sm:$0xf]
      %v1340 = vld [vmem:[%s1313 + $0x9c] sm:$0xf]
      %v1341 = vld [vmem:[%s1313 + $0xa0] sm:$0xf]
      %v1342 = vld [vmem:[%s1313 + $0xa8] sm:$0xf]
      %v1343 = vld [vmem:[%s1313 + $0xac] sm:$0xf]
      %v1344 = vld [vmem:[%s1313 + $0xb4] sm:$0xf]
      %v1345 = vld [vmem:[%s1313 + $0xb8] sm:$0xf]
      %v1346 = vunpack.c.l.bf16 %v1314
      %v1347 = vunpack.c.l.bf16 %v1315
      %v1348 = vunpack.c.l.bf16 %v1316
      %v1349 = vunpack.c.l.bf16 %v1317
      %v1350 = vunpack.c.l.bf16 %v1318
      %v1351 = vunpack.c.l.bf16 %v1319
      %v1352 = vunpack.c.l.bf16 %v1320
      %v1353 = vunpack.c.l.bf16 %v1321
      %v1354 = vunpack.c.l.bf16 %v1322
      %v1355 = vunpack.c.l.bf16 %v1323
      %v1356 = vunpack.c.l.bf16 %v1324
      %v1357 = vunpack.c.l.bf16 %v1325
      %v1358 = vunpack.c.l.bf16 %v1326
      %v1359 = vunpack.c.l.bf16 %v1327
      %v1360 = vunpack.c.l.bf16 %v1328
      %v1361 = vunpack.c.l.bf16 %v1329
      %v1362 = vunpack.c.l.bf16 %v1330
      %v1363 = vunpack.c.l.bf16 %v1331
      %v1364 = vunpack.c.l.bf16 %v1332
      %v1365 = vunpack.c.l.bf16 %v1333
      %v1366 = vunpack.c.l.bf16 %v1334
      %v1367 = vunpack.c.l.bf16 %v1335
      %v1368 = vunpack.c.l.bf16 %v1336
      %v1369 = vunpack.c.l.bf16 %v1337
      %v1370 = vunpack.c.l.bf16 %v1338
      %v1371 = vunpack.c.l.bf16 %v1339
      %v1372 = vunpack.c.l.bf16 %v1340
      %v1373 = vunpack.c.l.bf16 %v1341
      %v1374 = vunpack.c.l.bf16 %v1342
      %v1375 = vunpack.c.l.bf16 %v1343
      %v1376 = vunpack.c.l.bf16 %v1344
      %v1377 = vunpack.c.l.bf16 %v1345
      %v1378 = vpack.c.bf16 %v1347, %v1346
      %v1379 = vpack.c.bf16 %v1349, %v1348
      %v1380 = vpack.c.bf16 %v1351, %v1350
      %v1381 = vpack.c.bf16 %v1353, %v1352
      %v1382 = vpack.c.bf16 %v1355, %v1354
      %v1383 = vpack.c.bf16 %v1357, %v1356
      %v1384 = vpack.c.bf16 %v1359, %v1358
      %v1385 = vpack.c.bf16 %v1361, %v1360
      %v1386 = vpack.c.bf16 %v1363, %v1362
      %v1387 = vpack.c.bf16 %v1365, %v1364
      %v1388 = vpack.c.bf16 %v1367, %v1366
      %v1389 = vpack.c.bf16 %v1369, %v1368
      %v1390 = vpack.c.bf16 %v1371, %v1370
      %v1391 = vpack.c.bf16 %v1373, %v1372
      %v1392 = vpack.c.bf16 %v1375, %v1374
      %v1393 = vpack.c.bf16 %v1377, %v1376
      %s1394 = scalar_lea.vmem %s1, 6
      %v1395 = vld [vmem:[%s1394] sm:$0x3]
      %v1397 = vsel %vm464, %v1378, 0
      %v1400 = vsel %vm464, %v1379, 0
      %v1403 = vsel %vm464, %v1380, 0
      %v1406 = vsel %vm464, %v1381, 0
      %v1409 = vsel %vm464, %v1382, 0
      %v1412 = vsel %vm464, %v1383, 0
      %v1415 = vsel %vm464, %v1384, 0
      %v1418 = vsel %vm464, %v1385, 0
      %v1421 = vsel %vm464, %v1386, 0
      %v1424 = vsel %vm464, %v1387, 0
      %v1427 = vsel %vm464, %v1388, 0
      %v1430 = vsel %vm464, %v1389, 0
      %v1433 = vsel %vm464, %v1390, 0
      %v1436 = vsel %vm464, %v1391, 0
      %v1439 = vsel %vm464, %v1392, 0
      %v1442 = vsel %vm464, %v1393, 0
      %v1445 = vsel %vm513, %v1395, 0
      %1447 = vmatprep.subr.bf16.mxu0 0
      %1448 = vmatpush1.bf16.msra.mxu0 %v1445
      %1449 = vmatprep.subr.bf16.mxu0 0
      %1450 = vmatpush1.bf16.msra.mxu0 0
      %1451 = vmatprep.subr.bf16.mxu0 0
      %1452 = vmatpush1.bf16.msra.mxu0 0
      %1453 = vmatprep.subr.bf16.mxu0 0
      %1454 = vmatpush1.bf16.msra.mxu0 0
      %1455 = vmatprep.subr.bf16.mxu0 0
      %1456 = vmatpush1.bf16.msra.mxu0 0
      %1457 = vmatprep.subr.bf16.mxu0 0
      %1458 = vmatpush1.bf16.msra.mxu0 0
      %1459 = vmatprep.subr.bf16.mxu0 0
      %1460 = vmatpush1.bf16.msra.mxu0 0
      %1461 = vmatprep.subr.bf16.mxu0 0
      %1462 = vmatpush1.bf16.msra.mxu0 0
      %1463 = vmatprep.subr.bf16.mxu0 0
      %1464 = vmatpush1.bf16.msra.mxu0 0
      %1465 = vmatprep.subr.bf16.mxu0 0
      %1466 = vmatpush1.bf16.msra.mxu0 0
      %1467 = vmatprep.subr.bf16.mxu0 0
      %1468 = vmatpush1.bf16.msra.mxu0 0
      %1469 = vmatprep.subr.bf16.mxu0 0
      %1470 = vmatpush1.bf16.msra.mxu0 0
      %1471 = vmatprep.subr.bf16.mxu0 0
      %1472 = vmatpush1.bf16.msra.mxu0 0
      %1473 = vmatprep.subr.bf16.mxu0 0
      %1474 = vmatpush1.bf16.msra.mxu0 0
      %1475 = vmatprep.subr.bf16.mxu0 0
      %1476 = vmatpush1.bf16.msra.mxu0 0
      %1477 = vmatprep.subr.bf16.mxu0 0
      %1478 = vmatpush1.bf16.msra.mxu0 0
      %1479 = vmatprep.mubr.bf16.mxu0 0
      %1480 = vmatmul.mubr.bf16.gmra.mrb[0].mxu0 %v1397
      %v1481 = vpop.f32.mrb[0].mxu0
      %v1482 = vadd.f32 0.0, %v1481
      %v1483 = vpop.f32.mrb[0].mxu0
      %v1484 = vpop.f32.mrb[0].mxu0
      %v1485 = vadd.f32 0.0, %v1484
      %v1486 = vpop.f32.mrb[0].mxu0
      %1487 = vmatprep.mubr.bf16.mxu0 0
      %1488 = vmatmul.mubr.bf16.gmra.mrb[0].mxu0 %v1400
      %v1489 = vpop.f32.mrb[0].mxu0
      %v1490 = vadd.f32 0.0, %v1489
      %v1491 = vpop.f32.mrb[0].mxu0
      %v1492 = vpop.f32.mrb[0].mxu0
      %v1493 = vadd.f32 0.0, %v1492
      %v1494 = vpop.f32.mrb[0].mxu0
      %1495 = vmatprep.mubr.bf16.mxu0 0
      %1496 = vmatmul.mubr.bf16.gmra.mrb[0].mxu0 %v1403
      %v1497 = vpop.f32.mrb[0].mxu0
      %v1498 = vadd.f32 0.0, %v1497
      %v1499 = vpop.f32.mrb[0].mxu0
      %v1500 = vpop.f32.mrb[0].mxu0
      %v1501 = vadd.f32 0.0, %v1500
      %v1502 = vpop.f32.mrb[0].mxu0
      %1503 = vmatprep.mubr.bf16.mxu0 0
      %1504 = vmatmul.mubr.bf16.gmra.mrb[0].mxu0 %v1406
      %v1505 = vpop.f32.mrb[0].mxu0
      %v1506 = vadd.f32 0.0, %v1505
      %v1507 = vpop.f32.mrb[0].mxu0
      %v1508 = vpop.f32.mrb[0].mxu0
      %v1509 = vadd.f32 0.0, %v1508
      %v1510 = vpop.f32.mrb[0].mxu0
      %1511 = vmatprep.mubr.bf16.mxu0 0
      %1512 = vmatmul.mubr.bf16.gmra.mrb[0].mxu0 %v1409
      %v1513 = vpop.f32.mrb[0].mxu0
      %v1514 = vadd.f32 0.0, %v1513
      %v1515 = vpop.f32.mrb[0].mxu0
      %v1516 = vpop.f32.mrb[0].mxu0
      %v1517 = vadd.f32 0.0, %v1516
      %v1518 = vpop.f32.mrb[0].mxu0
      %1519 = vmatprep.mubr.bf16.mxu0 0
      %1520 = vmatmul.mubr.bf16.gmra.mrb[0].mxu0 %v1412
      %v1521 = vpop.f32.mrb[0].mxu0
      %v1522 = vadd.f32 0.0, %v1521
      %v1523 = vpop.f32.mrb[0].mxu0
      %v1524 = vpop.f32.mrb[0].mxu0
      %v1525 = vadd.f32 0.0, %v1524
      %v1526 = vpop.f32.mrb[0].mxu0
      %1527 = vmatprep.mubr.bf16.mxu0 0
      %1528 = vmatmul.mubr.bf16.gmra.mrb[0].mxu0 %v1415
      %v1529 = vpop.f32.mrb[0].mxu0
      %v1530 = vadd.f32 0.0, %v1529
      %v1531 = vpop.f32.mrb[0].mxu0
      %v1532 = vpop.f32.mrb[0].mxu0
      %v1533 = vadd.f32 0.0, %v1532
      %v1534 = vpop.f32.mrb[0].mxu0
      %1535 = vmatprep.mubr.bf16.mxu0 0
      %1536 = vmatmul.mubr.bf16.gmra.mrb[0].mxu0 %v1418
      %v1537 = vpop.f32.mrb[0].mxu0
      %v1538 = vadd.f32 0.0, %v1537
      %v1539 = vpop.f32.mrb[0].mxu0
      %v1540 = vpop.f32.mrb[0].mxu0
      %v1541 = vadd.f32 0.0, %v1540
      %v1542 = vpop.f32.mrb[0].mxu0
      %1543 = vmatprep.mubr.bf16.mxu0 0
      %1544 = vmatmul.mubr.bf16.gmra.mrb[0].mxu0 %v1421
      %v1545 = vpop.f32.mrb[0].mxu0
      %v1546 = vadd.f32 0.0, %v1545
      %v1547 = vpop.f32.mrb[0].mxu0
      %v1548 = vpop.f32.mrb[0].mxu0
      %v1549 = vadd.f32 0.0, %v1548
      %v1550 = vpop.f32.mrb[0].mxu0
      %1551 = vmatprep.mubr.bf16.mxu0 0
      %1552 = vmatmul.mubr.bf16.gmra.mrb[0].mxu0 %v1424
      %v1553 = vpop.f32.mrb[0].mxu0
      %v1554 = vadd.f32 0.0, %v1553
      %v1555 = vpop.f32.mrb[0].mxu0
      %v1556 = vpop.f32.mrb[0].mxu0
      %v1557 = vadd.f32 0.0, %v1556
      %v1558 = vpop.f32.mrb[0].mxu0
      %1559 = vmatprep.mubr.bf16.mxu0 0
      %1560 = vmatmul.mubr.bf16.gmra.mrb[0].mxu0 %v1427
      %v1561 = vpop.f32.mrb[0].mxu0
      %v1562 = vadd.f32 0.0, %v1561
      %v1563 = vpop.f32.mrb[0].mxu0
      %v1564 = vpop.f32.mrb[0].mxu0
      %v1565 = vadd.f32 0.0, %v1564
      %v1566 = vpop.f32.mrb[0].mxu0
      %1567 = vmatprep.mubr.bf16.mxu0 0
      %1568 = vmatmul.mubr.bf16.gmra.mrb[0].mxu0 %v1430
      %v1569 = vpop.f32.mrb[0].mxu0
      %v1570 = vadd.f32 0.0, %v1569
      %v1571 = vpop.f32.mrb[0].mxu0
      %v1572 = vpop.f32.mrb[0].mxu0
      %v1573 = vadd.f32 0.0, %v1572
      %v1574 = vpop.f32.mrb[0].mxu0
      %1575 = vmatprep.mubr.bf16.mxu0 0
      %1576 = vmatmul.mubr.bf16.gmra.mrb[0].mxu0 %v1433
      %v1577 = vpop.f32.mrb[0].mxu0
      %v1578 = vadd.f32 0.0, %v1577
      %v1579 = vpop.f32.mrb[0].mxu0
      %v1580 = vpop.f32.mrb[0].mxu0
      %v1581 = vadd.f32 0.0, %v1580
      %v1582 = vpop.f32.mrb[0].mxu0
      %1583 = vmatprep.mubr.bf16.mxu0 0
      %1584 = vmatmul.mubr.bf16.gmra.mrb[0].mxu0 %v1436
      %v1585 = vpop.f32.mrb[0].mxu0
      %v1586 = vadd.f32 0.0, %v1585
      %v1587 = vpop.f32.mrb[0].mxu0
      %v1588 = vpop.f32.mrb[0].mxu0
      %v1589 = vadd.f32 0.0, %v1588
      %v1590 = vpop.f32.mrb[0].mxu0
      %1591 = vmatprep.mubr.bf16.mxu0 0
      %1592 = vmatmul.mubr.bf16.gmra.mrb[0].mxu0 %v1439
      %v1593 = vpop.f32.mrb[0].mxu0
      %v1594 = vadd.f32 0.0, %v1593
      %v1595 = vpop.f32.mrb[0].mxu0
      %v1596 = vpop.f32.mrb[0].mxu0
      %v1597 = vadd.f32 0.0, %v1596
      %v1598 = vpop.f32.mrb[0].mxu0
      %1599 = vmatprep.mubr.bf16.mxu0 0
      %1600 = vmatmul.mubr.bf16.gmra.mrb[0].mxu0 %v1442
      %v1601 = vpop.f32.mrb[0].mxu0
      %v1602 = vadd.f32 0.0, %v1601
      %v1603 = vpop.f32.mrb[0].mxu0
      %v1604 = vpop.f32.mrb[0].mxu0
      %v1605 = vadd.f32 0.0, %v1604
      %v1606 = vpop.f32.mrb[0].mxu0
      %1607 = vdwg.mxu0
      %v1608 = vadd.f32 %v1281, %v1482
      %v1609 = vadd.f32 %v1282, %v1485
      %v1610 = vadd.f32 %v1283, %v1490
      %v1611 = vadd.f32 %v1284, %v1493
      %v1612 = vadd.f32 %v1285, %v1498
      %v1613 = vadd.f32 %v1286, %v1501
      %v1614 = vadd.f32 %v1287, %v1506
      %v1615 = vadd.f32 %v1288, %v1509
      %v1616 = vadd.f32 %v1289, %v1514
      %v1617 = vadd.f32 %v1290, %v1517
      %v1618 = vadd.f32 %v1291, %v1522
      %v1619 = vadd.f32 %v1292, %v1525
      %v1620 = vadd.f32 %v1293, %v1530
      %v1621 = vadd.f32 %v1294, %v1533
      %v1622 = vadd.f32 %v1295, %v1538
      %v1623 = vadd.f32 %v1296, %v1541
      %v1624 = vadd.f32 %v1297, %v1546
      %v1625 = vadd.f32 %v1298, %v1549
      %v1626 = vadd.f32 %v1299, %v1554
      %v1627 = vadd.f32 %v1300, %v1557
      %v1628 = vadd.f32 %v1301, %v1562
      %v1629 = vadd.f32 %v1302, %v1565
      %v1630 = vadd.f32 %v1303, %v1570
      %v1631 = vadd.f32 %v1304, %v1573
      %v1632 = vadd.f32 %v1305, %v1578
      %v1633 = vadd.f32 %v1306, %v1581
      %v1634 = vadd.f32 %v1307, %v1586
      %v1635 = vadd.f32 %v1308, %v1589
      %v1636 = vadd.f32 %v1309, %v1594
      %v1637 = vadd.f32 %v1310, %v1597
      %v1638 = vadd.f32 %v1311, %v1602
      %v1639 = vadd.f32 %v1312, %v1605
      %v1640 = vld [vmem:[%s1313] sm:$0xf]
      %v1641 = vld [vmem:[%s1313 + $0x4] sm:$0xf]
      %v1642 = vld [vmem:[%s1313 + $0x8] sm:$0x1]
      %v1643 = vld [vmem:[%s1313 + $0xc] sm:$0xf]
      %v1644 = vld [vmem:[%s1313 + $0x10] sm:$0xf]
      %v1645 = vld [vmem:[%s1313 + $0x14] sm:$0x1]
      %v1646 = vld [vmem:[%s1313 + $0x18] sm:$0xf]
      %v1647 = vld [vmem:[%s1313 + $0x1c] sm:$0xf]
      %v1648 = vld [vmem:[%s1313 + $0x20] sm:$0x1]
      %v1649 = vld [vmem:[%s1313 + $0x24] sm:$0xf]
      %v1650 = vld [vmem:[%s1313 + $0x28] sm:$0xf]
      %v1651 = vld [vmem:[%s1313 + $0x2c] sm:$0x1]
      %v1652 = vld [vmem:[%s1313 + $0x30] sm:$0xf]
      %v1653 = vld [vmem:[%s1313 + $0x34] sm:$0xf]
      %v1654 = vld [vmem:[%s1313 + $0x38] sm:$0x1]
      %v1655 = vld [vmem:[%s1313 + $0x3c] sm:$0xf]
      %v1656 = vld [vmem:[%s1313 + $0x40] sm:$0xf]
      %v1657 = vld [vmem:[%s1313 + $0x44] sm:$0x1]
      %v1658 = vld [vmem:[%s1313 + $0x48] sm:$0xf]
      %v1659 = vld [vmem:[%s1313 + $0x4c] sm:$0xf]
      %v1660 = vld [vmem:[%s1313 + $0x50] sm:$0x1]
      %v1661 = vld [vmem:[%s1313 + $0x54] sm:$0xf]
      %v1662 = vld [vmem:[%s1313 + $0x58] sm:$0xf]
      %v1663 = vld [vmem:[%s1313 + $0x5c] sm:$0x1]
      %v1664 = vld [vmem:[%s1313 + $0x60] sm:$0xf]
      %v1665 = vld [vmem:[%s1313 + $0x64] sm:$0xf]
      %v1666 = vld [vmem:[%s1313 + $0x68] sm:$0x1]
      %v1667 = vld [vmem:[%s1313 + $0x6c] sm:$0xf]
      %v1668 = vld [vmem:[%s1313 + $0x70] sm:$0xf]
      %v1669 = vld [vmem:[%s1313 + $0x74] sm:$0x1]
      %v1670 = vld [vmem:[%s1313 + $0x78] sm:$0xf]
      %v1671 = vld [vmem:[%s1313 + $0x7c] sm:$0xf]
      %v1672 = vld [vmem:[%s1313 + $0x80] sm:$0x1]
      %v1673 = vld [vmem:[%s1313 + $0x84] sm:$0xf]
      %v1674 = vld [vmem:[%s1313 + $0x88] sm:$0xf]
      %v1675 = vld [vmem:[%s1313 + $0x8c] sm:$0x1]
      %v1676 = vld [vmem:[%s1313 + $0x90] sm:$0xf]
      %v1677 = vld [vmem:[%s1313 + $0x94] sm:$0xf]
      %v1678 = vld [vmem:[%s1313 + $0x98] sm:$0x1]
      %v1679 = vld [vmem:[%s1313 + $0x9c] sm:$0xf]
      %v1680 = vld [vmem:[%s1313 + $0xa0] sm:$0xf]
      %v1681 = vld [vmem:[%s1313 + $0xa4] sm:$0x1]
      %v1682 = vld [vmem:[%s1313 + $0xa8] sm:$0xf]
      %v1683 = vld [vmem:[%s1313 + $0xac] sm:$0xf]
      %v1684 = vld [vmem:[%s1313 + $0xb0] sm:$0x1]
      %v1685 = vld [vmem:[%s1313 + $0xb4] sm:$0xf]
      %v1686 = vld [vmem:[%s1313 + $0xb8] sm:$0xf]
      %v1687 = vld [vmem:[%s1313 + $0xbc] sm:$0x1]
      %v1688 = vunpack.c.l.bf16 %v1640
      %v1689 = vunpack.c.l.bf16 %v1641
      %v1690 = vunpack.c.l.bf16 %v1642
      %v1691 = vunpack.c.l.bf16 %v1643
      %v1692 = vunpack.c.l.bf16 %v1644
      %v1693 = vunpack.c.l.bf16 %v1645
      %v1694 = vunpack.c.l.bf16 %v1646
      %v1695 = vunpack.c.l.bf16 %v1647
      %v1696 = vunpack.c.l.bf16 %v1648
      %v1697 = vunpack.c.l.bf16 %v1649
      %v1698 = vunpack.c.l.bf16 %v1650
      %v1699 = vunpack.c.l.bf16 %v1651
      %v1700 = vunpack.c.l.bf16 %v1652
      %v1701 = vunpack.c.l.bf16 %v1653
      %v1702 = vunpack.c.l.bf16 %v1654
      %v1703 = vunpack.c.l.bf16 %v1655
      %v1704 = vunpack.c.l.bf16 %v1656
      %v1705 = vunpack.c.l.bf16 %v1657
      %v1706 = vunpack.c.l.bf16 %v1658
      %v1707 = vunpack.c.l.bf16 %v1659
      %v1708 = vunpack.c.l.bf16 %v1660
      %v1709 = vunpack.c.l.bf16 %v1661
      %v1710 = vunpack.c.l.bf16 %v1662
      %v1711 = vunpack.c.l.bf16 %v1663
      %v1712 = vunpack.c.l.bf16 %v1664
      %v1713 = vunpack.c.l.bf16 %v1665
      %v1714 = vunpack.c.l.bf16 %v1666
      %v1715 = vunpack.c.l.bf16 %v1667
      %v1716 = vunpack.c.l.bf16 %v1668
      %v1717 = vunpack.c.l.bf16 %v1669
      %v1718 = vunpack.c.l.bf16 %v1670
      %v1719 = vunpack.c.l.bf16 %v1671
      %v1720 = vunpack.c.l.bf16 %v1672
      %v1721 = vunpack.c.l.bf16 %v1673
      %v1722 = vunpack.c.l.bf16 %v1674
      %v1723 = vunpack.c.l.bf16 %v1675
      %v1724 = vunpack.c.l.bf16 %v1676
      %v1725 = vunpack.c.l.bf16 %v1677
      %v1726 = vunpack.c.l.bf16 %v1678
      %v1727 = vunpack.c.l.bf16 %v1679
      %v1728 = vunpack.c.l.bf16 %v1680
      %v1729 = vunpack.c.l.bf16 %v1681
      %v1730 = vunpack.c.l.bf16 %v1682
      %v1731 = vunpack.c.l.bf16 %v1683
      %v1732 = vunpack.c.l.bf16 %v1684
      %v1733 = vunpack.c.l.bf16 %v1685
      %v1734 = vunpack.c.l.bf16 %v1686
      %v1735 = vunpack.c.l.bf16 %v1687
      %v1784 = vrot.slane %v1688, 1
      %v1785 = vrot.slane %v1689, 1
      %v1786 = vsel %vm333, %v1784, %v1785
      %v1787 = vrot.slane %v1690, 1
      %v1788 = vsel %vm333, %v1785, %v1787
      %v1789 = vrot.slane %v1691, 1
      %v1790 = vrot.slane %v1692, 1
      %v1791 = vsel %vm333, %v1789, %v1790
      %v1792 = vrot.slane %v1693, 1
      %v1793 = vsel %vm333, %v1790, %v1792
      %v1794 = vrot.slane %v1694, 1
      %v1795 = vrot.slane %v1695, 1
      %v1796 = vsel %vm333, %v1794, %v1795
      %v1797 = vrot.slane %v1696, 1
      %v1798 = vsel %vm333, %v1795, %v1797
      %v1799 = vrot.slane %v1697, 1
      %v1800 = vrot.slane %v1698, 1
      %v1801 = vsel %vm333, %v1799, %v1800
      %v1802 = vrot.slane %v1699, 1
      %v1803 = vsel %vm333, %v1800, %v1802
      %v1804 = vrot.slane %v1700, 1
      %v1805 = vrot.slane %v1701, 1
      %v1806 = vsel %vm333, %v1804, %v1805
      %v1807 = vrot.slane %v1702, 1
      %v1808 = vsel %vm333, %v1805, %v1807
      %v1809 = vrot.slane %v1703, 1
      %v1810 = vrot.slane %v1704, 1
      %v1811 = vsel %vm333, %v1809, %v1810
      %v1812 = vrot.slane %v1705, 1
      %v1813 = vsel %vm333, %v1810, %v1812
      %v1814 = vrot.slane %v1706, 1
      %v1815 = vrot.slane %v1707, 1
      %v1816 = vsel %vm333, %v1814, %v1815
      %v1817 = vrot.slane %v1708, 1
      %v1818 = vsel %vm333, %v1815, %v1817
      %v1819 = vrot.slane %v1709, 1
      %v1820 = vrot.slane %v1710, 1
      %v1821 = vsel %vm333, %v1819, %v1820
      %v1822 = vrot.slane %v1711, 1
      %v1823 = vsel %vm333, %v1820, %v1822
      %v1824 = vrot.slane %v1712, 1
      %v1825 = vrot.slane %v1713, 1
      %v1826 = vsel %vm333, %v1824, %v1825
      %v1827 = vrot.slane %v1714, 1
      %v1828 = vsel %vm333, %v1825, %v1827
      %v1829 = vrot.slane %v1715, 1
      %v1830 = vrot.slane %v1716, 1
      %v1831 = vsel %vm333, %v1829, %v1830
      %v1832 = vrot.slane %v1717, 1
      %v1833 = vsel %vm333, %v1830, %v1832
      %v1834 = vrot.slane %v1718, 1
      %v1835 = vrot.slane %v1719, 1
      %v1836 = vsel %vm333, %v1834, %v1835
      %v1837 = vrot.slane %v1720, 1
      %v1838 = vsel %vm333, %v1835, %v1837
      %v1839 = vrot.slane %v1721, 1
      %v1840 = vrot.slane %v1722, 1
      %v1841 = vsel %vm333, %v1839, %v1840
      %v1842 = vrot.slane %v1723, 1
      %v1843 = vsel %vm333, %v1840, %v1842
      %v1844 = vrot.slane %v1724, 1
      %v1845 = vrot.slane %v1725, 1
      %v1846 = vsel %vm333, %v1844, %v1845
      %v1847 = vrot.slane %v1726, 1
      %v1848 = vsel %vm333, %v1845, %v1847
      %v1849 = vrot.slane %v1727, 1
      %v1850 = vrot.slane %v1728, 1
      %v1851 = vsel %vm333, %v1849, %v1850
      %v1852 = vrot.slane %v1729, 1
      %v1853 = vsel %vm333, %v1850, %v1852
      %v1854 = vrot.slane %v1730, 1
      %v1855 = vrot.slane %v1731, 1
      %v1856 = vsel %vm333, %v1854, %v1855
      %v1857 = vrot.slane %v1732, 1
      %v1858 = vsel %vm333, %v1855, %v1857
      %v1859 = vrot.slane %v1733, 1
      %v1860 = vrot.slane %v1734, 1
      %v1861 = vsel %vm333, %v1859, %v1860
      %v1862 = vrot.slane %v1735, 1
      %v1863 = vsel %vm333, %v1860, %v1862
      %v1896 = vpack.c.bf16 %v1788, %v1786
      %v1897 = vpack.c.bf16 %v1793, %v1791
      %v1898 = vpack.c.bf16 %v1798, %v1796
      %v1899 = vpack.c.bf16 %v1803, %v1801
      %v1900 = vpack.c.bf16 %v1808, %v1806
      %v1901 = vpack.c.bf16 %v1813, %v1811
      %v1902 = vpack.c.bf16 %v1818, %v1816
      %v1903 = vpack.c.bf16 %v1823, %v1821
      %v1904 = vpack.c.bf16 %v1828, %v1826
      %v1905 = vpack.c.bf16 %v1833, %v1831
      %v1906 = vpack.c.bf16 %v1838, %v1836
      %v1907 = vpack.c.bf16 %v1843, %v1841
      %v1908 = vpack.c.bf16 %v1848, %v1846
      %v1909 = vpack.c.bf16 %v1853, %v1851
      %v1910 = vpack.c.bf16 %v1858, %v1856
      %v1911 = vpack.c.bf16 %v1863, %v1861
      %s1912 = scalar_lea.vmem %s1, 8
      %v1913 = vld [vmem:[%s1912] sm:$0x3]
      %v1915 = vsel %vm464, %v1896, 0
      %v1918 = vsel %vm464, %v1897, 0
      %v1921 = vsel %vm464, %v1898, 0
      %v1924 = vsel %vm464, %v1899, 0
      %v1927 = vsel %vm464, %v1900, 0
      %v1930 = vsel %vm464, %v1901, 0
      %v1933 = vsel %vm464, %v1902, 0
      %v1936 = vsel %vm464, %v1903, 0
      %v1939 = vsel %vm464, %v1904, 0
      %v1942 = vsel %vm464, %v1905, 0
      %v1945 = vsel %vm464, %v1906, 0
      %v1948 = vsel %vm464, %v1907, 0
      %v1951 = vsel %vm464, %v1908, 0
      %v1954 = vsel %vm464, %v1909, 0
      %v1957 = vsel %vm464, %v1910, 0
      %v1960 = vsel %vm464, %v1911, 0
      %v1963 = vsel %vm513, %v1913, 0
      %1965 = vmatprep.subr.bf16.mxu0 0
      %1966 = vmatpush1.bf16.msra.mxu0 %v1963
      %1967 = vmatprep.subr.bf16.mxu0 0
      %1968 = vmatpush1.bf16.msra.mxu0 0
      %1969 = vmatprep.subr.bf16.mxu0 0
      %1970 = vmatpush1.bf16.msra.mxu0 0
      %1971 = vmatprep.subr.bf16.mxu0 0
      %1972 = vmatpush1.bf16.msra.mxu0 0
      %1973 = vmatprep.subr.bf16.mxu0 0
      %1974 = vmatpush1.bf16.msra.mxu0 0
      %1975 = vmatprep.subr.bf16.mxu0 0
      %1976 = vmatpush1.bf16.msra.mxu0 0
      %1977 = vmatprep.subr.bf16.mxu0 0
      %1978 = vmatpush1.bf16.msra.mxu0 0
      %1979 = vmatprep.subr.bf16.mxu0 0
      %1980 = vmatpush1.bf16.msra.mxu0 0
      %1981 = vmatprep.subr.bf16.mxu0 0
      %1982 = vmatpush1.bf16.msra.mxu0 0
      %1983 = vmatprep.subr.bf16.mxu0 0
      %1984 = vmatpush1.bf16.msra.mxu0 0
      %1985 = vmatprep.subr.bf16.mxu0 0
      %1986 = vmatpush1.bf16.msra.mxu0 0
      %1987 = vmatprep.subr.bf16.mxu0 0
      %1988 = vmatpush1.bf16.msra.mxu0 0
      %1989 = vmatprep.subr.bf16.mxu0 0
      %1990 = vmatpush1.bf16.msra.mxu0 0
      %1991 = vmatprep.subr.bf16.mxu0 0
      %1992 = vmatpush1.bf16.msra.mxu0 0
      %1993 = vmatprep.subr.bf16.mxu0 0
      %1994 = vmatpush1.bf16.msra.mxu0 0
      %1995 = vmatprep.subr.bf16.mxu0 0
      %1996 = vmatpush1.bf16.msra.mxu0 0
      %1997 = vmatprep.mubr.bf16.mxu0 0
      %1998 = vmatmul.mubr.bf16.gmra.mrb[0].mxu0 %v1915
      %v1999 = vpop.f32.mrb[0].mxu0
      %v2000 = vadd.f32 0.0, %v1999
      %v2001 = vpop.f32.mrb[0].mxu0
      %v2002 = vpop.f32.mrb[0].mxu0
      %v2003 = vadd.f32 0.0, %v2002
      %v2004 = vpop.f32.mrb[0].mxu0
      %2005 = vmatprep.mubr.bf16.mxu0 0
      %2006 = vmatmul.mubr.bf16.gmra.mrb[0].mxu0 %v1918
      %v2007 = vpop.f32.mrb[0].mxu0
      %v2008 = vadd.f32 0.0, %v2007
      %v2009 = vpop.f32.mrb[0].mxu0
      %v2010 = vpop.f32.mrb[0].mxu0
      %v2011 = vadd.f32 0.0, %v2010
      %v2012 = vpop.f32.mrb[0].mxu0
      %2013 = vmatprep.mubr.bf16.mxu0 0
      %2014 = vmatmul.mubr.bf16.gmra.mrb[0].mxu0 %v1921
      %v2015 = vpop.f32.mrb[0].mxu0
      %v2016 = vadd.f32 0.0, %v2015
      %v2017 = vpop.f32.mrb[0].mxu0
      %v2018 = vpop.f32.mrb[0].mxu0
      %v2019 = vadd.f32 0.0, %v2018
      %v2020 = vpop.f32.mrb[0].mxu0
      %2021 = vmatprep.mubr.bf16.mxu0 0
      %2022 = vmatmul.mubr.bf16.gmra.mrb[0].mxu0 %v1924
      %v2023 = vpop.f32.mrb[0].mxu0
      %v2024 = vadd.f32 0.0, %v2023
      %v2025 = vpop.f32.mrb[0].mxu0
      %v2026 = vpop.f32.mrb[0].mxu0
      %v2027 = vadd.f32 0.0, %v2026
      %v2028 = vpop.f32.mrb[0].mxu0
      %2029 = vmatprep.mubr.bf16.mxu0 0
      %2030 = vmatmul.mubr.bf16.gmra.mrb[0].mxu0 %v1927
      %v2031 = vpop.f32.mrb[0].mxu0
      %v2032 = vadd.f32 0.0, %v2031
      %v2033 = vpop.f32.mrb[0].mxu0
      %v2034 = vpop.f32.mrb[0].mxu0
      %v2035 = vadd.f32 0.0, %v2034
      %v2036 = vpop.f32.mrb[0].mxu0
      %2037 = vmatprep.mubr.bf16.mxu0 0
      %2038 = vmatmul.mubr.bf16.gmra.mrb[0].mxu0 %v1930
      %v2039 = vpop.f32.mrb[0].mxu0
      %v2040 = vadd.f32 0.0, %v2039
      %v2041 = vpop.f32.mrb[0].mxu0
      %v2042 = vpop.f32.mrb[0].mxu0
      %v2043 = vadd.f32 0.0, %v2042
      %v2044 = vpop.f32.mrb[0].mxu0
      %2045 = vmatprep.mubr.bf16.mxu0 0
      %2046 = vmatmul.mubr.bf16.gmra.mrb[0].mxu0 %v1933
      %v2047 = vpop.f32.mrb[0].mxu0
      %v2048 = vadd.f32 0.0, %v2047
      %v2049 = vpop.f32.mrb[0].mxu0
      %v2050 = vpop.f32.mrb[0].mxu0
      %v2051 = vadd.f32 0.0, %v2050
      %v2052 = vpop.f32.mrb[0].mxu0
      %2053 = vmatprep.mubr.bf16.mxu0 0
      %2054 = vmatmul.mubr.bf16.gmra.mrb[0].mxu0 %v1936
      %v2055 = vpop.f32.mrb[0].mxu0
      %v2056 = vadd.f32 0.0, %v2055
      %v2057 = vpop.f32.mrb[0].mxu0
      %v2058 = vpop.f32.mrb[0].mxu0
      %v2059 = vadd.f32 0.0, %v2058
      %v2060 = vpop.f32.mrb[0].mxu0
      %2061 = vmatprep.mubr.bf16.mxu0 0
      %2062 = vmatmul.mubr.bf16.gmra.mrb[0].mxu0 %v1939
      %v2063 = vpop.f32.mrb[0].mxu0
      %v2064 = vadd.f32 0.0, %v2063
      %v2065 = vpop.f32.mrb[0].mxu0
      %v2066 = vpop.f32.mrb[0].mxu0
      %v2067 = vadd.f32 0.0, %v2066
      %v2068 = vpop.f32.mrb[0].mxu0
      %2069 = vmatprep.mubr.bf16.mxu0 0
      %2070 = vmatmul.mubr.bf16.gmra.mrb[0].mxu0 %v1942
      %v2071 = vpop.f32.mrb[0].mxu0
      %v2072 = vadd.f32 0.0, %v2071
      %v2073 = vpop.f32.mrb[0].mxu0
      %v2074 = vpop.f32.mrb[0].mxu0
      %v2075 = vadd.f32 0.0, %v2074
      %v2076 = vpop.f32.mrb[0].mxu0
      %2077 = vmatprep.mubr.bf16.mxu0 0
      %2078 = vmatmul.mubr.bf16.gmra.mrb[0].mxu0 %v1945
      %v2079 = vpop.f32.mrb[0].mxu0
      %v2080 = vadd.f32 0.0, %v2079
      %v2081 = vpop.f32.mrb[0].mxu0
      %v2082 = vpop.f32.mrb[0].mxu0
      %v2083 = vadd.f32 0.0, %v2082
      %v2084 = vpop.f32.mrb[0].mxu0
      %2085 = vmatprep.mubr.bf16.mxu0 0
      %2086 = vmatmul.mubr.bf16.gmra.mrb[0].mxu0 %v1948
      %v2087 = vpop.f32.mrb[0].mxu0
      %v2088 = vadd.f32 0.0, %v2087
      %v2089 = vpop.f32.mrb[0].mxu0
      %v2090 = vpop.f32.mrb[0].mxu0
      %v2091 = vadd.f32 0.0, %v2090
      %v2092 = vpop.f32.mrb[0].mxu0
      %2093 = vmatprep.mubr.bf16.mxu0 0
      %2094 = vmatmul.mubr.bf16.gmra.mrb[0].mxu0 %v1951
      %v2095 = vpop.f32.mrb[0].mxu0
      %v2096 = vadd.f32 0.0, %v2095
      %v2097 = vpop.f32.mrb[0].mxu0
      %v2098 = vpop.f32.mrb[0].mxu0
      %v2099 = vadd.f32 0.0, %v2098
      %v2100 = vpop.f32.mrb[0].mxu0
      %2101 = vmatprep.mubr.bf16.mxu0 0
      %2102 = vmatmul.mubr.bf16.gmra.mrb[0].mxu0 %v1954
      %v2103 = vpop.f32.mrb[0].mxu0
      %v2104 = vadd.f32 0.0, %v2103
      %v2105 = vpop.f32.mrb[0].mxu0
      %v2106 = vpop.f32.mrb[0].mxu0
      %v2107 = vadd.f32 0.0, %v2106
      %v2108 = vpop.f32.mrb[0].mxu0
      %2109 = vmatprep.mubr.bf16.mxu0 0
      %2110 = vmatmul.mubr.bf16.gmra.mrb[0].mxu0 %v1957
      %v2111 = vpop.f32.mrb[0].mxu0
      %v2112 = vadd.f32 0.0, %v2111
      %v2113 = vpop.f32.mrb[0].mxu0
      %v2114 = vpop.f32.mrb[0].mxu0
      %v2115 = vadd.f32 0.0, %v2114
      %v2116 = vpop.f32.mrb[0].mxu0
      %2117 = vmatprep.mubr.bf16.mxu0 0
      %2118 = vmatmul.mubr.bf16.gmra.mrb[0].mxu0 %v1960
      %v2119 = vpop.f32.mrb[0].mxu0
      %v2120 = vadd.f32 0.0, %v2119
      %v2121 = vpop.f32.mrb[0].mxu0
      %v2122 = vpop.f32.mrb[0].mxu0
      %v2123 = vadd.f32 0.0, %v2122
      %v2124 = vpop.f32.mrb[0].mxu0
      %2125 = vdwg.mxu0
      %v2126 = vadd.f32 %v1608, %v2000
      %v2127 = vadd.f32 %v1609, %v2003
      %v2128 = vadd.f32 %v1610, %v2008
      %v2129 = vadd.f32 %v1611, %v2011
      %v2130 = vadd.f32 %v1612, %v2016
      %v2131 = vadd.f32 %v1613, %v2019
      %v2132 = vadd.f32 %v1614, %v2024
      %v2133 = vadd.f32 %v1615, %v2027
      %v2134 = vadd.f32 %v1616, %v2032
      %v2135 = vadd.f32 %v1617, %v2035
      %v2136 = vadd.f32 %v1618, %v2040
      %v2137 = vadd.f32 %v1619, %v2043
      %v2138 = vadd.f32 %v1620, %v2048
      %v2139 = vadd.f32 %v1621, %v2051
      %v2140 = vadd.f32 %v1622, %v2056
      %v2141 = vadd.f32 %v1623, %v2059
      %v2142 = vadd.f32 %v1624, %v2064
      %v2143 = vadd.f32 %v1625, %v2067
      %v2144 = vadd.f32 %v1626, %v2072
      %v2145 = vadd.f32 %v1627, %v2075
      %v2146 = vadd.f32 %v1628, %v2080
      %v2147 = vadd.f32 %v1629, %v2083
      %v2148 = vadd.f32 %v1630, %v2088
      %v2149 = vadd.f32 %v1631, %v2091
      %v2150 = vadd.f32 %v1632, %v2096
      %v2151 = vadd.f32 %v1633, %v2099
      %v2152 = vadd.f32 %v1634, %v2104
      %v2153 = vadd.f32 %v1635, %v2107
      %v2154 = vadd.f32 %v1636, %v2112
      %v2155 = vadd.f32 %v1637, %v2115
      %v2156 = vadd.f32 %v1638, %v2120
      %v2157 = vadd.f32 %v1639, %v2123
      %v2158 = vld [vmem:[%s1313] sm:$0xe]
      %v2159 = vld [vmem:[%s1313 + $0xc] sm:$0xe]
      %v2160 = vld [vmem:[%s1313 + $0x18] sm:$0xe]
      %v2161 = vld [vmem:[%s1313 + $0x24] sm:$0xe]
      %v2162 = vld [vmem:[%s1313 + $0x30] sm:$0xe]
      %v2163 = vld [vmem:[%s1313 + $0x3c] sm:$0xe]
      %v2164 = vld [vmem:[%s1313 + $0x48] sm:$0xe]
      %v2165 = vld [vmem:[%s1313 + $0x54] sm:$0xe]
      %v2166 = vld [vmem:[%s1313 + $0x60] sm:$0xe]
      %v2167 = vld [vmem:[%s1313 + $0x6c] sm:$0xe]
      %v2168 = vld [vmem:[%s1313 + $0x78] sm:$0xe]
      %v2169 = vld [vmem:[%s1313 + $0x84] sm:$0xe]
      %v2170 = vld [vmem:[%s1313 + $0x90] sm:$0xe]
      %v2171 = vld [vmem:[%s1313 + $0x9c] sm:$0xe]
      %v2172 = vld [vmem:[%s1313 + $0xa8] sm:$0xe]
      %v2173 = vld [vmem:[%s1313 + $0xb4] sm:$0xe]
      %v2174 = vunpack.c.l.bf16 %v2158
      %v2175 = vunpack.c.l.bf16 %v2159
      %v2176 = vunpack.c.l.bf16 %v2160
      %v2177 = vunpack.c.l.bf16 %v2161
      %v2178 = vunpack.c.l.bf16 %v2162
      %v2179 = vunpack.c.l.bf16 %v2163
      %v2180 = vunpack.c.l.bf16 %v2164
      %v2181 = vunpack.c.l.bf16 %v2165
      %v2182 = vunpack.c.l.bf16 %v2166
      %v2183 = vunpack.c.l.bf16 %v2167
      %v2184 = vunpack.c.l.bf16 %v2168
      %v2185 = vunpack.c.l.bf16 %v2169
      %v2186 = vunpack.c.l.bf16 %v2170
      %v2187 = vunpack.c.l.bf16 %v2171
      %v2188 = vunpack.c.l.bf16 %v2172
      %v2189 = vunpack.c.l.bf16 %v2173
      %v2206 = vrot.slane %v2174, 2
      %v2207 = vrot.slane %v1689, 2
      %v2208 = vsel %vm938, %v2206, %v2207
      %v2209 = vrot.slane %v1690, 2
      %v2210 = vsel %vm938, %v2207, %v2209
      %v2211 = vrot.slane %v2175, 2
      %v2212 = vrot.slane %v1692, 2
      %v2213 = vsel %vm938, %v2211, %v2212
      %v2214 = vrot.slane %v1693, 2
      %v2215 = vsel %vm938, %v2212, %v2214
      %v2216 = vrot.slane %v2176, 2
      %v2217 = vrot.slane %v1695, 2
      %v2218 = vsel %vm938, %v2216, %v2217
      %v2219 = vrot.slane %v1696, 2
      %v2220 = vsel %vm938, %v2217, %v2219
      %v2221 = vrot.slane %v2177, 2
      %v2222 = vrot.slane %v1698, 2
      %v2223 = vsel %vm938, %v2221, %v2222
      %v2224 = vrot.slane %v1699, 2
      %v2225 = vsel %vm938, %v2222, %v2224
      %v2226 = vrot.slane %v2178, 2
      %v2227 = vrot.slane %v1701, 2
      %v2228 = vsel %vm938, %v2226, %v2227
      %v2229 = vrot.slane %v1702, 2
      %v2230 = vsel %vm938, %v2227, %v2229
      %v2231 = vrot.slane %v2179, 2
      %v2232 = vrot.slane %v1704, 2
      %v2233 = vsel %vm938, %v2231, %v2232
      %v2234 = vrot.slane %v1705, 2
      %v2235 = vsel %vm938, %v2232, %v2234
      %v2236 = vrot.slane %v2180, 2
      %v2237 = vrot.slane %v1707, 2
      %v2238 = vsel %vm938, %v2236, %v2237
      %v2239 = vrot.slane %v1708, 2
      %v2240 = vsel %vm938, %v2237, %v2239
      %v2241 = vrot.slane %v2181, 2
      %v2242 = vrot.slane %v1710, 2
      %v2243 = vsel %vm938, %v2241, %v2242
      %v2244 = vrot.slane %v1711, 2
      %v2245 = vsel %vm938, %v2242, %v2244
      %v2246 = vrot.slane %v2182, 2
      %v2247 = vrot.slane %v1713, 2
      %v2248 = vsel %vm938, %v2246, %v2247
      %v2249 = vrot.slane %v1714, 2
      %v2250 = vsel %vm938, %v2247, %v2249
      %v2251 = vrot.slane %v2183, 2
      %v2252 = vrot.slane %v1716, 2
      %v2253 = vsel %vm938, %v2251, %v2252
      %v2254 = vrot.slane %v1717, 2
      %v2255 = vsel %vm938, %v2252, %v2254
      %v2256 = vrot.slane %v2184, 2
      %v2257 = vrot.slane %v1719, 2
      %v2258 = vsel %vm938, %v2256, %v2257
      %v2259 = vrot.slane %v1720, 2
      %v2260 = vsel %vm938, %v2257, %v2259
      %v2261 = vrot.slane %v2185, 2
      %v2262 = vrot.slane %v1722, 2
      %v2263 = vsel %vm938, %v2261, %v2262
      %v2264 = vrot.slane %v1723, 2
      %v2265 = vsel %vm938, %v2262, %v2264
      %v2266 = vrot.slane %v2186, 2
      %v2267 = vrot.slane %v1725, 2
      %v2268 = vsel %vm938, %v2266, %v2267
      %v2269 = vrot.slane %v1726, 2
      %v2270 = vsel %vm938, %v2267, %v2269
      %v2271 = vrot.slane %v2187, 2
      %v2272 = vrot.slane %v1728, 2
      %v2273 = vsel %vm938, %v2271, %v2272
      %v2274 = vrot.slane %v1729, 2
      %v2275 = vsel %vm938, %v2272, %v2274
      %v2276 = vrot.slane %v2188, 2
      %v2277 = vrot.slane %v1731, 2
      %v2278 = vsel %vm938, %v2276, %v2277
      %v2279 = vrot.slane %v1732, 2
      %v2280 = vsel %vm938, %v2277, %v2279
      %v2281 = vrot.slane %v2189, 2
      %v2282 = vrot.slane %v1734, 2
      %v2283 = vsel %vm938, %v2281, %v2282
      %v2284 = vrot.slane %v1735, 2
      %v2285 = vsel %vm938, %v2282, %v2284
      %v2318 = vpack.c.bf16 %v2210, %v2208
      %v2319 = vpack.c.bf16 %v2215, %v2213
      %v2320 = vpack.c.bf16 %v2220, %v2218
      %v2321 = vpack.c.bf16 %v2225, %v2223
      %v2322 = vpack.c.bf16 %v2230, %v2228
      %v2323 = vpack.c.bf16 %v2235, %v2233
      %v2324 = vpack.c.bf16 %v2240, %v2238
      %v2325 = vpack.c.bf16 %v2245, %v2243
      %v2326 = vpack.c.bf16 %v2250, %v2248
      %v2327 = vpack.c.bf16 %v2255, %v2253
      %v2328 = vpack.c.bf16 %v2260, %v2258
      %v2329 = vpack.c.bf16 %v2265, %v2263
      %v2330 = vpack.c.bf16 %v2270, %v2268
      %v2331 = vpack.c.bf16 %v2275, %v2273
      %v2332 = vpack.c.bf16 %v2280, %v2278
      %v2333 = vpack.c.bf16 %v2285, %v2283
      %s2334 = scalar_lea.vmem %s1, 10
      %v2335 = vld [vmem:[%s2334] sm:$0x3]
      %v2337 = vsel %vm464, %v2318, 0
      %v2340 = vsel %vm464, %v2319, 0
      %v2343 = vsel %vm464, %v2320, 0
      %v2346 = vsel %vm464, %v2321, 0
      %v2349 = vsel %vm464, %v2322, 0
      %v2352 = vsel %vm464, %v2323, 0
      %v2355 = vsel %vm464, %v2324, 0
      %v2358 = vsel %vm464, %v2325, 0
      %v2361 = vsel %vm464, %v2326, 0
      %v2364 = vsel %vm464, %v2327, 0
      %v2367 = vsel %vm464, %v2328, 0
      %v2370 = vsel %vm464, %v2329, 0
      %v2373 = vsel %vm464, %v2330, 0
      %v2376 = vsel %vm464, %v2331, 0
      %v2379 = vsel %vm464, %v2332, 0
      %v2382 = vsel %vm464, %v2333, 0
      %v2385 = vsel %vm513, %v2335, 0
      %2387 = vmatprep.subr.bf16.mxu0 0
      %2388 = vmatpush1.bf16.msra.mxu0 %v2385
      %2389 = vmatprep.subr.bf16.mxu0 0
      %2390 = vmatpush1.bf16.msra.mxu0 0
      %2391 = vmatprep.subr.bf16.mxu0 0
      %2392 = vmatpush1.bf16.msra.mxu0 0
      %2393 = vmatprep.subr.bf16.mxu0 0
      %2394 = vmatpush1.bf16.msra.mxu0 0
      %2395 = vmatprep.subr.bf16.mxu0 0
      %2396 = vmatpush1.bf16.msra.mxu0 0
      %2397 = vmatprep.subr.bf16.mxu0 0
      %2398 = vmatpush1.bf16.msra.mxu0 0
      %2399 = vmatprep.subr.bf16.mxu0 0
      %2400 = vmatpush1.bf16.msra.mxu0 0
      %2401 = vmatprep.subr.bf16.mxu0 0
      %2402 = vmatpush1.bf16.msra.mxu0 0
      %2403 = vmatprep.subr.bf16.mxu0 0
      %2404 = vmatpush1.bf16.msra.mxu0 0
      %2405 = vmatprep.subr.bf16.mxu0 0
      %2406 = vmatpush1.bf16.msra.mxu0 0
      %2407 = vmatprep.subr.bf16.mxu0 0
      %2408 = vmatpush1.bf16.msra.mxu0 0
      %2409 = vmatprep.subr.bf16.mxu0 0
      %2410 = vmatpush1.bf16.msra.mxu0 0
      %2411 = vmatprep.subr.bf16.mxu0 0
      %2412 = vmatpush1.bf16.msra.mxu0 0
      %2413 = vmatprep.subr.bf16.mxu0 0
      %2414 = vmatpush1.bf16.msra.mxu0 0
      %2415 = vmatprep.subr.bf16.mxu0 0
      %2416 = vmatpush1.bf16.msra.mxu0 0
      %2417 = vmatprep.subr.bf16.mxu0 0
      %2418 = vmatpush1.bf16.msra.mxu0 0
      %2419 = vmatprep.mubr.bf16.mxu0 0
      %2420 = vmatmul.mubr.bf16.gmra.mrb[0].mxu0 %v2337
      %v2421 = vpop.f32.mrb[0].mxu0
      %v2422 = vadd.f32 0.0, %v2421
      %v2423 = vpop.f32.mrb[0].mxu0
      %v2424 = vpop.f32.mrb[0].mxu0
      %v2425 = vadd.f32 0.0, %v2424
      %v2426 = vpop.f32.mrb[0].mxu0
      %2427 = vmatprep.mubr.bf16.mxu0 0
      %2428 = vmatmul.mubr.bf16.gmra.mrb[0].mxu0 %v2340
      %v2429 = vpop.f32.mrb[0].mxu0
      %v2430 = vadd.f32 0.0, %v2429
      %v2431 = vpop.f32.mrb[0].mxu0
      %v2432 = vpop.f32.mrb[0].mxu0
      %v2433 = vadd.f32 0.0, %v2432
      %v2434 = vpop.f32.mrb[0].mxu0
      %2435 = vmatprep.mubr.bf16.mxu0 0
      %2436 = vmatmul.mubr.bf16.gmra.mrb[0].mxu0 %v2343
      %v2437 = vpop.f32.mrb[0].mxu0
      %v2438 = vadd.f32 0.0, %v2437
      %v2439 = vpop.f32.mrb[0].mxu0
      %v2440 = vpop.f32.mrb[0].mxu0
      %v2441 = vadd.f32 0.0, %v2440
      %v2442 = vpop.f32.mrb[0].mxu0
      %2443 = vmatprep.mubr.bf16.mxu0 0
      %2444 = vmatmul.mubr.bf16.gmra.mrb[0].mxu0 %v2346
      %v2445 = vpop.f32.mrb[0].mxu0
      %v2446 = vadd.f32 0.0, %v2445
      %v2447 = vpop.f32.mrb[0].mxu0
      %v2448 = vpop.f32.mrb[0].mxu0
      %v2449 = vadd.f32 0.0, %v2448
      %v2450 = vpop.f32.mrb[0].mxu0
      %2451 = vmatprep.mubr.bf16.mxu0 0
      %2452 = vmatmul.mubr.bf16.gmra.mrb[0].mxu0 %v2349
      %v2453 = vpop.f32.mrb[0].mxu0
      %v2454 = vadd.f32 0.0, %v2453
      %v2455 = vpop.f32.mrb[0].mxu0
      %v2456 = vpop.f32.mrb[0].mxu0
      %v2457 = vadd.f32 0.0, %v2456
      %v2458 = vpop.f32.mrb[0].mxu0
      %2459 = vmatprep.mubr.bf16.mxu0 0
      %2460 = vmatmul.mubr.bf16.gmra.mrb[0].mxu0 %v2352
      %v2461 = vpop.f32.mrb[0].mxu0
      %v2462 = vadd.f32 0.0, %v2461
      %v2463 = vpop.f32.mrb[0].mxu0
      %v2464 = vpop.f32.mrb[0].mxu0
      %v2465 = vadd.f32 0.0, %v2464
      %v2466 = vpop.f32.mrb[0].mxu0
      %2467 = vmatprep.mubr.bf16.mxu0 0
      %2468 = vmatmul.mubr.bf16.gmra.mrb[0].mxu0 %v2355
      %v2469 = vpop.f32.mrb[0].mxu0
      %v2470 = vadd.f32 0.0, %v2469
      %v2471 = vpop.f32.mrb[0].mxu0
      %v2472 = vpop.f32.mrb[0].mxu0
      %v2473 = vadd.f32 0.0, %v2472
      %v2474 = vpop.f32.mrb[0].mxu0
      %2475 = vmatprep.mubr.bf16.mxu0 0
      %2476 = vmatmul.mubr.bf16.gmra.mrb[0].mxu0 %v2358
      %v2477 = vpop.f32.mrb[0].mxu0
      %v2478 = vadd.f32 0.0, %v2477
      %v2479 = vpop.f32.mrb[0].mxu0
      %v2480 = vpop.f32.mrb[0].mxu0
      %v2481 = vadd.f32 0.0, %v2480
      %v2482 = vpop.f32.mrb[0].mxu0
      %2483 = vmatprep.mubr.bf16.mxu0 0
      %2484 = vmatmul.mubr.bf16.gmra.mrb[0].mxu0 %v2361
      %v2485 = vpop.f32.mrb[0].mxu0
      %v2486 = vadd.f32 0.0, %v2485
      %v2487 = vpop.f32.mrb[0].mxu0
      %v2488 = vpop.f32.mrb[0].mxu0
      %v2489 = vadd.f32 0.0, %v2488
      %v2490 = vpop.f32.mrb[0].mxu0
      %2491 = vmatprep.mubr.bf16.mxu0 0
      %2492 = vmatmul.mubr.bf16.gmra.mrb[0].mxu0 %v2364
      %v2493 = vpop.f32.mrb[0].mxu0
      %v2494 = vadd.f32 0.0, %v2493
      %v2495 = vpop.f32.mrb[0].mxu0
      %v2496 = vpop.f32.mrb[0].mxu0
      %v2497 = vadd.f32 0.0, %v2496
      %v2498 = vpop.f32.mrb[0].mxu0
      %2499 = vmatprep.mubr.bf16.mxu0 0
      %2500 = vmatmul.mubr.bf16.gmra.mrb[0].mxu0 %v2367
      %v2501 = vpop.f32.mrb[0].mxu0
      %v2502 = vadd.f32 0.0, %v2501
      %v2503 = vpop.f32.mrb[0].mxu0
      %v2504 = vpop.f32.mrb[0].mxu0
      %v2505 = vadd.f32 0.0, %v2504
      %v2506 = vpop.f32.mrb[0].mxu0
      %2507 = vmatprep.mubr.bf16.mxu0 0
      %2508 = vmatmul.mubr.bf16.gmra.mrb[0].mxu0 %v2370
      %v2509 = vpop.f32.mrb[0].mxu0
      %v2510 = vadd.f32 0.0, %v2509
      %v2511 = vpop.f32.mrb[0].mxu0
      %v2512 = vpop.f32.mrb[0].mxu0
      %v2513 = vadd.f32 0.0, %v2512
      %v2514 = vpop.f32.mrb[0].mxu0
      %2515 = vmatprep.mubr.bf16.mxu0 0
      %2516 = vmatmul.mubr.bf16.gmra.mrb[0].mxu0 %v2373
      %v2517 = vpop.f32.mrb[0].mxu0
      %v2518 = vadd.f32 0.0, %v2517
      %v2519 = vpop.f32.mrb[0].mxu0
      %v2520 = vpop.f32.mrb[0].mxu0
      %v2521 = vadd.f32 0.0, %v2520
      %v2522 = vpop.f32.mrb[0].mxu0
      %2523 = vmatprep.mubr.bf16.mxu0 0
      %2524 = vmatmul.mubr.bf16.gmra.mrb[0].mxu0 %v2376
      %v2525 = vpop.f32.mrb[0].mxu0
      %v2526 = vadd.f32 0.0, %v2525
      %v2527 = vpop.f32.mrb[0].mxu0
      %v2528 = vpop.f32.mrb[0].mxu0
      %v2529 = vadd.f32 0.0, %v2528
      %v2530 = vpop.f32.mrb[0].mxu0
      %2531 = vmatprep.mubr.bf16.mxu0 0
      %2532 = vmatmul.mubr.bf16.gmra.mrb[0].mxu0 %v2379
      %v2533 = vpop.f32.mrb[0].mxu0
      %v2534 = vadd.f32 0.0, %v2533
      %v2535 = vpop.f32.mrb[0].mxu0
      %v2536 = vpop.f32.mrb[0].mxu0
      %v2537 = vadd.f32 0.0, %v2536
      %v2538 = vpop.f32.mrb[0].mxu0
      %2539 = vmatprep.mubr.bf16.mxu0 0
      %2540 = vmatmul.mubr.bf16.gmra.mrb[0].mxu0 %v2382
      %v2541 = vpop.f32.mrb[0].mxu0
      %v2542 = vadd.f32 0.0, %v2541
      %v2543 = vpop.f32.mrb[0].mxu0
      %v2544 = vpop.f32.mrb[0].mxu0
      %v2545 = vadd.f32 0.0, %v2544
      %v2546 = vpop.f32.mrb[0].mxu0
      %2547 = vdwg.mxu0
      %v2548 = vadd.f32 %v2126, %v2422
      %v2549 = vadd.f32 %v2127, %v2425
      %v2550 = vadd.f32 %v2128, %v2430
      %v2551 = vadd.f32 %v2129, %v2433
      %v2552 = vadd.f32 %v2130, %v2438
      %v2553 = vadd.f32 %v2131, %v2441
      %v2554 = vadd.f32 %v2132, %v2446
      %v2555 = vadd.f32 %v2133, %v2449
      %v2556 = vadd.f32 %v2134, %v2454
      %v2557 = vadd.f32 %v2135, %v2457
      %v2558 = vadd.f32 %v2136, %v2462
      %v2559 = vadd.f32 %v2137, %v2465
      %v2560 = vadd.f32 %v2138, %v2470
      %v2561 = vadd.f32 %v2139, %v2473
      %v2562 = vadd.f32 %v2140, %v2478
      %v2563 = vadd.f32 %v2141, %v2481
      %v2564 = vadd.f32 %v2142, %v2486
      %v2565 = vadd.f32 %v2143, %v2489
      %v2566 = vadd.f32 %v2144, %v2494
      %v2567 = vadd.f32 %v2145, %v2497
      %v2568 = vadd.f32 %v2146, %v2502
      %v2569 = vadd.f32 %v2147, %v2505
      %v2570 = vadd.f32 %v2148, %v2510
      %v2571 = vadd.f32 %v2149, %v2513
      %v2572 = vadd.f32 %v2150, %v2518
      %v2573 = vadd.f32 %v2151, %v2521
      %v2574 = vadd.f32 %v2152, %v2526
      %v2575 = vadd.f32 %v2153, %v2529
      %v2576 = vadd.f32 %v2154, %v2534
      %v2577 = vadd.f32 %v2155, %v2537
      %v2578 = vadd.f32 %v2156, %v2542
      %v2579 = vadd.f32 %v2157, %v2545
      %s2580 = scalar_lea.vmem %s165, 24
      %v2581 = vld [vmem:[%s2580] sm:$0xf]
      %v2582 = vld [vmem:[%s2580 + $0x4] sm:$0xf]
      %v2583 = vld [vmem:[%s2580 + $0xc] sm:$0xf]
      %v2584 = vld [vmem:[%s2580 + $0x10] sm:$0xf]
      %v2585 = vld [vmem:[%s2580 + $0x18] sm:$0xf]
      %v2586 = vld [vmem:[%s2580 + $0x1c] sm:$0xf]
      %v2587 = vld [vmem:[%s2580 + $0x24] sm:$0xf]
      %v2588 = vld [vmem:[%s2580 + $0x28] sm:$0xf]
      %v2589 = vld [vmem:[%s2580 + $0x30] sm:$0xf]
      %v2590 = vld [vmem:[%s2580 + $0x34] sm:$0xf]
      %v2591 = vld [vmem:[%s2580 + $0x3c] sm:$0xf]
      %v2592 = vld [vmem:[%s2580 + $0x40] sm:$0xf]
      %v2593 = vld [vmem:[%s2580 + $0x48] sm:$0xf]
      %v2594 = vld [vmem:[%s2580 + $0x4c] sm:$0xf]
      %v2595 = vld [vmem:[%s2580 + $0x54] sm:$0xf]
      %v2596 = vld [vmem:[%s2580 + $0x58] sm:$0xf]
      %v2597 = vld [vmem:[%s2580 + $0x60] sm:$0xf]
      %v2598 = vld [vmem:[%s2580 + $0x64] sm:$0xf]
      %v2599 = vld [vmem:[%s2580 + $0x6c] sm:$0xf]
      %v2600 = vld [vmem:[%s2580 + $0x70] sm:$0xf]
      %v2601 = vld [vmem:[%s2580 + $0x78] sm:$0xf]
      %v2602 = vld [vmem:[%s2580 + $0x7c] sm:$0xf]
      %v2603 = vld [vmem:[%s2580 + $0x84] sm:$0xf]
      %v2604 = vld [vmem:[%s2580 + $0x88] sm:$0xf]
      %v2605 = vld [vmem:[%s2580 + $0x90] sm:$0xf]
      %v2606 = vld [vmem:[%s2580 + $0x94] sm:$0xf]
      %v2607 = vld [vmem:[%s2580 + $0x9c] sm:$0xf]
      %v2608 = vld [vmem:[%s2580 + $0xa0] sm:$0xf]
      %v2609 = vld [vmem:[%s2580 + $0xa8] sm:$0xf]
      %v2610 = vld [vmem:[%s2580 + $0xac] sm:$0xf]
      %v2611 = vld [vmem:[%s2580 + $0xb4] sm:$0xf]
      %v2612 = vld [vmem:[%s2580 + $0xb8] sm:$0xf]
      %v2613 = vunpack.c.l.bf16 %v2581
      %v2614 = vunpack.c.l.bf16 %v2582
      %v2615 = vunpack.c.l.bf16 %v2583
      %v2616 = vunpack.c.l.bf16 %v2584
      %v2617 = vunpack.c.l.bf16 %v2585
      %v2618 = vunpack.c.l.bf16 %v2586
      %v2619 = vunpack.c.l.bf16 %v2587
      %v2620 = vunpack.c.l.bf16 %v2588
      %v2621 = vunpack.c.l.bf16 %v2589
      %v2622 = vunpack.c.l.bf16 %v2590
      %v2623 = vunpack.c.l.bf16 %v2591
      %v2624 = vunpack.c.l.bf16 %v2592
      %v2625 = vunpack.c.l.bf16 %v2593
      %v2626 = vunpack.c.l.bf16 %v2594
      %v2627 = vunpack.c.l.bf16 %v2595
      %v2628 = vunpack.c.l.bf16 %v2596
      %v2629 = vunpack.c.l.bf16 %v2597
      %v2630 = vunpack.c.l.bf16 %v2598
      %v2631 = vunpack.c.l.bf16 %v2599
      %v2632 = vunpack.c.l.bf16 %v2600
      %v2633 = vunpack.c.l.bf16 %v2601
      %v2634 = vunpack.c.l.bf16 %v2602
      %v2635 = vunpack.c.l.bf16 %v2603
      %v2636 = vunpack.c.l.bf16 %v2604
      %v2637 = vunpack.c.l.bf16 %v2605
      %v2638 = vunpack.c.l.bf16 %v2606
      %v2639 = vunpack.c.l.bf16 %v2607
      %v2640 = vunpack.c.l.bf16 %v2608
      %v2641 = vunpack.c.l.bf16 %v2609
      %v2642 = vunpack.c.l.bf16 %v2610
      %v2643 = vunpack.c.l.bf16 %v2611
      %v2644 = vunpack.c.l.bf16 %v2612
      %v2645 = vpack.c.bf16 %v2614, %v2613
      %v2646 = vpack.c.bf16 %v2616, %v2615
      %v2647 = vpack.c.bf16 %v2618, %v2617
      %v2648 = vpack.c.bf16 %v2620, %v2619
      %v2649 = vpack.c.bf16 %v2622, %v2621
      %v2650 = vpack.c.bf16 %v2624, %v2623
      %v2651 = vpack.c.bf16 %v2626, %v2625
      %v2652 = vpack.c.bf16 %v2628, %v2627
      %v2653 = vpack.c.bf16 %v2630, %v2629
      %v2654 = vpack.c.bf16 %v2632, %v2631
      %v2655 = vpack.c.bf16 %v2634, %v2633
      %v2656 = vpack.c.bf16 %v2636, %v2635
      %v2657 = vpack.c.bf16 %v2638, %v2637
      %v2658 = vpack.c.bf16 %v2640, %v2639
      %v2659 = vpack.c.bf16 %v2642, %v2641
      %v2660 = vpack.c.bf16 %v2644, %v2643
      %s2661 = scalar_lea.vmem %s1, 12
      %v2662 = vld [vmem:[%s2661] sm:$0x3]
      %v2664 = vsel %vm464, %v2645, 0
      %v2667 = vsel %vm464, %v2646, 0
      %v2670 = vsel %vm464, %v2647, 0
      %v2673 = vsel %vm464, %v2648, 0
      %v2676 = vsel %vm464, %v2649, 0
      %v2679 = vsel %vm464, %v2650, 0
      %v2682 = vsel %vm464, %v2651, 0
      %v2685 = vsel %vm464, %v2652, 0
      %v2688 = vsel %vm464, %v2653, 0
      %v2691 = vsel %vm464, %v2654, 0
      %v2694 = vsel %vm464, %v2655, 0
      %v2697 = vsel %vm464, %v2656, 0
      %v2700 = vsel %vm464, %v2657, 0
      %v2703 = vsel %vm464, %v2658, 0
      %v2706 = vsel %vm464, %v2659, 0
      %v2709 = vsel %vm464, %v2660, 0
      %v2712 = vsel %vm513, %v2662, 0
      %2714 = vmatprep.subr.bf16.mxu0 0
      %2715 = vmatpush1.bf16.msra.mxu0 %v2712
      %2716 = vmatprep.subr.bf16.mxu0 0
      %2717 = vmatpush1.bf16.msra.mxu0 0
      %2718 = vmatprep.subr.bf16.mxu0 0
      %2719 = vmatpush1.bf16.msra.mxu0 0
      %2720 = vmatprep.subr.bf16.mxu0 0
      %2721 = vmatpush1.bf16.msra.mxu0 0
      %2722 = vmatprep.subr.bf16.mxu0 0
      %2723 = vmatpush1.bf16.msra.mxu0 0
      %2724 = vmatprep.subr.bf16.mxu0 0
      %2725 = vmatpush1.bf16.msra.mxu0 0
      %2726 = vmatprep.subr.bf16.mxu0 0
      %2727 = vmatpush1.bf16.msra.mxu0 0
      %2728 = vmatprep.subr.bf16.mxu0 0
      %2729 = vmatpush1.bf16.msra.mxu0 0
      %2730 = vmatprep.subr.bf16.mxu0 0
      %2731 = vmatpush1.bf16.msra.mxu0 0
      %2732 = vmatprep.subr.bf16.mxu0 0
      %2733 = vmatpush1.bf16.msra.mxu0 0
      %2734 = vmatprep.subr.bf16.mxu0 0
      %2735 = vmatpush1.bf16.msra.mxu0 0
      %2736 = vmatprep.subr.bf16.mxu0 0
      %2737 = vmatpush1.bf16.msra.mxu0 0
      %2738 = vmatprep.subr.bf16.mxu0 0
      %2739 = vmatpush1.bf16.msra.mxu0 0
      %2740 = vmatprep.subr.bf16.mxu0 0
      %2741 = vmatpush1.bf16.msra.mxu0 0
      %2742 = vmatprep.subr.bf16.mxu0 0
      %2743 = vmatpush1.bf16.msra.mxu0 0
      %2744 = vmatprep.subr.bf16.mxu0 0
      %2745 = vmatpush1.bf16.msra.mxu0 0
      %2746 = vmatprep.mubr.bf16.mxu0 0
      %2747 = vmatmul.mubr.bf16.gmra.mrb[0].mxu0 %v2664
      %v2748 = vpop.f32.mrb[0].mxu0
      %v2749 = vadd.f32 0.0, %v2748
      %v2750 = vpop.f32.mrb[0].mxu0
      %v2751 = vpop.f32.mrb[0].mxu0
      %v2752 = vadd.f32 0.0, %v2751
      %v2753 = vpop.f32.mrb[0].mxu0
      %2754 = vmatprep.mubr.bf16.mxu0 0
      %2755 = vmatmul.mubr.bf16.gmra.mrb[0].mxu0 %v2667
      %v2756 = vpop.f32.mrb[0].mxu0
      %v2757 = vadd.f32 0.0, %v2756
      %v2758 = vpop.f32.mrb[0].mxu0
      %v2759 = vpop.f32.mrb[0].mxu0
      %v2760 = vadd.f32 0.0, %v2759
      %v2761 = vpop.f32.mrb[0].mxu0
      %2762 = vmatprep.mubr.bf16.mxu0 0
      %2763 = vmatmul.mubr.bf16.gmra.mrb[0].mxu0 %v2670
      %v2764 = vpop.f32.mrb[0].mxu0
      %v2765 = vadd.f32 0.0, %v2764
      %v2766 = vpop.f32.mrb[0].mxu0
      %v2767 = vpop.f32.mrb[0].mxu0
      %v2768 = vadd.f32 0.0, %v2767
      %v2769 = vpop.f32.mrb[0].mxu0
      %2770 = vmatprep.mubr.bf16.mxu0 0
      %2771 = vmatmul.mubr.bf16.gmra.mrb[0].mxu0 %v2673
      %v2772 = vpop.f32.mrb[0].mxu0
      %v2773 = vadd.f32 0.0, %v2772
      %v2774 = vpop.f32.mrb[0].mxu0
      %v2775 = vpop.f32.mrb[0].mxu0
      %v2776 = vadd.f32 0.0, %v2775
      %v2777 = vpop.f32.mrb[0].mxu0
      %2778 = vmatprep.mubr.bf16.mxu0 0
      %2779 = vmatmul.mubr.bf16.gmra.mrb[0].mxu0 %v2676
      %v2780 = vpop.f32.mrb[0].mxu0
      %v2781 = vadd.f32 0.0, %v2780
      %v2782 = vpop.f32.mrb[0].mxu0
      %v2783 = vpop.f32.mrb[0].mxu0
      %v2784 = vadd.f32 0.0, %v2783
      %v2785 = vpop.f32.mrb[0].mxu0
      %2786 = vmatprep.mubr.bf16.mxu0 0
      %2787 = vmatmul.mubr.bf16.gmra.mrb[0].mxu0 %v2679
      %v2788 = vpop.f32.mrb[0].mxu0
      %v2789 = vadd.f32 0.0, %v2788
      %v2790 = vpop.f32.mrb[0].mxu0
      %v2791 = vpop.f32.mrb[0].mxu0
      %v2792 = vadd.f32 0.0, %v2791
      %v2793 = vpop.f32.mrb[0].mxu0
      %2794 = vmatprep.mubr.bf16.mxu0 0
      %2795 = vmatmul.mubr.bf16.gmra.mrb[0].mxu0 %v2682
      %v2796 = vpop.f32.mrb[0].mxu0
      %v2797 = vadd.f32 0.0, %v2796
      %v2798 = vpop.f32.mrb[0].mxu0
      %v2799 = vpop.f32.mrb[0].mxu0
      %v2800 = vadd.f32 0.0, %v2799
      %v2801 = vpop.f32.mrb[0].mxu0
      %2802 = vmatprep.mubr.bf16.mxu0 0
      %2803 = vmatmul.mubr.bf16.gmra.mrb[0].mxu0 %v2685
      %v2804 = vpop.f32.mrb[0].mxu0
      %v2805 = vadd.f32 0.0, %v2804
      %v2806 = vpop.f32.mrb[0].mxu0
      %v2807 = vpop.f32.mrb[0].mxu0
      %v2808 = vadd.f32 0.0, %v2807
      %v2809 = vpop.f32.mrb[0].mxu0
      %2810 = vmatprep.mubr.bf16.mxu0 0
      %2811 = vmatmul.mubr.bf16.gmra.mrb[0].mxu0 %v2688
      %v2812 = vpop.f32.mrb[0].mxu0
      %v2813 = vadd.f32 0.0, %v2812
      %v2814 = vpop.f32.mrb[0].mxu0
      %v2815 = vpop.f32.mrb[0].mxu0
      %v2816 = vadd.f32 0.0, %v2815
      %v2817 = vpop.f32.mrb[0].mxu0
      %2818 = vmatprep.mubr.bf16.mxu0 0
      %2819 = vmatmul.mubr.bf16.gmra.mrb[0].mxu0 %v2691
      %v2820 = vpop.f32.mrb[0].mxu0
      %v2821 = vadd.f32 0.0, %v2820
      %v2822 = vpop.f32.mrb[0].mxu0
      %v2823 = vpop.f32.mrb[0].mxu0
      %v2824 = vadd.f32 0.0, %v2823
      %v2825 = vpop.f32.mrb[0].mxu0
      %2826 = vmatprep.mubr.bf16.mxu0 0
      %2827 = vmatmul.mubr.bf16.gmra.mrb[0].mxu0 %v2694
      %v2828 = vpop.f32.mrb[0].mxu0
      %v2829 = vadd.f32 0.0, %v2828
      %v2830 = vpop.f32.mrb[0].mxu0
      %v2831 = vpop.f32.mrb[0].mxu0
      %v2832 = vadd.f32 0.0, %v2831
      %v2833 = vpop.f32.mrb[0].mxu0
      %2834 = vmatprep.mubr.bf16.mxu0 0
      %2835 = vmatmul.mubr.bf16.gmra.mrb[0].mxu0 %v2697
      %v2836 = vpop.f32.mrb[0].mxu0
      %v2837 = vadd.f32 0.0, %v2836
      %v2838 = vpop.f32.mrb[0].mxu0
      %v2839 = vpop.f32.mrb[0].mxu0
      %v2840 = vadd.f32 0.0, %v2839
      %v2841 = vpop.f32.mrb[0].mxu0
      %2842 = vmatprep.mubr.bf16.mxu0 0
      %2843 = vmatmul.mubr.bf16.gmra.mrb[0].mxu0 %v2700
      %v2844 = vpop.f32.mrb[0].mxu0
      %v2845 = vadd.f32 0.0, %v2844
      %v2846 = vpop.f32.mrb[0].mxu0
      %v2847 = vpop.f32.mrb[0].mxu0
      %v2848 = vadd.f32 0.0, %v2847
      %v2849 = vpop.f32.mrb[0].mxu0
      %2850 = vmatprep.mubr.bf16.mxu0 0
      %2851 = vmatmul.mubr.bf16.gmra.mrb[0].mxu0 %v2703
      %v2852 = vpop.f32.mrb[0].mxu0
      %v2853 = vadd.f32 0.0, %v2852
      %v2854 = vpop.f32.mrb[0].mxu0
      %v2855 = vpop.f32.mrb[0].mxu0
      %v2856 = vadd.f32 0.0, %v2855
      %v2857 = vpop.f32.mrb[0].mxu0
      %2858 = vmatprep.mubr.bf16.mxu0 0
      %2859 = vmatmul.mubr.bf16.gmra.mrb[0].mxu0 %v2706
      %v2860 = vpop.f32.mrb[0].mxu0
      %v2861 = vadd.f32 0.0, %v2860
      %v2862 = vpop.f32.mrb[0].mxu0
      %v2863 = vpop.f32.mrb[0].mxu0
      %v2864 = vadd.f32 0.0, %v2863
      %v2865 = vpop.f32.mrb[0].mxu0
      %2866 = vmatprep.mubr.bf16.mxu0 0
      %2867 = vmatmul.mubr.bf16.gmra.mrb[0].mxu0 %v2709
      %v2868 = vpop.f32.mrb[0].mxu0
      %v2869 = vadd.f32 0.0, %v2868
      %v2870 = vpop.f32.mrb[0].mxu0
      %v2871 = vpop.f32.mrb[0].mxu0
      %v2872 = vadd.f32 0.0, %v2871
      %v2873 = vpop.f32.mrb[0].mxu0
      %2874 = vdwg.mxu0
      %v2875 = vadd.f32 %v2548, %v2749
      %v2876 = vadd.f32 %v2549, %v2752
      %v2877 = vadd.f32 %v2550, %v2757
      %v2878 = vadd.f32 %v2551, %v2760
      %v2879 = vadd.f32 %v2552, %v2765
      %v2880 = vadd.f32 %v2553, %v2768
      %v2881 = vadd.f32 %v2554, %v2773
      %v2882 = vadd.f32 %v2555, %v2776
      %v2883 = vadd.f32 %v2556, %v2781
      %v2884 = vadd.f32 %v2557, %v2784
      %v2885 = vadd.f32 %v2558, %v2789
      %v2886 = vadd.f32 %v2559, %v2792
      %v2887 = vadd.f32 %v2560, %v2797
      %v2888 = vadd.f32 %v2561, %v2800
      %v2889 = vadd.f32 %v2562, %v2805
      %v2890 = vadd.f32 %v2563, %v2808
      %v2891 = vadd.f32 %v2564, %v2813
      %v2892 = vadd.f32 %v2565, %v2816
      %v2893 = vadd.f32 %v2566, %v2821
      %v2894 = vadd.f32 %v2567, %v2824
      %v2895 = vadd.f32 %v2568, %v2829
      %v2896 = vadd.f32 %v2569, %v2832
      %v2897 = vadd.f32 %v2570, %v2837
      %v2898 = vadd.f32 %v2571, %v2840
      %v2899 = vadd.f32 %v2572, %v2845
      %v2900 = vadd.f32 %v2573, %v2848
      %v2901 = vadd.f32 %v2574, %v2853
      %v2902 = vadd.f32 %v2575, %v2856
      %v2903 = vadd.f32 %v2576, %v2861
      %v2904 = vadd.f32 %v2577, %v2864
      %v2905 = vadd.f32 %v2578, %v2869
      %v2906 = vadd.f32 %v2579, %v2872
      %v2907 = vld [vmem:[%s2580] sm:$0xf]
      %v2908 = vld [vmem:[%s2580 + $0x4] sm:$0xf]
      %v2909 = vld [vmem:[%s2580 + $0x8] sm:$0x1]
      %v2910 = vld [vmem:[%s2580 + $0xc] sm:$0xf]
      %v2911 = vld [vmem:[%s2580 + $0x10] sm:$0xf]
      %v2912 = vld [vmem:[%s2580 + $0x14] sm:$0x1]
      %v2913 = vld [vmem:[%s2580 + $0x18] sm:$0xf]
      %v2914 = vld [vmem:[%s2580 + $0x1c] sm:$0xf]
      %v2915 = vld [vmem:[%s2580 + $0x20] sm:$0x1]
      %v2916 = vld [vmem:[%s2580 + $0x24] sm:$0xf]
      %v2917 = vld [vmem:[%s2580 + $0x28] sm:$0xf]
      %v2918 = vld [vmem:[%s2580 + $0x2c] sm:$0x1]
      %v2919 = vld [vmem:[%s2580 + $0x30] sm:$0xf]
      %v2920 = vld [vmem:[%s2580 + $0x34] sm:$0xf]
      %v2921 = vld [vmem:[%s2580 + $0x38] sm:$0x1]
      %v2922 = vld [vmem:[%s2580 + $0x3c] sm:$0xf]
      %v2923 = vld [vmem:[%s2580 + $0x40] sm:$0xf]
      %v2924 = vld [vmem:[%s2580 + $0x44] sm:$0x1]
      %v2925 = vld [vmem:[%s2580 + $0x48] sm:$0xf]
      %v2926 = vld [vmem:[%s2580 + $0x4c] sm:$0xf]
      %v2927 = vld [vmem:[%s2580 + $0x50] sm:$0x1]
      %v2928 = vld [vmem:[%s2580 + $0x54] sm:$0xf]
      %v2929 = vld [vmem:[%s2580 + $0x58] sm:$0xf]
      %v2930 = vld [vmem:[%s2580 + $0x5c] sm:$0x1]
      %v2931 = vld [vmem:[%s2580 + $0x60] sm:$0xf]
      %v2932 = vld [vmem:[%s2580 + $0x64] sm:$0xf]
      %v2933 = vld [vmem:[%s2580 + $0x68] sm:$0x1]
      %v2934 = vld [vmem:[%s2580 + $0x6c] sm:$0xf]
      %v2935 = vld [vmem:[%s2580 + $0x70] sm:$0xf]
      %v2936 = vld [vmem:[%s2580 + $0x74] sm:$0x1]
      %v2937 = vld [vmem:[%s2580 + $0x78] sm:$0xf]
      %v2938 = vld [vmem:[%s2580 + $0x7c] sm:$0xf]
      %v2939 = vld [vmem:[%s2580 + $0x80] sm:$0x1]
      %v2940 = vld [vmem:[%s2580 + $0x84] sm:$0xf]
      %v2941 = vld [vmem:[%s2580 + $0x88] sm:$0xf]
      %v2942 = vld [vmem:[%s2580 + $0x8c] sm:$0x1]
      %v2943 = vld [vmem:[%s2580 + $0x90] sm:$0xf]
      %v2944 = vld [vmem:[%s2580 + $0x94] sm:$0xf]
      %v2945 = vld [vmem:[%s2580 + $0x98] sm:$0x1]
      %v2946 = vld [vmem:[%s2580 + $0x9c] sm:$0xf]
      %v2947 = vld [vmem:[%s2580 + $0xa0] sm:$0xf]
      %v2948 = vld [vmem:[%s2580 + $0xa4] sm:$0x1]
      %v2949 = vld [vmem:[%s2580 + $0xa8] sm:$0xf]
      %v2950 = vld [vmem:[%s2580 + $0xac] sm:$0xf]
      %v2951 = vld [vmem:[%s2580 + $0xb0] sm:$0x1]
      %v2952 = vld [vmem:[%s2580 + $0xb4] sm:$0xf]
      %v2953 = vld [vmem:[%s2580 + $0xb8] sm:$0xf]
      %v2954 = vld [vmem:[%s2580 + $0xbc] sm:$0x1]
      %v2955 = vunpack.c.l.bf16 %v2907
      %v2956 = vunpack.c.l.bf16 %v2908
      %v2957 = vunpack.c.l.bf16 %v2909
      %v2958 = vunpack.c.l.bf16 %v2910
      %v2959 = vunpack.c.l.bf16 %v2911
      %v2960 = vunpack.c.l.bf16 %v2912
      %v2961 = vunpack.c.l.bf16 %v2913
      %v2962 = vunpack.c.l.bf16 %v2914
      %v2963 = vunpack.c.l.bf16 %v2915
      %v2964 = vunpack.c.l.bf16 %v2916
      %v2965 = vunpack.c.l.bf16 %v2917
      %v2966 = vunpack.c.l.bf16 %v2918
      %v2967 = vunpack.c.l.bf16 %v2919
      %v2968 = vunpack.c.l.bf16 %v2920
      %v2969 = vunpack.c.l.bf16 %v2921
      %v2970 = vunpack.c.l.bf16 %v2922
      %v2971 = vunpack.c.l.bf16 %v2923
      %v2972 = vunpack.c.l.bf16 %v2924
      %v2973 = vunpack.c.l.bf16 %v2925
      %v2974 = vunpack.c.l.bf16 %v2926
      %v2975 = vunpack.c.l.bf16 %v2927
      %v2976 = vunpack.c.l.bf16 %v2928
      %v2977 = vunpack.c.l.bf16 %v2929
      %v2978 = vunpack.c.l.bf16 %v2930
      %v2979 = vunpack.c.l.bf16 %v2931
      %v2980 = vunpack.c.l.bf16 %v2932
      %v2981 = vunpack.c.l.bf16 %v2933
      %v2982 = vunpack.c.l.bf16 %v2934
      %v2983 = vunpack.c.l.bf16 %v2935
      %v2984 = vunpack.c.l.bf16 %v2936
      %v2985 = vunpack.c.l.bf16 %v2937
      %v2986 = vunpack.c.l.bf16 %v2938
      %v2987 = vunpack.c.l.bf16 %v2939
      %v2988 = vunpack.c.l.bf16 %v2940
      %v2989 = vunpack.c.l.bf16 %v2941
      %v2990 = vunpack.c.l.bf16 %v2942
      %v2991 = vunpack.c.l.bf16 %v2943
      %v2992 = vunpack.c.l.bf16 %v2944
      %v2993 = vunpack.c.l.bf16 %v2945
      %v2994 = vunpack.c.l.bf16 %v2946
      %v2995 = vunpack.c.l.bf16 %v2947
      %v2996 = vunpack.c.l.bf16 %v2948
      %v2997 = vunpack.c.l.bf16 %v2949
      %v2998 = vunpack.c.l.bf16 %v2950
      %v2999 = vunpack.c.l.bf16 %v2951
      %v3000 = vunpack.c.l.bf16 %v2952
      %v3001 = vunpack.c.l.bf16 %v2953
      %v3002 = vunpack.c.l.bf16 %v2954
      %v3051 = vrot.slane %v2955, 1
      %v3052 = vrot.slane %v2956, 1
      %v3053 = vsel %vm333, %v3051, %v3052
      %v3054 = vrot.slane %v2957, 1
      %v3055 = vsel %vm333, %v3052, %v3054
      %v3056 = vrot.slane %v2958, 1
      %v3057 = vrot.slane %v2959, 1
      %v3058 = vsel %vm333, %v3056, %v3057
      %v3059 = vrot.slane %v2960, 1
      %v3060 = vsel %vm333, %v3057, %v3059
      %v3061 = vrot.slane %v2961, 1
      %v3062 = vrot.slane %v2962, 1
      %v3063 = vsel %vm333, %v3061, %v3062
      %v3064 = vrot.slane %v2963, 1
      %v3065 = vsel %vm333, %v3062, %v3064
      %v3066 = vrot.slane %v2964, 1
      %v3067 = vrot.slane %v2965, 1
      %v3068 = vsel %vm333, %v3066, %v3067
      %v3069 = vrot.slane %v2966, 1
      %v3070 = vsel %vm333, %v3067, %v3069
      %v3071 = vrot.slane %v2967, 1
      %v3072 = vrot.slane %v2968, 1
      %v3073 = vsel %vm333, %v3071, %v3072
      %v3074 = vrot.slane %v2969, 1
      %v3075 = vsel %vm333, %v3072, %v3074
      %v3076 = vrot.slane %v2970, 1
      %v3077 = vrot.slane %v2971, 1
      %v3078 = vsel %vm333, %v3076, %v3077
      %v3079 = vrot.slane %v2972, 1
      %v3080 = vsel %vm333, %v3077, %v3079
      %v3081 = vrot.slane %v2973, 1
      %v3082 = vrot.slane %v2974, 1
      %v3083 = vsel %vm333, %v3081, %v3082
      %v3084 = vrot.slane %v2975, 1
      %v3085 = vsel %vm333, %v3082, %v3084
      %v3086 = vrot.slane %v2976, 1
      %v3087 = vrot.slane %v2977, 1
      %v3088 = vsel %vm333, %v3086, %v3087
      %v3089 = vrot.slane %v2978, 1
      %v3090 = vsel %vm333, %v3087, %v3089
      %v3091 = vrot.slane %v2979, 1
      %v3092 = vrot.slane %v2980, 1
      %v3093 = vsel %vm333, %v3091, %v3092
      %v3094 = vrot.slane %v2981, 1
      %v3095 = vsel %vm333, %v3092, %v3094
      %v3096 = vrot.slane %v2982, 1
      %v3097 = vrot.slane %v2983, 1
      %v3098 = vsel %vm333, %v3096, %v3097
      %v3099 = vrot.slane %v2984, 1
      %v3100 = vsel %vm333, %v3097, %v3099
      %v3101 = vrot.slane %v2985, 1
      %v3102 = vrot.slane %v2986, 1
      %v3103 = vsel %vm333, %v3101, %v3102
      %v3104 = vrot.slane %v2987, 1
      %v3105 = vsel %vm333, %v3102, %v3104
      %v3106 = vrot.slane %v2988, 1
      %v3107 = vrot.slane %v2989, 1
      %v3108 = vsel %vm333, %v3106, %v3107
      %v3109 = vrot.slane %v2990, 1
      %v3110 = vsel %vm333, %v3107, %v3109
      %v3111 = vrot.slane %v2991, 1
      %v3112 = vrot.slane %v2992, 1
      %v3113 = vsel %vm333, %v3111, %v3112
      %v3114 = vrot.slane %v2993, 1
      %v3115 = vsel %vm333, %v3112, %v3114
      %v3116 = vrot.slane %v2994, 1
      %v3117 = vrot.slane %v2995, 1
      %v3118 = vsel %vm333, %v3116, %v3117
      %v3119 = vrot.slane %v2996, 1
      %v3120 = vsel %vm333, %v3117, %v3119
      %v3121 = vrot.slane %v2997, 1
      %v3122 = vrot.slane %v2998, 1
      %v3123 = vsel %vm333, %v3121, %v3122
      %v3124 = vrot.slane %v2999, 1
      %v3125 = vsel %vm333, %v3122, %v3124
      %v3126 = vrot.slane %v3000, 1
      %v3127 = vrot.slane %v3001, 1
      %v3128 = vsel %vm333, %v3126, %v3127
      %v3129 = vrot.slane %v3002, 1
      %v3130 = vsel %vm333, %v3127, %v3129
      %v3163 = vpack.c.bf16 %v3055, %v3053
      %v3164 = vpack.c.bf16 %v3060, %v3058
      %v3165 = vpack.c.bf16 %v3065, %v3063
      %v3166 = vpack.c.bf16 %v3070, %v3068
      %v3167 = vpack.c.bf16 %v3075, %v3073
      %v3168 = vpack.c.bf16 %v3080, %v3078
      %v3169 = vpack.c.bf16 %v3085, %v3083
      %v3170 = vpack.c.bf16 %v3090, %v3088
      %v3171 = vpack.c.bf16 %v3095, %v3093
      %v3172 = vpack.c.bf16 %v3100, %v3098
      %v3173 = vpack.c.bf16 %v3105, %v3103
      %v3174 = vpack.c.bf16 %v3110, %v3108
      %v3175 = vpack.c.bf16 %v3115, %v3113
      %v3176 = vpack.c.bf16 %v3120, %v3118
      %v3177 = vpack.c.bf16 %v3125, %v3123
      %v3178 = vpack.c.bf16 %v3130, %v3128
      %s3179 = scalar_lea.vmem %s1, 14
      %v3180 = vld [vmem:[%s3179] sm:$0x3]
      %v3182 = vsel %vm464, %v3163, 0
      %v3185 = vsel %vm464, %v3164, 0
      %v3188 = vsel %vm464, %v3165, 0
      %v3191 = vsel %vm464, %v3166, 0
      %v3194 = vsel %vm464, %v3167, 0
      %v3197 = vsel %vm464, %v3168, 0
      %v3200 = vsel %vm464, %v3169, 0
      %v3203 = vsel %vm464, %v3170, 0
      %v3206 = vsel %vm464, %v3171, 0
      %v3209 = vsel %vm464, %v3172, 0
      %v3212 = vsel %vm464, %v3173, 0
      %v3215 = vsel %vm464, %v3174, 0
      %v3218 = vsel %vm464, %v3175, 0
      %v3221 = vsel %vm464, %v3176, 0
      %v3224 = vsel %vm464, %v3177, 0
      %v3227 = vsel %vm464, %v3178, 0
      %v3230 = vsel %vm513, %v3180, 0
      %3232 = vmatprep.subr.bf16.mxu0 0
      %3233 = vmatpush1.bf16.msra.mxu0 %v3230
      %3234 = vmatprep.subr.bf16.mxu0 0
      %3235 = vmatpush1.bf16.msra.mxu0 0
      %3236 = vmatprep.subr.bf16.mxu0 0
      %3237 = vmatpush1.bf16.msra.mxu0 0
      %3238 = vmatprep.subr.bf16.mxu0 0
      %3239 = vmatpush1.bf16.msra.mxu0 0
      %3240 = vmatprep.subr.bf16.mxu0 0
      %3241 = vmatpush1.bf16.msra.mxu0 0
      %3242 = vmatprep.subr.bf16.mxu0 0
      %3243 = vmatpush1.bf16.msra.mxu0 0
      %3244 = vmatprep.subr.bf16.mxu0 0
      %3245 = vmatpush1.bf16.msra.mxu0 0
      %3246 = vmatprep.subr.bf16.mxu0 0
      %3247 = vmatpush1.bf16.msra.mxu0 0
      %3248 = vmatprep.subr.bf16.mxu0 0
      %3249 = vmatpush1.bf16.msra.mxu0 0
      %3250 = vmatprep.subr.bf16.mxu0 0
      %3251 = vmatpush1.bf16.msra.mxu0 0
      %3252 = vmatprep.subr.bf16.mxu0 0
      %3253 = vmatpush1.bf16.msra.mxu0 0
      %3254 = vmatprep.subr.bf16.mxu0 0
      %3255 = vmatpush1.bf16.msra.mxu0 0
      %3256 = vmatprep.subr.bf16.mxu0 0
      %3257 = vmatpush1.bf16.msra.mxu0 0
      %3258 = vmatprep.subr.bf16.mxu0 0
      %3259 = vmatpush1.bf16.msra.mxu0 0
      %3260 = vmatprep.subr.bf16.mxu0 0
      %3261 = vmatpush1.bf16.msra.mxu0 0
      %3262 = vmatprep.subr.bf16.mxu0 0
      %3263 = vmatpush1.bf16.msra.mxu0 0
      %3264 = vmatprep.mubr.bf16.mxu0 0
      %3265 = vmatmul.mubr.bf16.gmra.mrb[0].mxu0 %v3182
      %v3266 = vpop.f32.mrb[0].mxu0
      %v3267 = vadd.f32 0.0, %v3266
      %v3268 = vpop.f32.mrb[0].mxu0
      %v3269 = vpop.f32.mrb[0].mxu0
      %v3270 = vadd.f32 0.0, %v3269
      %v3271 = vpop.f32.mrb[0].mxu0
      %3272 = vmatprep.mubr.bf16.mxu0 0
      %3273 = vmatmul.mubr.bf16.gmra.mrb[0].mxu0 %v3185
      %v3274 = vpop.f32.mrb[0].mxu0
      %v3275 = vadd.f32 0.0, %v3274
      %v3276 = vpop.f32.mrb[0].mxu0
      %v3277 = vpop.f32.mrb[0].mxu0
      %v3278 = vadd.f32 0.0, %v3277
      %v3279 = vpop.f32.mrb[0].mxu0
      %3280 = vmatprep.mubr.bf16.mxu0 0
      %3281 = vmatmul.mubr.bf16.gmra.mrb[0].mxu0 %v3188
      %v3282 = vpop.f32.mrb[0].mxu0
      %v3283 = vadd.f32 0.0, %v3282
      %v3284 = vpop.f32.mrb[0].mxu0
      %v3285 = vpop.f32.mrb[0].mxu0
      %v3286 = vadd.f32 0.0, %v3285
      %v3287 = vpop.f32.mrb[0].mxu0
      %3288 = vmatprep.mubr.bf16.mxu0 0
      %3289 = vmatmul.mubr.bf16.gmra.mrb[0].mxu0 %v3191
      %v3290 = vpop.f32.mrb[0].mxu0
      %v3291 = vadd.f32 0.0, %v3290
      %v3292 = vpop.f32.mrb[0].mxu0
      %v3293 = vpop.f32.mrb[0].mxu0
      %v3294 = vadd.f32 0.0, %v3293
      %v3295 = vpop.f32.mrb[0].mxu0
      %3296 = vmatprep.mubr.bf16.mxu0 0
      %3297 = vmatmul.mubr.bf16.gmra.mrb[0].mxu0 %v3194
      %v3298 = vpop.f32.mrb[0].mxu0
      %v3299 = vadd.f32 0.0, %v3298
      %v3300 = vpop.f32.mrb[0].mxu0
      %v3301 = vpop.f32.mrb[0].mxu0
      %v3302 = vadd.f32 0.0, %v3301
      %v3303 = vpop.f32.mrb[0].mxu0
      %3304 = vmatprep.mubr.bf16.mxu0 0
      %3305 = vmatmul.mubr.bf16.gmra.mrb[0].mxu0 %v3197
      %v3306 = vpop.f32.mrb[0].mxu0
      %v3307 = vadd.f32 0.0, %v3306
      %v3308 = vpop.f32.mrb[0].mxu0
      %v3309 = vpop.f32.mrb[0].mxu0
      %v3310 = vadd.f32 0.0, %v3309
      %v3311 = vpop.f32.mrb[0].mxu0
      %3312 = vmatprep.mubr.bf16.mxu0 0
      %3313 = vmatmul.mubr.bf16.gmra.mrb[0].mxu0 %v3200
      %v3314 = vpop.f32.mrb[0].mxu0
      %v3315 = vadd.f32 0.0, %v3314
      %v3316 = vpop.f32.mrb[0].mxu0
      %v3317 = vpop.f32.mrb[0].mxu0
      %v3318 = vadd.f32 0.0, %v3317
      %v3319 = vpop.f32.mrb[0].mxu0
      %3320 = vmatprep.mubr.bf16.mxu0 0
      %3321 = vmatmul.mubr.bf16.gmra.mrb[0].mxu0 %v3203
      %v3322 = vpop.f32.mrb[0].mxu0
      %v3323 = vadd.f32 0.0, %v3322
      %v3324 = vpop.f32.mrb[0].mxu0
      %v3325 = vpop.f32.mrb[0].mxu0
      %v3326 = vadd.f32 0.0, %v3325
      %v3327 = vpop.f32.mrb[0].mxu0
      %3328 = vmatprep.mubr.bf16.mxu0 0
      %3329 = vmatmul.mubr.bf16.gmra.mrb[0].mxu0 %v3206
      %v3330 = vpop.f32.mrb[0].mxu0
      %v3331 = vadd.f32 0.0, %v3330
      %v3332 = vpop.f32.mrb[0].mxu0
      %v3333 = vpop.f32.mrb[0].mxu0
      %v3334 = vadd.f32 0.0, %v3333
      %v3335 = vpop.f32.mrb[0].mxu0
      %3336 = vmatprep.mubr.bf16.mxu0 0
      %3337 = vmatmul.mubr.bf16.gmra.mrb[0].mxu0 %v3209
      %v3338 = vpop.f32.mrb[0].mxu0
      %v3339 = vadd.f32 0.0, %v3338
      %v3340 = vpop.f32.mrb[0].mxu0
      %v3341 = vpop.f32.mrb[0].mxu0
      %v3342 = vadd.f32 0.0, %v3341
      %v3343 = vpop.f32.mrb[0].mxu0
      %3344 = vmatprep.mubr.bf16.mxu0 0
      %3345 = vmatmul.mubr.bf16.gmra.mrb[0].mxu0 %v3212
      %v3346 = vpop.f32.mrb[0].mxu0
      %v3347 = vadd.f32 0.0, %v3346
      %v3348 = vpop.f32.mrb[0].mxu0
      %v3349 = vpop.f32.mrb[0].mxu0
      %v3350 = vadd.f32 0.0, %v3349
      %v3351 = vpop.f32.mrb[0].mxu0
      %3352 = vmatprep.mubr.bf16.mxu0 0
      %3353 = vmatmul.mubr.bf16.gmra.mrb[0].mxu0 %v3215
      %v3354 = vpop.f32.mrb[0].mxu0
      %v3355 = vadd.f32 0.0, %v3354
      %v3356 = vpop.f32.mrb[0].mxu0
      %v3357 = vpop.f32.mrb[0].mxu0
      %v3358 = vadd.f32 0.0, %v3357
      %v3359 = vpop.f32.mrb[0].mxu0
      %3360 = vmatprep.mubr.bf16.mxu0 0
      %3361 = vmatmul.mubr.bf16.gmra.mrb[0].mxu0 %v3218
      %v3362 = vpop.f32.mrb[0].mxu0
      %v3363 = vadd.f32 0.0, %v3362
      %v3364 = vpop.f32.mrb[0].mxu0
      %v3365 = vpop.f32.mrb[0].mxu0
      %v3366 = vadd.f32 0.0, %v3365
      %v3367 = vpop.f32.mrb[0].mxu0
      %3368 = vmatprep.mubr.bf16.mxu0 0
      %3369 = vmatmul.mubr.bf16.gmra.mrb[0].mxu0 %v3221
      %v3370 = vpop.f32.mrb[0].mxu0
      %v3371 = vadd.f32 0.0, %v3370
      %v3372 = vpop.f32.mrb[0].mxu0
      %v3373 = vpop.f32.mrb[0].mxu0
      %v3374 = vadd.f32 0.0, %v3373
      %v3375 = vpop.f32.mrb[0].mxu0
      %3376 = vmatprep.mubr.bf16.mxu0 0
      %3377 = vmatmul.mubr.bf16.gmra.mrb[0].mxu0 %v3224
      %v3378 = vpop.f32.mrb[0].mxu0
      %v3379 = vadd.f32 0.0, %v3378
      %v3380 = vpop.f32.mrb[0].mxu0
      %v3381 = vpop.f32.mrb[0].mxu0
      %v3382 = vadd.f32 0.0, %v3381
      %v3383 = vpop.f32.mrb[0].mxu0
      %3384 = vmatprep.mubr.bf16.mxu0 0
      %3385 = vmatmul.mubr.bf16.gmra.mrb[0].mxu0 %v3227
      %v3386 = vpop.f32.mrb[0].mxu0
      %v3387 = vadd.f32 0.0, %v3386
      %v3388 = vpop.f32.mrb[0].mxu0
      %v3389 = vpop.f32.mrb[0].mxu0
      %v3390 = vadd.f32 0.0, %v3389
      %v3391 = vpop.f32.mrb[0].mxu0
      %3392 = vdwg.mxu0
      %v3393 = vadd.f32 %v2875, %v3267
      %v3394 = vadd.f32 %v2876, %v3270
      %v3395 = vadd.f32 %v2877, %v3275
      %v3396 = vadd.f32 %v2878, %v3278
      %v3397 = vadd.f32 %v2879, %v3283
      %v3398 = vadd.f32 %v2880, %v3286
      %v3399 = vadd.f32 %v2881, %v3291
      %v3400 = vadd.f32 %v2882, %v3294
      %v3401 = vadd.f32 %v2883, %v3299
      %v3402 = vadd.f32 %v2884, %v3302
      %v3403 = vadd.f32 %v2885, %v3307
      %v3404 = vadd.f32 %v2886, %v3310
      %v3405 = vadd.f32 %v2887, %v3315
      %v3406 = vadd.f32 %v2888, %v3318
      %v3407 = vadd.f32 %v2889, %v3323
      %v3408 = vadd.f32 %v2890, %v3326
      %v3409 = vadd.f32 %v2891, %v3331
      %v3410 = vadd.f32 %v2892, %v3334
      %v3411 = vadd.f32 %v2893, %v3339
      %v3412 = vadd.f32 %v2894, %v3342
      %v3413 = vadd.f32 %v2895, %v3347
      %v3414 = vadd.f32 %v2896, %v3350
      %v3415 = vadd.f32 %v2897, %v3355
      %v3416 = vadd.f32 %v2898, %v3358
      %v3417 = vadd.f32 %v2899, %v3363
      %v3418 = vadd.f32 %v2900, %v3366
      %v3419 = vadd.f32 %v2901, %v3371
      %v3420 = vadd.f32 %v2902, %v3374
      %v3421 = vadd.f32 %v2903, %v3379
      %v3422 = vadd.f32 %v2904, %v3382
      %v3423 = vadd.f32 %v2905, %v3387
      %v3424 = vadd.f32 %v2906, %v3390
      %v3425 = vld [vmem:[%s2580] sm:$0xe]
      %v3426 = vld [vmem:[%s2580 + $0xc] sm:$0xe]
      %v3427 = vld [vmem:[%s2580 + $0x18] sm:$0xe]
      %v3428 = vld [vmem:[%s2580 + $0x24] sm:$0xe]
      %v3429 = vld [vmem:[%s2580 + $0x30] sm:$0xe]
      %v3430 = vld [vmem:[%s2580 + $0x3c] sm:$0xe]
      %v3431 = vld [vmem:[%s2580 + $0x48] sm:$0xe]
      %v3432 = vld [vmem:[%s2580 + $0x54] sm:$0xe]
      %v3433 = vld [vmem:[%s2580 + $0x60] sm:$0xe]
      %v3434 = vld [vmem:[%s2580 + $0x6c] sm:$0xe]
      %v3435 = vld [vmem:[%s2580 + $0x78] sm:$0xe]
      %v3436 = vld [vmem:[%s2580 + $0x84] sm:$0xe]
      %v3437 = vld [vmem:[%s2580 + $0x90] sm:$0xe]
      %v3438 = vld [vmem:[%s2580 + $0x9c] sm:$0xe]
      %v3439 = vld [vmem:[%s2580 + $0xa8] sm:$0xe]
      %v3440 = vld [vmem:[%s2580 + $0xb4] sm:$0xe]
      %v3441 = vunpack.c.l.bf16 %v3425
      %v3442 = vunpack.c.l.bf16 %v3426
      %v3443 = vunpack.c.l.bf16 %v3427
      %v3444 = vunpack.c.l.bf16 %v3428
      %v3445 = vunpack.c.l.bf16 %v3429
      %v3446 = vunpack.c.l.bf16 %v3430
      %v3447 = vunpack.c.l.bf16 %v3431
      %v3448 = vunpack.c.l.bf16 %v3432
      %v3449 = vunpack.c.l.bf16 %v3433
      %v3450 = vunpack.c.l.bf16 %v3434
      %v3451 = vunpack.c.l.bf16 %v3435
      %v3452 = vunpack.c.l.bf16 %v3436
      %v3453 = vunpack.c.l.bf16 %v3437
      %v3454 = vunpack.c.l.bf16 %v3438
      %v3455 = vunpack.c.l.bf16 %v3439
      %v3456 = vunpack.c.l.bf16 %v3440
      %v3473 = vrot.slane %v3441, 2
      %v3474 = vrot.slane %v2956, 2
      %v3475 = vsel %vm938, %v3473, %v3474
      %v3476 = vrot.slane %v2957, 2
      %v3477 = vsel %vm938, %v3474, %v3476
      %v3478 = vrot.slane %v3442, 2
      %v3479 = vrot.slane %v2959, 2
      %v3480 = vsel %vm938, %v3478, %v3479
      %v3481 = vrot.slane %v2960, 2
      %v3482 = vsel %vm938, %v3479, %v3481
      %v3483 = vrot.slane %v3443, 2
      %v3484 = vrot.slane %v2962, 2
      %v3485 = vsel %vm938, %v3483, %v3484
      %v3486 = vrot.slane %v2963, 2
      %v3487 = vsel %vm938, %v3484, %v3486
      %v3488 = vrot.slane %v3444, 2
      %v3489 = vrot.slane %v2965, 2
      %v3490 = vsel %vm938, %v3488, %v3489
      %v3491 = vrot.slane %v2966, 2
      %v3492 = vsel %vm938, %v3489, %v3491
      %v3493 = vrot.slane %v3445, 2
      %v3494 = vrot.slane %v2968, 2
      %v3495 = vsel %vm938, %v3493, %v3494
      %v3496 = vrot.slane %v2969, 2
      %v3497 = vsel %vm938, %v3494, %v3496
      %v3498 = vrot.slane %v3446, 2
      %v3499 = vrot.slane %v2971, 2
      %v3500 = vsel %vm938, %v3498, %v3499
      %v3501 = vrot.slane %v2972, 2
      %v3502 = vsel %vm938, %v3499, %v3501
      %v3503 = vrot.slane %v3447, 2
      %v3504 = vrot.slane %v2974, 2
      %v3505 = vsel %vm938, %v3503, %v3504
      %v3506 = vrot.slane %v2975, 2
      %v3507 = vsel %vm938, %v3504, %v3506
      %v3508 = vrot.slane %v3448, 2
      %v3509 = vrot.slane %v2977, 2
      %v3510 = vsel %vm938, %v3508, %v3509
      %v3511 = vrot.slane %v2978, 2
      %v3512 = vsel %vm938, %v3509, %v3511
      %v3513 = vrot.slane %v3449, 2
      %v3514 = vrot.slane %v2980, 2
      %v3515 = vsel %vm938, %v3513, %v3514
      %v3516 = vrot.slane %v2981, 2
      %v3517 = vsel %vm938, %v3514, %v3516
      %v3518 = vrot.slane %v3450, 2
      %v3519 = vrot.slane %v2983, 2
      %v3520 = vsel %vm938, %v3518, %v3519
      %v3521 = vrot.slane %v2984, 2
      %v3522 = vsel %vm938, %v3519, %v3521
      %v3523 = vrot.slane %v3451, 2
      %v3524 = vrot.slane %v2986, 2
      %v3525 = vsel %vm938, %v3523, %v3524
      %v3526 = vrot.slane %v2987, 2
      %v3527 = vsel %vm938, %v3524, %v3526
      %v3528 = vrot.slane %v3452, 2
      %v3529 = vrot.slane %v2989, 2
      %v3530 = vsel %vm938, %v3528, %v3529
      %v3531 = vrot.slane %v2990, 2
      %v3532 = vsel %vm938, %v3529, %v3531
      %v3533 = vrot.slane %v3453, 2
      %v3534 = vrot.slane %v2992, 2
      %v3535 = vsel %vm938, %v3533, %v3534
      %v3536 = vrot.slane %v2993, 2
      %v3537 = vsel %vm938, %v3534, %v3536
      %v3538 = vrot.slane %v3454, 2
      %v3539 = vrot.slane %v2995, 2
      %v3540 = vsel %vm938, %v3538, %v3539
      %v3541 = vrot.slane %v2996, 2
      %v3542 = vsel %vm938, %v3539, %v3541
      %v3543 = vrot.slane %v3455, 2
      %v3544 = vrot.slane %v2998, 2
      %v3545 = vsel %vm938, %v3543, %v3544
      %v3546 = vrot.slane %v2999, 2
      %v3547 = vsel %vm938, %v3544, %v3546
      %v3548 = vrot.slane %v3456, 2
      %v3549 = vrot.slane %v3001, 2
      %v3550 = vsel %vm938, %v3548, %v3549
      %v3551 = vrot.slane %v3002, 2
      %v3552 = vsel %vm938, %v3549, %v3551
      %v3585 = vpack.c.bf16 %v3477, %v3475
      %v3586 = vpack.c.bf16 %v3482, %v3480
      %v3587 = vpack.c.bf16 %v3487, %v3485
      %v3588 = vpack.c.bf16 %v3492, %v3490
      %v3589 = vpack.c.bf16 %v3497, %v3495
      %v3590 = vpack.c.bf16 %v3502, %v3500
      %v3591 = vpack.c.bf16 %v3507, %v3505
      %v3592 = vpack.c.bf16 %v3512, %v3510
      %v3593 = vpack.c.bf16 %v3517, %v3515
      %v3594 = vpack.c.bf16 %v3522, %v3520
      %v3595 = vpack.c.bf16 %v3527, %v3525
      %v3596 = vpack.c.bf16 %v3532, %v3530
      %v3597 = vpack.c.bf16 %v3537, %v3535
      %v3598 = vpack.c.bf16 %v3542, %v3540
      %v3599 = vpack.c.bf16 %v3547, %v3545
      %v3600 = vpack.c.bf16 %v3552, %v3550
      %s3601 = scalar_lea.vmem %s1, 16
      %v3602 = vld [vmem:[%s3601] sm:$0x3]
      %v3604 = vsel %vm464, %v3585, 0
      %v3607 = vsel %vm464, %v3586, 0
      %v3610 = vsel %vm464, %v3587, 0
      %v3613 = vsel %vm464, %v3588, 0
      %v3616 = vsel %vm464, %v3589, 0
      %v3619 = vsel %vm464, %v3590, 0
      %v3622 = vsel %vm464, %v3591, 0
      %v3625 = vsel %vm464, %v3592, 0
      %v3628 = vsel %vm464, %v3593, 0
      %v3631 = vsel %vm464, %v3594, 0
      %v3634 = vsel %vm464, %v3595, 0
      %v3637 = vsel %vm464, %v3596, 0
      %v3640 = vsel %vm464, %v3597, 0
      %v3643 = vsel %vm464, %v3598, 0
      %v3646 = vsel %vm464, %v3599, 0
      %v3649 = vsel %vm464, %v3600, 0
      %v3652 = vsel %vm513, %v3602, 0
      %3654 = vmatprep.subr.bf16.mxu0 0
      %3655 = vmatpush1.bf16.msra.mxu0 %v3652
      %3656 = vmatprep.subr.bf16.mxu0 0
      %3657 = vmatpush1.bf16.msra.mxu0 0
      %3658 = vmatprep.subr.bf16.mxu0 0
      %3659 = vmatpush1.bf16.msra.mxu0 0
      %3660 = vmatprep.subr.bf16.mxu0 0
      %3661 = vmatpush1.bf16.msra.mxu0 0
      %3662 = vmatprep.subr.bf16.mxu0 0
      %3663 = vmatpush1.bf16.msra.mxu0 0
      %3664 = vmatprep.subr.bf16.mxu0 0
      %3665 = vmatpush1.bf16.msra.mxu0 0
      %3666 = vmatprep.subr.bf16.mxu0 0
      %3667 = vmatpush1.bf16.msra.mxu0 0
      %3668 = vmatprep.subr.bf16.mxu0 0
      %3669 = vmatpush1.bf16.msra.mxu0 0
      %3670 = vmatprep.subr.bf16.mxu0 0
      %3671 = vmatpush1.bf16.msra.mxu0 0
      %3672 = vmatprep.subr.bf16.mxu0 0
      %3673 = vmatpush1.bf16.msra.mxu0 0
      %3674 = vmatprep.subr.bf16.mxu0 0
      %3675 = vmatpush1.bf16.msra.mxu0 0
      %3676 = vmatprep.subr.bf16.mxu0 0
      %3677 = vmatpush1.bf16.msra.mxu0 0
      %3678 = vmatprep.subr.bf16.mxu0 0
      %3679 = vmatpush1.bf16.msra.mxu0 0
      %3680 = vmatprep.subr.bf16.mxu0 0
      %3681 = vmatpush1.bf16.msra.mxu0 0
      %3682 = vmatprep.subr.bf16.mxu0 0
      %3683 = vmatpush1.bf16.msra.mxu0 0
      %3684 = vmatprep.subr.bf16.mxu0 0
      %3685 = vmatpush1.bf16.msra.mxu0 0
      %3686 = vmatprep.mubr.bf16.mxu0 0
      %3687 = vmatmul.mubr.bf16.gmra.mrb[0].mxu0 %v3604
      %v3688 = vpop.f32.mrb[0].mxu0
      %v3689 = vadd.f32 0.0, %v3688
      %v3690 = vpop.f32.mrb[0].mxu0
      %v3691 = vpop.f32.mrb[0].mxu0
      %v3692 = vadd.f32 0.0, %v3691
      %v3693 = vpop.f32.mrb[0].mxu0
      %3694 = vmatprep.mubr.bf16.mxu0 0
      %3695 = vmatmul.mubr.bf16.gmra.mrb[0].mxu0 %v3607
      %v3696 = vpop.f32.mrb[0].mxu0
      %v3697 = vadd.f32 0.0, %v3696
      %v3698 = vpop.f32.mrb[0].mxu0
      %v3699 = vpop.f32.mrb[0].mxu0
      %v3700 = vadd.f32 0.0, %v3699
      %v3701 = vpop.f32.mrb[0].mxu0
      %3702 = vmatprep.mubr.bf16.mxu0 0
      %3703 = vmatmul.mubr.bf16.gmra.mrb[0].mxu0 %v3610
      %v3704 = vpop.f32.mrb[0].mxu0
      %v3705 = vadd.f32 0.0, %v3704
      %v3706 = vpop.f32.mrb[0].mxu0
      %v3707 = vpop.f32.mrb[0].mxu0
      %v3708 = vadd.f32 0.0, %v3707
      %v3709 = vpop.f32.mrb[0].mxu0
      %3710 = vmatprep.mubr.bf16.mxu0 0
      %3711 = vmatmul.mubr.bf16.gmra.mrb[0].mxu0 %v3613
      %v3712 = vpop.f32.mrb[0].mxu0
      %v3713 = vadd.f32 0.0, %v3712
      %v3714 = vpop.f32.mrb[0].mxu0
      %v3715 = vpop.f32.mrb[0].mxu0
      %v3716 = vadd.f32 0.0, %v3715
      %v3717 = vpop.f32.mrb[0].mxu0
      %3718 = vmatprep.mubr.bf16.mxu0 0
      %3719 = vmatmul.mubr.bf16.gmra.mrb[0].mxu0 %v3616
      %v3720 = vpop.f32.mrb[0].mxu0
      %v3721 = vadd.f32 0.0, %v3720
      %v3722 = vpop.f32.mrb[0].mxu0
      %v3723 = vpop.f32.mrb[0].mxu0
      %v3724 = vadd.f32 0.0, %v3723
      %v3725 = vpop.f32.mrb[0].mxu0
      %3726 = vmatprep.mubr.bf16.mxu0 0
      %3727 = vmatmul.mubr.bf16.gmra.mrb[0].mxu0 %v3619
      %v3728 = vpop.f32.mrb[0].mxu0
      %v3729 = vadd.f32 0.0, %v3728
      %v3730 = vpop.f32.mrb[0].mxu0
      %v3731 = vpop.f32.mrb[0].mxu0
      %v3732 = vadd.f32 0.0, %v3731
      %v3733 = vpop.f32.mrb[0].mxu0
      %3734 = vmatprep.mubr.bf16.mxu0 0
      %3735 = vmatmul.mubr.bf16.gmra.mrb[0].mxu0 %v3622
      %v3736 = vpop.f32.mrb[0].mxu0
      %v3737 = vadd.f32 0.0, %v3736
      %v3738 = vpop.f32.mrb[0].mxu0
      %v3739 = vpop.f32.mrb[0].mxu0
      %v3740 = vadd.f32 0.0, %v3739
      %v3741 = vpop.f32.mrb[0].mxu0
      %3742 = vmatprep.mubr.bf16.mxu0 0
      %3743 = vmatmul.mubr.bf16.gmra.mrb[0].mxu0 %v3625
      %v3744 = vpop.f32.mrb[0].mxu0
      %v3745 = vadd.f32 0.0, %v3744
      %v3746 = vpop.f32.mrb[0].mxu0
      %v3747 = vpop.f32.mrb[0].mxu0
      %v3748 = vadd.f32 0.0, %v3747
      %v3749 = vpop.f32.mrb[0].mxu0
      %3750 = vmatprep.mubr.bf16.mxu0 0
      %3751 = vmatmul.mubr.bf16.gmra.mrb[0].mxu0 %v3628
      %v3752 = vpop.f32.mrb[0].mxu0
      %v3753 = vadd.f32 0.0, %v3752
      %v3754 = vpop.f32.mrb[0].mxu0
      %v3755 = vpop.f32.mrb[0].mxu0
      %v3756 = vadd.f32 0.0, %v3755
      %v3757 = vpop.f32.mrb[0].mxu0
      %3758 = vmatprep.mubr.bf16.mxu0 0
      %3759 = vmatmul.mubr.bf16.gmra.mrb[0].mxu0 %v3631
      %v3760 = vpop.f32.mrb[0].mxu0
      %v3761 = vadd.f32 0.0, %v3760
      %v3762 = vpop.f32.mrb[0].mxu0
      %v3763 = vpop.f32.mrb[0].mxu0
      %v3764 = vadd.f32 0.0, %v3763
      %v3765 = vpop.f32.mrb[0].mxu0
      %3766 = vmatprep.mubr.bf16.mxu0 0
      %3767 = vmatmul.mubr.bf16.gmra.mrb[0].mxu0 %v3634
      %v3768 = vpop.f32.mrb[0].mxu0
      %v3769 = vadd.f32 0.0, %v3768
      %v3770 = vpop.f32.mrb[0].mxu0
      %v3771 = vpop.f32.mrb[0].mxu0
      %v3772 = vadd.f32 0.0, %v3771
      %v3773 = vpop.f32.mrb[0].mxu0
      %3774 = vmatprep.mubr.bf16.mxu0 0
      %3775 = vmatmul.mubr.bf16.gmra.mrb[0].mxu0 %v3637
      %v3776 = vpop.f32.mrb[0].mxu0
      %v3777 = vadd.f32 0.0, %v3776
      %v3778 = vpop.f32.mrb[0].mxu0
      %v3779 = vpop.f32.mrb[0].mxu0
      %v3780 = vadd.f32 0.0, %v3779
      %v3781 = vpop.f32.mrb[0].mxu0
      %3782 = vmatprep.mubr.bf16.mxu0 0
      %3783 = vmatmul.mubr.bf16.gmra.mrb[0].mxu0 %v3640
      %v3784 = vpop.f32.mrb[0].mxu0
      %v3785 = vadd.f32 0.0, %v3784
      %v3786 = vpop.f32.mrb[0].mxu0
      %v3787 = vpop.f32.mrb[0].mxu0
      %v3788 = vadd.f32 0.0, %v3787
      %v3789 = vpop.f32.mrb[0].mxu0
      %3790 = vmatprep.mubr.bf16.mxu0 0
      %3791 = vmatmul.mubr.bf16.gmra.mrb[0].mxu0 %v3643
      %v3792 = vpop.f32.mrb[0].mxu0
      %v3793 = vadd.f32 0.0, %v3792
      %v3794 = vpop.f32.mrb[0].mxu0
      %v3795 = vpop.f32.mrb[0].mxu0
      %v3796 = vadd.f32 0.0, %v3795
      %v3797 = vpop.f32.mrb[0].mxu0
      %3798 = vmatprep.mubr.bf16.mxu0 0
      %3799 = vmatmul.mubr.bf16.gmra.mrb[0].mxu0 %v3646
      %v3800 = vpop.f32.mrb[0].mxu0
      %v3801 = vadd.f32 0.0, %v3800
      %v3802 = vpop.f32.mrb[0].mxu0
      %v3803 = vpop.f32.mrb[0].mxu0
      %v3804 = vadd.f32 0.0, %v3803
      %v3805 = vpop.f32.mrb[0].mxu0
      %3806 = vmatprep.mubr.bf16.mxu0 0
      %3807 = vmatmul.mubr.bf16.gmra.mrb[0].mxu0 %v3649
      %v3808 = vpop.f32.mrb[0].mxu0
      %v3809 = vadd.f32 0.0, %v3808
      %v3810 = vpop.f32.mrb[0].mxu0
      %v3811 = vpop.f32.mrb[0].mxu0
      %v3812 = vadd.f32 0.0, %v3811
      %v3813 = vpop.f32.mrb[0].mxu0
      %3814 = vdwg.mxu0
      %v3815 = vadd.f32 %v3393, %v3689
      %v3816 = vadd.f32 %v3394, %v3692
      %v3817 = vadd.f32 %v3395, %v3697
      %v3818 = vadd.f32 %v3396, %v3700
      %v3819 = vadd.f32 %v3397, %v3705
      %v3820 = vadd.f32 %v3398, %v3708
      %v3821 = vadd.f32 %v3399, %v3713
      %v3822 = vadd.f32 %v3400, %v3716
      %v3823 = vadd.f32 %v3401, %v3721
      %v3824 = vadd.f32 %v3402, %v3724
      %v3825 = vadd.f32 %v3403, %v3729
      %v3826 = vadd.f32 %v3404, %v3732
      %v3827 = vadd.f32 %v3405, %v3737
      %v3828 = vadd.f32 %v3406, %v3740
      %v3829 = vadd.f32 %v3407, %v3745
      %v3830 = vadd.f32 %v3408, %v3748
      %v3831 = vadd.f32 %v3409, %v3753
      %v3832 = vadd.f32 %v3410, %v3756
      %v3833 = vadd.f32 %v3411, %v3761
      %v3834 = vadd.f32 %v3412, %v3764
      %v3835 = vadd.f32 %v3413, %v3769
      %v3836 = vadd.f32 %v3414, %v3772
      %v3837 = vadd.f32 %v3415, %v3777
      %v3838 = vadd.f32 %v3416, %v3780
      %v3839 = vadd.f32 %v3417, %v3785
      %v3840 = vadd.f32 %v3418, %v3788
      %v3841 = vadd.f32 %v3419, %v3793
      %v3842 = vadd.f32 %v3420, %v3796
      %v3843 = vadd.f32 %v3421, %v3801
      %v3844 = vadd.f32 %v3422, %v3804
      %v3845 = vadd.f32 %v3423, %v3809
      %v3846 = vadd.f32 %v3424, %v3812
      %v3847 = vld [vmem:[%s2] sm:$0x1]
      %v3849 = vlaneseq
      %v3850 = vshrl.u32 %v3849, 7
      %v3851 = vsub.s32 0, %v3850
      %v3852 = vrot.slane %v3847, %v3851
      %v3854 = vadd.f32 %v3815, %v3852
      %v3855 = vadd.f32 %v3816, %v3852
      %v3856 = vadd.f32 %v3817, %v3852
      %v3857 = vadd.f32 %v3818, %v3852
      %v3858 = vadd.f32 %v3819, %v3852
      %v3859 = vadd.f32 %v3820, %v3852
      %v3860 = vadd.f32 %v3821, %v3852
      %v3861 = vadd.f32 %v3822, %v3852
      %v3862 = vadd.f32 %v3823, %v3852
      %v3863 = vadd.f32 %v3824, %v3852
      %v3864 = vadd.f32 %v3825, %v3852
      %v3865 = vadd.f32 %v3826, %v3852
      %v3866 = vadd.f32 %v3827, %v3852
      %v3867 = vadd.f32 %v3828, %v3852
      %v3868 = vadd.f32 %v3829, %v3852
      %v3869 = vadd.f32 %v3830, %v3852
      %v3870 = vadd.f32 %v3831, %v3852
      %v3871 = vadd.f32 %v3832, %v3852
      %v3872 = vadd.f32 %v3833, %v3852
      %v3873 = vadd.f32 %v3834, %v3852
      %v3874 = vadd.f32 %v3835, %v3852
      %v3875 = vadd.f32 %v3836, %v3852
      %v3876 = vadd.f32 %v3837, %v3852
      %v3877 = vadd.f32 %v3838, %v3852
      %v3878 = vadd.f32 %v3839, %v3852
      %v3879 = vadd.f32 %v3840, %v3852
      %v3880 = vadd.f32 %v3841, %v3852
      %v3881 = vadd.f32 %v3842, %v3852
      %v3882 = vadd.f32 %v3843, %v3852
      %v3883 = vadd.f32 %v3844, %v3852
      %v3884 = vadd.f32 %v3845, %v3852
      %v3885 = vadd.f32 %v3846, %v3852
      %v3886 = vmax.f32 %v3854, 0.0
      %v3887 = vmax.f32 %v3855, 0.0
      %v3888 = vmax.f32 %v3856, 0.0
      %v3889 = vmax.f32 %v3857, 0.0
      %v3890 = vmax.f32 %v3858, 0.0
      %v3891 = vmax.f32 %v3859, 0.0
      %v3892 = vmax.f32 %v3860, 0.0
      %v3893 = vmax.f32 %v3861, 0.0
      %v3894 = vmax.f32 %v3862, 0.0
      %v3895 = vmax.f32 %v3863, 0.0
      %v3896 = vmax.f32 %v3864, 0.0
      %v3897 = vmax.f32 %v3865, 0.0
      %v3898 = vmax.f32 %v3866, 0.0
      %v3899 = vmax.f32 %v3867, 0.0
      %v3900 = vmax.f32 %v3868, 0.0
      %v3901 = vmax.f32 %v3869, 0.0
      %v3902 = vmax.f32 %v3870, 0.0
      %v3903 = vmax.f32 %v3871, 0.0
      %v3904 = vmax.f32 %v3872, 0.0
      %v3905 = vmax.f32 %v3873, 0.0
      %v3906 = vmax.f32 %v3874, 0.0
      %v3907 = vmax.f32 %v3875, 0.0
      %v3908 = vmax.f32 %v3876, 0.0
      %v3909 = vmax.f32 %v3877, 0.0
      %v3910 = vmax.f32 %v3878, 0.0
      %v3911 = vmax.f32 %v3879, 0.0
      %v3912 = vmax.f32 %v3880, 0.0
      %v3913 = vmax.f32 %v3881, 0.0
      %v3914 = vmax.f32 %v3882, 0.0
      %v3915 = vmax.f32 %v3883, 0.0
      %v3916 = vmax.f32 %v3884, 0.0
      %v3917 = vmax.f32 %v3885, 0.0
      %v3918 = vpack.c.bf16 %v3887, %v3886
      %v3919 = vpack.c.bf16 %v3889, %v3888
      %v3920 = vpack.c.bf16 %v3891, %v3890
      %v3921 = vpack.c.bf16 %v3893, %v3892
      %v3922 = vpack.c.bf16 %v3895, %v3894
      %v3923 = vpack.c.bf16 %v3897, %v3896
      %v3924 = vpack.c.bf16 %v3899, %v3898
      %v3925 = vpack.c.bf16 %v3901, %v3900
      %v3926 = vpack.c.bf16 %v3903, %v3902
      %v3927 = vpack.c.bf16 %v3905, %v3904
      %v3928 = vpack.c.bf16 %v3907, %v3906
      %v3929 = vpack.c.bf16 %v3909, %v3908
      %v3930 = vpack.c.bf16 %v3911, %v3910
      %v3931 = vpack.c.bf16 %v3913, %v3912
      %v3932 = vpack.c.bf16 %v3915, %v3914
      %v3933 = vpack.c.bf16 %v3917, %v3916
      %v3950 = vunpack.c.l.b16 %v3918
      %v3951 = vunpack.c.h.b16 %v3918
      %v3952 = vunpack.c.l.b16 %v3919
      %v3953 = vunpack.c.h.b16 %v3919
      %v3954 = vunpack.c.l.b16 %v3920
      %v3955 = vunpack.c.h.b16 %v3920
      %v3956 = vunpack.c.l.b16 %v3921
      %v3957 = vunpack.c.h.b16 %v3921
      %v3958 = vunpack.c.l.b16 %v3922
      %v3959 = vunpack.c.h.b16 %v3922
      %v3960 = vunpack.c.l.b16 %v3923
      %v3961 = vunpack.c.h.b16 %v3923
      %v3962 = vunpack.c.l.b16 %v3924
      %v3963 = vunpack.c.h.b16 %v3924
      %v3964 = vunpack.c.l.b16 %v3925
      %v3965 = vunpack.c.h.b16 %v3925
      %v3966 = vunpack.c.l.b16 %v3926
      %v3967 = vunpack.c.h.b16 %v3926
      %v3968 = vunpack.c.l.b16 %v3927
      %v3969 = vunpack.c.h.b16 %v3927
      %v3970 = vunpack.c.l.b16 %v3928
      %v3971 = vunpack.c.h.b16 %v3928
      %v3972 = vunpack.c.l.b16 %v3929
      %v3973 = vunpack.c.h.b16 %v3929
      %v3974 = vunpack.c.l.b16 %v3930
      %v3975 = vunpack.c.h.b16 %v3930
      %v3976 = vunpack.c.l.b16 %v3931
      %v3977 = vunpack.c.h.b16 %v3931
      %v3978 = vunpack.c.l.b16 %v3932
      %v3979 = vunpack.c.h.b16 %v3932
      %v3980 = vunpack.c.l.b16 %v3933
      %v3981 = vunpack.c.h.b16 %v3933
      %v3982 = vpack.c.b16 %v3950, %v3950
      %v3983 = vpack.c.b16 %v3951, %v3951
      %v3984 = vpack.c.b16 %v3952, %v3952
      %v3985 = vpack.c.b16 %v3953, %v3953
      %v3986 = vpack.c.b16 %v3954, %v3954
      %v3987 = vpack.c.b16 %v3955, %v3955
      %v3988 = vpack.c.b16 %v3956, %v3956
      %v3989 = vpack.c.b16 %v3957, %v3957
      %v3990 = vpack.c.b16 %v3958, %v3958
      %v3991 = vpack.c.b16 %v3959, %v3959
      %v3992 = vpack.c.b16 %v3960, %v3960
      %v3993 = vpack.c.b16 %v3961, %v3961
      %v3994 = vpack.c.b16 %v3962, %v3962
      %v3995 = vpack.c.b16 %v3963, %v3963
      %v3996 = vpack.c.b16 %v3964, %v3964
      %v3997 = vpack.c.b16 %v3965, %v3965
      %v3998 = vpack.c.b16 %v3966, %v3966
      %v3999 = vpack.c.b16 %v3967, %v3967
      %v4000 = vpack.c.b16 %v3968, %v3968
      %v4001 = vpack.c.b16 %v3969, %v3969
      %v4002 = vpack.c.b16 %v3970, %v3970
      %v4003 = vpack.c.b16 %v3971, %v3971
      %v4004 = vpack.c.b16 %v3972, %v3972
      %v4005 = vpack.c.b16 %v3973, %v3973
      %v4006 = vpack.c.b16 %v3974, %v3974
      %v4007 = vpack.c.b16 %v3975, %v3975
      %v4008 = vpack.c.b16 %v3976, %v3976
      %v4009 = vpack.c.b16 %v3977, %v3977
      %v4010 = vpack.c.b16 %v3978, %v3978
      %v4011 = vpack.c.b16 %v3979, %v3979
      %v4012 = vpack.c.b16 %v3980, %v3980
      %v4013 = vpack.c.b16 %v3981, %v3981
      %vm4046 = vcmask 27648
      %4047 = vst.msk [vmem:[%s170] sm:$0xf] %vm4046, %v3982
      %4048 = vst.msk [vmem:[%s170 + $0x4] sm:$0xf] %vm4046, %v3983
      %4049 = vst.msk [vmem:[%s170 + $0x8] sm:$0xf] %vm4046, %v3984
      %4050 = vst.msk [vmem:[%s170 + $0xc] sm:$0xf] %vm4046, %v3985
      %4051 = vst.msk [vmem:[%s170 + $0x10] sm:$0xf] %vm4046, %v3986
      %4052 = vst.msk [vmem:[%s170 + $0x14] sm:$0xf] %vm4046, %v3987
      %4053 = vst.msk [vmem:[%s170 + $0x18] sm:$0xf] %vm4046, %v3988
      %4054 = vst.msk [vmem:[%s170 + $0x1c] sm:$0xf] %vm4046, %v3989
      %4055 = vst.msk [vmem:[%s170 + $0x20] sm:$0xf] %vm4046, %v3990
      %4056 = vst.msk [vmem:[%s170 + $0x24] sm:$0xf] %vm4046, %v3991
      %4057 = vst.msk [vmem:[%s170 + $0x28] sm:$0xf] %vm4046, %v3992
      %4058 = vst.msk [vmem:[%s170 + $0x2c] sm:$0xf] %vm4046, %v3993
      %4059 = vst.msk [vmem:[%s170 + $0x30] sm:$0xf] %vm4046, %v3994
      %4060 = vst.msk [vmem:[%s170 + $0x34] sm:$0xf] %vm4046, %v3995
      %4061 = vst.msk [vmem:[%s170 + $0x38] sm:$0xf] %vm4046, %v3996
      %4062 = vst.msk [vmem:[%s170 + $0x3c] sm:$0xf] %vm4046, %v3997
      %4063 = vst.msk [vmem:[%s170 + $0x40] sm:$0xf] %vm4046, %v3998
      %4064 = vst.msk [vmem:[%s170 + $0x44] sm:$0xf] %vm4046, %v3999
      %4065 = vst.msk [vmem:[%s170 + $0x48] sm:$0xf] %vm4046, %v4000
      %4066 = vst.msk [vmem:[%s170 + $0x4c] sm:$0xf] %vm4046, %v4001
      %4067 = vst.msk [vmem:[%s170 + $0x50] sm:$0xf] %vm4046, %v4002
      %4068 = vst.msk [vmem:[%s170 + $0x54] sm:$0xf] %vm4046, %v4003
      %4069 = vst.msk [vmem:[%s170 + $0x58] sm:$0xf] %vm4046, %v4004
      %4070 = vst.msk [vmem:[%s170 + $0x5c] sm:$0xf] %vm4046, %v4005
      %4071 = vst.msk [vmem:[%s170 + $0x60] sm:$0xf] %vm4046, %v4006
      %4072 = vst.msk [vmem:[%s170 + $0x64] sm:$0xf] %vm4046, %v4007
      %4073 = vst.msk [vmem:[%s170 + $0x68] sm:$0xf] %vm4046, %v4008
      %4074 = vst.msk [vmem:[%s170 + $0x6c] sm:$0xf] %vm4046, %v4009
      %4075 = vst.msk [vmem:[%s170 + $0x70] sm:$0xf] %vm4046, %v4010
      %4076 = vst.msk [vmem:[%s170 + $0x74] sm:$0xf] %vm4046, %v4011
      %4077 = vst.msk [vmem:[%s170 + $0x78] sm:$0xf] %vm4046, %v4012
      %4078 = vst.msk [vmem:[%s170 + $0x7c] sm:$0xf] %vm4046, %v4013
      %p4079 = scmp.lt.s32.totalorder %s14, 1
      %s4080 = scalar_select %p4079, %s14, 1
      %s4081 = smul.addr %s4080, 32
      %s4082 = smul.addr %s4081, 4
      %s4083 = scalar_lea.vmem %s3, %s4082
      // Predicated region
      $region33: #{bottleneck_forward.4} parent=31 // pred_check
        %p4084 = pneg %p100
      $region34: #{bottleneck_forward.4} parent=31 // pred_check_branch
        %4086 = sbr.rel (%p4084) target = $region36
      $region35: #{bottleneck_forward.4} parent=31 // pred_region
        _
      $region36: #{bottleneck_forward.4} parent=31 // pred_fallthru
        _
    $region32: #{bottleneck_forward.4} parent=5 // pred_fallthru
      _
    %p4087 = scmp.le.s32.totalorder 2, %s9
    // Predicated region
    $region37: #{bottleneck_forward.4} parent=5 // pred_check
      %p4088 = pneg %p4087
    $region38: #{bottleneck_forward.4} parent=5 // pred_check_branch
      %4090 = sbr.rel (%p4088) target = $region40
    $region39: #{bottleneck_forward.4} parent=5 // pred_region
      %s4091 = ssub.s32 %s9, 2
      // Predicated region
      $region41: #{bottleneck_forward.4} parent=39 // pred_check
        %p4092 = pneg %p106
      $region42: #{bottleneck_forward.4} parent=39 // pred_check_branch
        %4094 = sbr.rel (%p4092) target = $region44
      $region43: #{bottleneck_forward.4} parent=39 // pred_region
        %p4095 = scmp.lt.s32.totalorder %s15, 1
        %s4096 = scalar_select %p4095, %s15, 1
        %s4097 = smul.addr %s4096, 32
        %s4098 = smul.addr %s4097, 4
        %s4099 = scalar_lea.vmem %s3, %s4098
      $region44: #{bottleneck_forward.4} parent=39 // pred_fallthru
        _
    $region40: #{bottleneck_forward.4} parent=5 // pred_fallthru
      _
  $region6: #{bottleneck_forward.4} parent=0 // loop_footer
    %s13 = sadd.s32 1, %s9
  $region7: #{bottleneck_forward.4} parent=0 // loop_footer_branch
    %8 = sbr.rel target = $region3
  $region8: #{bottleneck_forward.4} parent=0 // loop_exit
    _

</llo_original>
